<compile_context>
chip_gen: v7x
topology: tpu7x:2x2x1
jax: 0.10.0
libtpu: 0.0.40
codegen_flags: <defaults>
</compile_context>

<pallas_src>
import numpy as np
import jax
import jax.numpy as jnp
from jax import lax
from jax.experimental import pallas as pl
from jax.experimental.pallas import tpu as pltpu


def _triple(v):
    return (v, v, v) if isinstance(v, int) else tuple(v)


def _round_up(x, m):
    return ((x + m - 1) // m) * m


def _vmem_bytes(shape, dtype):
    """Crude VMEM footprint estimate (last dim -> 128 lanes, 2nd-last -> 8 sublanes)."""
    s = list(shape)
    s[-1] = _round_up(s[-1], 128)
    if len(s) >= 2:
        s[-2] = _round_up(s[-2], 8)
    n = 1
    for d in s:
        n *= d
    return n * jnp.dtype(dtype).itemsize


def _dim_decomp(X, k, s, p):
    """Sub-pixel (phase) decomposition of a 1-D transposed conv.

    y[o] = sum_{i,d: i*s + d == o + p} x[i] * w[d].  Writing o + p = m*s + q
    (q = phase in [0, s)), every output is a stride-1 correlation over a window
    of J = ceil(k/s) taps of the un-dilated input:
        y[o] = sum_{r<J} x_pad[b + r] * w[q + (J-1-r)*s]      (b = m - floor(p/s))
    with x_pad = x zero-padded by (pad_lo, pad_hi) and zero weight when
    q + (J-1-r)*s >= k.  phases[q] = (b0, b1, o0) maps base index b in [b0, b1)
    to output index o = o0 + s*(b - b0).
    """
    assert 0 <= p <= k - 1, "padding > kernel_size - 1 not supported"
    Xo = (X - 1) * s + k - 2 * p
    J = -(-k // s)
    m_lo = p // s
    m_hi = (Xo + p - 1) // s
    Xb = m_hi - m_lo + 1
    pad_lo = (J - 1) - m_lo
    pad_hi = (k - 1 - p) // s
    assert X + pad_lo + pad_hi == Xb + J - 1
    phases = []
    for q in range(s):
        shift = m_lo * s + q - p
        b0 = 1 if shift < 0 else 0
        b1 = -(-(Xo - shift) // s)
        phases.append((b0, b1, s * b0 + shift))
    return dict(Xo=Xo, J=J, Xb=Xb, pad_lo=pad_lo, pad_hi=pad_hi, phases=phases)


def upconv3d_transpose_segating(x_ncdhw, w_convT, b_conv, w_se, b_se, *,
                                stride, padding, tile_m=1024,
                                mxu_dtype=jnp.bfloat16):
    """upConv3D (upmode='transpose') forward.

    x_ncdhw: (N, Cin, T, H, W); w_convT: (Cin, Cout, kt, kh, kw) (PyTorch
    ConvTranspose3d layout); returns (N, Cout, To, Ho, Wo).

    tile_m: target rows per grid step.  Default 1024 (multiple of 256); grow to
    2048 on v5e/v6e (128 MiB VMEM), keep <=1024 on v7x (64 MiB VMEM).  TM is
    auto-grown to cover the largest tap offset.
    """
    N, Cin, T, H, W = x_ncdhw.shape
    Cin_w, Cout, kt, kh, kw = w_convT.shape
    assert Cin_w == Cin
    st, sh, sw = _triple(stride)
    pt, ph, pw = _triple(padding)

    dt_ = _dim_decomp(T, kt, st, pt)
    dh_ = _dim_decomp(H, kh, sh, ph)
    dw_ = _dim_decomp(W, kw, sw, pw)
    To, Ho, Wo = dt_['Xo'], dh_['Xo'], dw_['Xo']
    Jt, Jh, Jw = dt_['J'], dh_['J'], dw_['J']
    Tb, Hb, Wb = dt_['Xb'], dh_['Xb'], dw_['Xb']
    Tp = T + dt_['pad_lo'] + dt_['pad_hi']
    Hp = H + dh_['pad_lo'] + dh_['pad_hi']
    Wp = W + dw_['pad_lo'] + dw_['pad_hi']
    P = st * sh * sw
    n_taps = Jt * Jh * Jw

    # ---- folded (tap -> K, phase -> out-channel) weight: (n_taps, Cin, P*Cout)
    cols = []
    for qt in range(st):
        for qh in range(sh):
            for qw in range(sw):
                taps = []
                for rt in range(Jt):
                    for rh in range(Jh):
                        for rw in range(Jw):
                            dtap = qt + (Jt - 1 - rt) * st
                            dhap = qh + (Jh - 1 - rh) * sh
                            dwap = qw + (Jw - 1 - rw) * sw
                            if dtap < kt and dhap < kh and dwap < kw:
                                taps.append(w_convT[:, :, dtap, dhap, dwap])
                            else:
                                taps.append(jnp.zeros((Cin, Cout), w_convT.dtype))
                cols.append(jnp.stack(taps, axis=0))          # (n_taps, Cin, Cout)
    w_fold = jnp.concatenate(cols, axis=-1)                   # (n_taps, Cin, P*Cout)

    # ---- exact SE gate from x (pooling linearity + boundary-validity masks) ---
    M_out = To * Ho * Wo
    x32 = x_ncdhw.astype(jnp.float32)

    def vmask(X, k, s, p, Xo):
        i = np.arange(X)[:, None]
        d = np.arange(k)[None, :]
        o = i * s + d - p
        return jnp.asarray((o >= 0) & (o < Xo), jnp.float32)

    Vt = vmask(T, kt, st, pt, To)
    Vh = vmask(H, kh, sh, ph, Ho)
    Vw = vmask(W, kw, sw, pw, Wo)
    xs = jnp.einsum('nithw,wc->nithc', x32, Vw)
    xs = jnp.einsum('nithc,hb->nitbc', xs, Vh)
    xs = jnp.einsum('nitbc,ta->niabc', xs, Vt)                 # (N, Cin, kt, kh, kw)
    pooled = (jnp.einsum('niabc,ioabc->no', xs, w_convT.astype(jnp.float32))
              / M_out + b_conv.astype(jnp.float32)[None, :])
    w_se_mat = w_se.reshape(Cout, Cout).astype(jnp.float32)
    gate = jax.nn.sigmoid(pooled @ w_se_mat.T + b_se.astype(jnp.float32)[None, :])

    # ---- pad + flatten input once (bf16) and derive the tiling ----------------
    Pn = _round_up(P * Cout, 128)                  # lane-dense output minor dim
    L_base = Tb * Hp * Wp                          # base-grid rows the kernel emits
    off_max = (Jt - 1) * Hp * Wp + (Jh - 1) * Wp + (Jw - 1)
    TM = _round_up(max(off_max, min(tile_m, L_base)), 16)
    M_rows = _round_up(L_base, TM)
    n_m = M_rows // TM
    rows_needed = (n_m + 1) * TM                   # every tile also reads tile i+1

    xt = jnp.transpose(x_ncdhw, (0, 2, 3, 4, 1))   # NDHWC
    xp = jnp.pad(xt, ((0, 0),
                      (dt_['pad_lo'], dt_['pad_hi']),
                      (dh_['pad_lo'], dh_['pad_hi']),
                      (dw_['pad_lo'], dw_['pad_hi']),
                      (0, 0))).astype(mxu_dtype)
    x_flat = xp.reshape(N, Tp * Hp * Wp, Cin)
    x_flat = jnp.pad(x_flat, ((0, 0), (0, rows_needed - Tp * Hp * Wp), (0, 0)))

    w_fold_p = jnp.pad(w_fold, ((0, 0), (0, 0), (0, Pn - P * Cout))).astype(mxu_dtype)
    bias_p = jnp.pad(jnp.tile(b_conv.astype(jnp.float32), P),
                     (0, Pn - P * Cout)).reshape(1, Pn)
    gate_p = jnp.pad(jnp.tile(gate, (1, P)),
                     ((0, 0), (0, Pn - P * Cout))).reshape(N, 1, Pn)

    tap_offs = [rt * Hp * Wp + rh * Wp + rw
                for rt in range(Jt) for rh in range(Jh) for rw in range(Jw)]
    assert max(tap_offs) == off_max and off_max <= TM

    def kernel(xa_ref, xb_ref, w_ref, b_ref, g_ref, o_ref, xbuf_ref, acc_ref):
        # Two consecutive TM-row tiles of the flattened padded input cover every
        # tap window [off, off + TM) with off <= TM; taps are VMEM slices only.
        xbuf_ref[0:TM, :] = xa_ref[0]
        xbuf_ref[TM:2 * TM, :] = xb_ref[0]
        acc_ref[...] = jnp.dot(xbuf_ref[tap_offs[0]:tap_offs[0] + TM, :], w_ref[0],
                               preferred_element_type=jnp.float32)
        for j in range(1, n_taps):
            off = tap_offs[j]
            acc_ref[...] += jnp.dot(xbuf_ref[off:off + TM, :], w_ref[j],
                                    preferred_element_type=jnp.float32)
        o_ref[0] = ((acc_ref[...] + b_ref[...]) * g_ref[0]).astype(o_ref.dtype)

    est = (2 * 2 * _vmem_bytes((1, TM, Cin), mxu_dtype)              # xa, xb (dbl-buf)
           + _vmem_bytes((2 * TM, Cin), mxu_dtype)                   # xbuf scratch
           + 2 * _vmem_bytes((n_taps, Cin, Pn), mxu_dtype)           # resident weight
           + 2 * (_vmem_bytes((1, Pn), jnp.float32)
                  + _vmem_bytes((1, 1, Pn), jnp.float32))            # bias + gate
           + 2 * _vmem_bytes((1, TM, Pn), x_ncdhw.dtype)             # output tile
           + _vmem_bytes((TM, Pn), jnp.float32))                     # f32 accumulator
    # NOTE: on v7x (64 MiB VMEM / TC) keep tile_m such that `est` stays <= ~48 MiB.
    vmem_limit = int(min(max(32 * 2 ** 20, 2 * est), 96 * 2 ** 20))

    out = pl.pallas_call(
        kernel,
        out_shape=jax.ShapeDtypeStruct((N, M_rows, Pn), x_ncdhw.dtype),
        grid_spec=pltpu.PrefetchScalarGridSpec(
            num_scalar_prefetch=0,
            grid=(N, n_m),
            in_specs=[
                pl.BlockSpec((1, TM, Cin), lambda n, i: (n, i, 0)),       # row tile i
                pl.BlockSpec((1, TM, Cin), lambda n, i: (n, i + 1, 0)),   # row tile i+1
                pl.BlockSpec((n_taps, Cin, Pn), lambda n, i: (0, 0, 0)),  # resident weight
                pl.BlockSpec((1, Pn), lambda n, i: (0, 0)),               # resident bias
                pl.BlockSpec((1, 1, Pn), lambda n, i: (n, 0, 0)),         # per-batch gate
            ],
            out_specs=pl.BlockSpec((1, TM, Pn), lambda n, i: (n, i, 0)),
            scratch_shapes=[pltpu.VMEM((2 * TM, Cin), mxu_dtype),
                            pltpu.VMEM((TM, Pn), jnp.float32)],
        ),
        compiler_params=pltpu.CompilerParams(
            dimension_semantics=("parallel", "parallel"),
            vmem_limit_bytes=vmem_limit,
        ),
    )(x_flat, x_flat, w_fold_p, bias_p, gate_p)

    # ---- pixel-shuffle the folded phases back into NCDHW ----------------------
    y = out[:, :L_base, :P * Cout].reshape(N, Tb, Hp, Wp, st, sh, sw, Cout)
    res = jnp.zeros((N, Cout, To, Ho, Wo), x_ncdhw.dtype)
    for qt in range(st):
        b0t, b1t, o0t = dt_['phases'][qt]
        for qh in range(sh):
            b0h, b1h, o0h = dh_['phases'][qh]
            for qw in range(sw):
                b0w, b1w, o0w = dw_['phases'][qw]
                blk = y[:, b0t:b1t, b0h:b1h, b0w:b1w, qt, qh, qw, :]
                blk = jnp.transpose(blk, (0, 4, 1, 2, 3))
                res = res.at[:, :, o0t::st, o0h::sh, o0w::sw].set(blk)
    return res


def _reference(x, w_convT, b_conv, w_se, b_se, *, stride, padding):
    """Pure-JAX reference of ConvTranspose3d + SEGating (correctness check)."""
    st_, sh_, sw_ = _triple(stride)
    pt_, ph_, pw_ = _triple(padding)
    Cin, Cout, kt, kh, kw = w_convT.shape
    w_eq = jnp.transpose(jnp.flip(w_convT, (2, 3, 4)), (1, 0, 2, 3, 4))
    y = lax.conv_general_dilated(
        x, w_eq, window_strides=(1, 1, 1),
        padding=[(kt - 1 - pt_,) * 2, (kh - 1 - ph_,) * 2, (kw - 1 - pw_,) * 2],
        lhs_dilation=(st_, sh_, sw_),
        dimension_numbers=("NCDHW", "OIDHW", "NCDHW"))
    y = y + b_conv.reshape(1, -1, 1, 1, 1)
    pooled = jnp.mean(y, axis=(2, 3, 4), keepdims=True)
    gate = jax.nn.sigmoid(
        jnp.einsum("oi,nidhw->nodhw", w_se.reshape(Cout, Cout), pooled)
        + b_se.reshape(1, -1, 1, 1, 1))
    return y * gate


if __name__ == "__main__":
    # Small shapes consistent with upConv3D usage: ConvTranspose3d kernel (3,4,4),
    # stride (1,2,2), padding (1,1,1) (2x spatial upsampling), 5-D NCDHW input.
    N, Cin, Cout = 2, 4, 8
    T, H, W = 4, 8, 8
    ksize, stride, padding = (3, 4, 4), (1, 2, 2), (1, 1, 1)

    key = jax.random.PRNGKey(0)
    k1, k2, k3, k4, k5 = jax.random.split(key, 5)

    x = jax.random.normal(k1, (N, Cin, T, H, W), jnp.float32)
    fan = Cin * ksize[0] * ksize[1] * ksize[2]
    w_convT = jax.random.normal(k2, (Cin, Cout) + ksize, jnp.float32) / jnp.sqrt(fan)
    b_conv = 0.1 * jax.random.normal(k3, (Cout,), jnp.float32)
    w_se = jax.random.normal(k4, (Cout, Cout, 1, 1, 1), jnp.float32) / jnp.sqrt(Cout)
    b_se = 0.1 * jax.random.normal(k5, (Cout,), jnp.float32)

    # tile_m=256 so the test exercises the multi-tile (i and i+1 row-block) path.
    out = upconv3d_transpose_segating(x, w_convT, b_conv, w_se, b_se,
                                      stride=stride, padding=padding, tile_m=256)
    out = jax.block_until_ready(out)

    ref = _reference(x, w_convT, b_conv, w_se, b_se, stride=stride, padding=padding)
    To = (T - 1) * stride[0] - 2 * padding[0] + ksize[0]
    Ho = (H - 1) * stride[1] - 2 * padding[1] + ksize[1]
    Wo = (W - 1) * stride[2] - 2 * padding[2] + ksize[2]
    assert out.shape == (N, Cout, To, Ho, Wo), out.shape
    err = float(jnp.max(jnp.abs(out - ref)))
    # bf16 MXU inputs (f32 accumulation) vs f32 XLA reference -> loosened tolerance.
    assert jnp.allclose(out, ref, atol=3e-2, rtol=3e-2), err
    print("KERNEL_OK")
</pallas_src>

<mosaic_0001>
module attributes {stable_mosaic.version = 11 : i64} {
  func.func @kernel(%arg0: i32, %arg1: i32, %arg2: memref<1x256x4xbf16, #tpu.memory_space<vmem>>, %arg3: memref<1x256x4xbf16, #tpu.memory_space<vmem>>, %arg4: memref<12x4x128xbf16, #tpu.memory_space<vmem>>, %arg5: memref<1x128xf32, #tpu.memory_space<vmem>>, %arg6: memref<1x1x128xf32, #tpu.memory_space<vmem>>, %arg7: memref<1x256x128xf32, #tpu.memory_space<vmem>>, %arg8: memref<512x4xbf16, #tpu.memory_space<vmem>>, %arg9: memref<256x128xf32, #tpu.memory_space<vmem>>) attributes {dimension_semantics = [#tpu.dimension_semantics<parallel>, #tpu.dimension_semantics<parallel>], iteration_bounds = array<i64: 2, 2>, scalar_prefetch = 0 : i64, scratch_operands = 2 : i64, tpu.core_type = #tpu.core_type<tc>, window_params = [{transform_indices = @transform_0, window_bounds = array<i64: 1, 256, 4>}, {transform_indices = @transform_1, window_bounds = array<i64: 1, 256, 4>}, {pipeline_mode = #tpu.pipeline_mode<synchronous>, transform_indices = @transform_2, window_bounds = array<i64: 12, 4, 128>}, {pipeline_mode = #tpu.pipeline_mode<synchronous>, transform_indices = @transform_3, window_bounds = array<i64: 1, 128>}, {transform_indices = @transform_4, window_bounds = array<i64: 1, 1, 128>}, {transform_indices = @transform_5, window_bounds = array<i64: 1, 256, 128>}]} {
    %c0 = arith.constant 0 : index
    %c0_0 = arith.constant 0 : index
    %c0_1 = arith.constant 0 : index
    %0 = vector.load %arg2[%c0, %c0_0, %c0_1] : memref<1x256x4xbf16, #tpu.memory_space<vmem>>, vector<1x256x4xbf16>
    %1 = vector.shape_cast %0 : vector<1x256x4xbf16> to vector<256x4xbf16>
    %c0_2 = arith.constant 0 : index
    %c0_3 = arith.constant 0 : index
    %2 = vector.load %arg8[%c0_2, %c0_3] : memref<512x4xbf16, #tpu.memory_space<vmem>>, vector<256x4xbf16>
    tpu.vector_store %arg8[%c0_2, %c0_3], %1 {strides = array<i32>} : memref<512x4xbf16, #tpu.memory_space<vmem>>, vector<256x4xbf16>,
    %c0_4 = arith.constant 0 : index
    %c0_5 = arith.constant 0 : index
    %c0_6 = arith.constant 0 : index
    %3 = vector.load %arg3[%c0_4, %c0_5, %c0_6] : memref<1x256x4xbf16, #tpu.memory_space<vmem>>, vector<1x256x4xbf16>
    %4 = vector.shape_cast %3 : vector<1x256x4xbf16> to vector<256x4xbf16>
    %c256 = arith.constant 256 : index
    %c0_7 = arith.constant 0 : index
    %5 = vector.load %arg8[%c256, %c0_7] : memref<512x4xbf16, #tpu.memory_space<vmem>>, vector<256x4xbf16>
    tpu.vector_store %arg8[%c256, %c0_7], %4 {strides = array<i32>} : memref<512x4xbf16, #tpu.memory_space<vmem>>, vector<256x4xbf16>,
    %c0_8 = arith.constant 0 : index
    %c0_9 = arith.constant 0 : index
    %6 = vector.load %arg8[%c0_8, %c0_9] : memref<512x4xbf16, #tpu.memory_space<vmem>>, vector<256x4xbf16>
    %c0_10 = arith.constant 0 : index
    %c0_11 = arith.constant 0 : index
    %c0_12 = arith.constant 0 : index
    %7 = vector.load %arg4[%c0_10, %c0_11, %c0_12] : memref<12x4x128xbf16, #tpu.memory_space<vmem>>, vector<1x4x128xbf16>
    %8 = vector.shape_cast %7 : vector<1x4x128xbf16> to vector<4x128xbf16>
    %cst = arith.constant dense<0.000000e+00> : vector<256x128xf32>
    %9 = tpu.matmul %6, %8, %cst {dimension_numbers = #tpu.dot_dimension_numbers<[1], [0], [0], [1], [0, 0, 1, 1], [], []>} : vector<256x4xbf16>, vector<4x128xbf16>, vector<256x128xf32> -> vector<256x128xf32>
    %c0_13 = arith.constant 0 : index
    %c0_14 = arith.constant 0 : index
    %10 = vector.load %arg9[%c0_13, %c0_14] : memref<256x128xf32, #tpu.memory_space<vmem>>, vector<256x128xf32>
    tpu.vector_store %arg9[%c0_13, %c0_14], %9 {strides = array<i32>} : memref<256x128xf32, #tpu.memory_space<vmem>>, vector<256x128xf32>,
    %c0_15 = arith.constant 0 : index
    %c0_16 = arith.constant 0 : index
    %11 = vector.load %arg9[%c0_15, %c0_16] : memref<256x128xf32, #tpu.memory_space<vmem>>, vector<256x128xf32>
    %c1 = arith.constant 1 : index
    %c0_17 = arith.constant 0 : index
    %12 = vector.load %arg8[%c1, %c0_17] : memref<512x4xbf16, #tpu.memory_space<vmem>>, vector<256x4xbf16>
    %c1_18 = arith.constant 1 : index
    %c0_19 = arith.constant 0 : index
    %c0_20 = arith.constant 0 : index
    %13 = vector.load %arg4[%c1_18, %c0_19, %c0_20] : memref<12x4x128xbf16, #tpu.memory_space<vmem>>, vector<1x4x128xbf16>
    %14 = vector.shape_cast %13 : vector<1x4x128xbf16> to vector<4x128xbf16>
    %cst_21 = arith.constant dense<0.000000e+00> : vector<256x128xf32>
    %15 = tpu.matmul %12, %14, %cst_21 {dimension_numbers = #tpu.dot_dimension_numbers<[1], [0], [0], [1], [0, 0, 1, 1], [], []>} : vector<256x4xbf16>, vector<4x128xbf16>, vector<256x128xf32> -> vector<256x128xf32>
    %16 = arith.addf %11, %15 : vector<256x128xf32>
    %c0_22 = arith.constant 0 : index
    %c0_23 = arith.constant 0 : index
    %17 = vector.load %arg9[%c0_22, %c0_23] : memref<256x128xf32, #tpu.memory_space<vmem>>, vector<256x128xf32>
    tpu.vector_store %arg9[%c0_22, %c0_23], %16 {strides = array<i32>} : memref<256x128xf32, #tpu.memory_space<vmem>>, vector<256x128xf32>,
    %c0_24 = arith.constant 0 : index
    %c0_25 = arith.constant 0 : index
    %18 = vector.load %arg9[%c0_24, %c0_25] : memref<256x128xf32, #tpu.memory_space<vmem>>, vector<256x128xf32>
    %c10 = arith.constant 10 : index
    %c0_26 = arith.constant 0 : index
    %19 = vector.load %arg8[%c10, %c0_26] : memref<512x4xbf16, #tpu.memory_space<vmem>>, vector<256x4xbf16>
    %c2 = arith.constant 2 : index
    %c0_27 = arith.constant 0 : index
    %c0_28 = arith.constant 0 : index
    %20 = vector.load %arg4[%c2, %c0_27, %c0_28] : memref<12x4x128xbf16, #tpu.memory_space<vmem>>, vector<1x4x128xbf16>
    %21 = vector.shape_cast %20 : vector<1x4x128xbf16> to vector<4x128xbf16>
    %cst_29 = arith.constant dense<0.000000e+00> : vector<256x128xf32>
    %22 = tpu.matmul %19, %21, %cst_29 {dimension_numbers = #tpu.dot_dimension_numbers<[1], [0], [0], [1], [0, 0, 1, 1], [], []>} : vector<256x4xbf16>, vector<4x128xbf16>, vector<256x128xf32> -> vector<256x128xf32>
    %23 = arith.addf %18, %22 : vector<256x128xf32>
    %c0_30 = arith.constant 0 : index
    %c0_31 = arith.constant 0 : index
    %24 = vector.load %arg9[%c0_30, %c0_31] : memref<256x128xf32, #tpu.memory_space<vmem>>, vector<256x128xf32>
    tpu.vector_store %arg9[%c0_30, %c0_31], %23 {strides = array<i32>} : memref<256x128xf32, #tpu.memory_space<vmem>>, vector<256x128xf32>,
    %c0_32 = arith.constant 0 : index
    %c0_33 = arith.constant 0 : index
    %25 = vector.load %arg9[%c0_32, %c0_33] : memref<256x128xf32, #tpu.memory_space<vmem>>, vector<256x128xf32>
    %c11 = arith.constant 11 : index
    %c0_34 = arith.constant 0 : index
    %26 = vector.load %arg8[%c11, %c0_34] : memref<512x4xbf16, #tpu.memory_space<vmem>>, vector<256x4xbf16>
    %c3 = arith.constant 3 : index
    %c0_35 = arith.constant 0 : index
    %c0_36 = arith.constant 0 : index
    %27 = vector.load %arg4[%c3, %c0_35, %c0_36] : memref<12x4x128xbf16, #tpu.memory_space<vmem>>, vector<1x4x128xbf16>
    %28 = vector.shape_cast %27 : vector<1x4x128xbf16> to vector<4x128xbf16>
    %cst_37 = arith.constant dense<0.000000e+00> : vector<256x128xf32>
    %29 = tpu.matmul %26, %28, %cst_37 {dimension_numbers = #tpu.dot_dimension_numbers<[1], [0], [0], [1], [0, 0, 1, 1], [], []>} : vector<256x4xbf16>, vector<4x128xbf16>, vector<256x128xf32> -> vector<256x128xf32>
    %30 = arith.addf %25, %29 : vector<256x128xf32>
    %c0_38 = arith.constant 0 : index
    %c0_39 = arith.constant 0 : index
    %31 = vector.load %arg9[%c0_38, %c0_39] : memref<256x128xf32, #tpu.memory_space<vmem>>, vector<256x128xf32>
    tpu.vector_store %arg9[%c0_38, %c0_39], %30 {strides = array<i32>} : memref<256x128xf32, #tpu.memory_space<vmem>>, vector<256x128xf32>,
    %c0_40 = arith.constant 0 : index
    %c0_41 = arith.constant 0 : index
    %32 = vector.load %arg9[%c0_40, %c0_41] : memref<256x128xf32, #tpu.memory_space<vmem>>, vector<256x128xf32>
    %c100 = arith.constant 100 : index
    %c0_42 = arith.constant 0 : index
    %33 = vector.load %arg8[%c100, %c0_42] : memref<512x4xbf16, #tpu.memory_space<vmem>>, vector<256x4xbf16>
    %c4 = arith.constant 4 : index
    %c0_43 = arith.constant 0 : index
    %c0_44 = arith.constant 0 : index
    %34 = vector.load %arg4[%c4, %c0_43, %c0_44] : memref<12x4x128xbf16, #tpu.memory_space<vmem>>, vector<1x4x128xbf16>
    %35 = vector.shape_cast %34 : vector<1x4x128xbf16> to vector<4x128xbf16>
    %cst_45 = arith.constant dense<0.000000e+00> : vector<256x128xf32>
    %36 = tpu.matmul %33, %35, %cst_45 {dimension_numbers = #tpu.dot_dimension_numbers<[1], [0], [0], [1], [0, 0, 1, 1], [], []>} : vector<256x4xbf16>, vector<4x128xbf16>, vector<256x128xf32> -> vector<256x128xf32>
    %37 = arith.addf %32, %36 : vector<256x128xf32>
    %c0_46 = arith.constant 0 : index
    %c0_47 = arith.constant 0 : index
    %38 = vector.load %arg9[%c0_46, %c0_47] : memref<256x128xf32, #tpu.memory_space<vmem>>, vector<256x128xf32>
    tpu.vector_store %arg9[%c0_46, %c0_47], %37 {strides = array<i32>} : memref<256x128xf32, #tpu.memory_space<vmem>>, vector<256x128xf32>,
    %c0_48 = arith.constant 0 : index
    %c0_49 = arith.constant 0 : index
    %39 = vector.load %arg9[%c0_48, %c0_49] : memref<256x128xf32, #tpu.memory_space<vmem>>, vector<256x128xf32>
    %c101 = arith.constant 101 : index
    %c0_50 = arith.constant 0 : index
    %40 = vector.load %arg8[%c101, %c0_50] : memref<512x4xbf16, #tpu.memory_space<vmem>>, vector<256x4xbf16>
    %c5 = arith.constant 5 : index
    %c0_51 = arith.constant 0 : index
    %c0_52 = arith.constant 0 : index
    %41 = vector.load %arg4[%c5, %c0_51, %c0_52] : memref<12x4x128xbf16, #tpu.memory_space<vmem>>, vector<1x4x128xbf16>
    %42 = vector.shape_cast %41 : vector<1x4x128xbf16> to vector<4x128xbf16>
    %cst_53 = arith.constant dense<0.000000e+00> : vector<256x128xf32>
    %43 = tpu.matmul %40, %42, %cst_53 {dimension_numbers = #tpu.dot_dimension_numbers<[1], [0], [0], [1], [0, 0, 1, 1], [], []>} : vector<256x4xbf16>, vector<4x128xbf16>, vector<256x128xf32> -> vector<256x128xf32>
    %44 = arith.addf %39, %43 : vector<256x128xf32>
    %c0_54 = arith.constant 0 : index
    %c0_55 = arith.constant 0 : index
    %45 = vector.load %arg9[%c0_54, %c0_55] : memref<256x128xf32, #tpu.memory_space<vmem>>, vector<256x128xf32>
    tpu.vector_store %arg9[%c0_54, %c0_55], %44 {strides = array<i32>} : memref<256x128xf32, #tpu.memory_space<vmem>>, vector<256x128xf32>,
    %c0_56 = arith.constant 0 : index
    %c0_57 = arith.constant 0 : index
    %46 = vector.load %arg9[%c0_56, %c0_57] : memref<256x128xf32, #tpu.memory_space<vmem>>, vector<256x128xf32>
    %c110 = arith.constant 110 : index
    %c0_58 = arith.constant 0 : index
    %47 = vector.load %arg8[%c110, %c0_58] : memref<512x4xbf16, #tpu.memory_space<vmem>>, vector<256x4xbf16>
    %c6 = arith.constant 6 : index
    %c0_59 = arith.constant 0 : index
    %c0_60 = arith.constant 0 : index
    %48 = vector.load %arg4[%c6, %c0_59, %c0_60] : memref<12x4x128xbf16, #tpu.memory_space<vmem>>, vector<1x4x128xbf16>
    %49 = vector.shape_cast %48 : vector<1x4x128xbf16> to vector<4x128xbf16>
    %cst_61 = arith.constant dense<0.000000e+00> : vector<256x128xf32>
    %50 = tpu.matmul %47, %49, %cst_61 {dimension_numbers = #tpu.dot_dimension_numbers<[1], [0], [0], [1], [0, 0, 1, 1], [], []>} : vector<256x4xbf16>, vector<4x128xbf16>, vector<256x128xf32> -> vector<256x128xf32>
    %51 = arith.addf %46, %50 : vector<256x128xf32>
    %c0_62 = arith.constant 0 : index
    %c0_63 = arith.constant 0 : index
    %52 = vector.load %arg9[%c0_62, %c0_63] : memref<256x128xf32, #tpu.memory_space<vmem>>, vector<256x128xf32>
    tpu.vector_store %arg9[%c0_62, %c0_63], %51 {strides = array<i32>} : memref<256x128xf32, #tpu.memory_space<vmem>>, vector<256x128xf32>,
    %c0_64 = arith.constant 0 : index
    %c0_65 = arith.constant 0 : index
    %53 = vector.load %arg9[%c0_64, %c0_65] : memref<256x128xf32, #tpu.memory_space<vmem>>, vector<256x128xf32>
    %c111 = arith.constant 111 : index
    %c0_66 = arith.constant 0 : index
    %54 = vector.load %arg8[%c111, %c0_66] : memref<512x4xbf16, #tpu.memory_space<vmem>>, vector<256x4xbf16>
    %c7 = arith.constant 7 : index
    %c0_67 = arith.constant 0 : index
    %c0_68 = arith.constant 0 : index
    %55 = vector.load %arg4[%c7, %c0_67, %c0_68] : memref<12x4x128xbf16, #tpu.memory_space<vmem>>, vector<1x4x128xbf16>
    %56 = vector.shape_cast %55 : vector<1x4x128xbf16> to vector<4x128xbf16>
    %cst_69 = arith.constant dense<0.000000e+00> : vector<256x128xf32>
    %57 = tpu.matmul %54, %56, %cst_69 {dimension_numbers = #tpu.dot_dimension_numbers<[1], [0], [0], [1], [0, 0, 1, 1], [], []>} : vector<256x4xbf16>, vector<4x128xbf16>, vector<256x128xf32> -> vector<256x128xf32>
    %58 = arith.addf %53, %57 : vector<256x128xf32>
    %c0_70 = arith.constant 0 : index
    %c0_71 = arith.constant 0 : index
    %59 = vector.load %arg9[%c0_70, %c0_71] : memref<256x128xf32, #tpu.memory_space<vmem>>, vector<256x128xf32>
    tpu.vector_store %arg9[%c0_70, %c0_71], %58 {strides = array<i32>} : memref<256x128xf32, #tpu.memory_space<vmem>>, vector<256x128xf32>,
    %c0_72 = arith.constant 0 : index
    %c0_73 = arith.constant 0 : index
    %60 = vector.load %arg9[%c0_72, %c0_73] : memref<256x128xf32, #tpu.memory_space<vmem>>, vector<256x128xf32>
    %c200 = arith.constant 200 : index
    %c0_74 = arith.constant 0 : index
    %61 = vector.load %arg8[%c200, %c0_74] : memref<512x4xbf16, #tpu.memory_space<vmem>>, vector<256x4xbf16>
    %c8 = arith.constant 8 : index
    %c0_75 = arith.constant 0 : index
    %c0_76 = arith.constant 0 : index
    %62 = vector.load %arg4[%c8, %c0_75, %c0_76] : memref<12x4x128xbf16, #tpu.memory_space<vmem>>, vector<1x4x128xbf16>
    %63 = vector.shape_cast %62 : vector<1x4x128xbf16> to vector<4x128xbf16>
    %cst_77 = arith.constant dense<0.000000e+00> : vector<256x128xf32>
    %64 = tpu.matmul %61, %63, %cst_77 {dimension_numbers = #tpu.dot_dimension_numbers<[1], [0], [0], [1], [0, 0, 1, 1], [], []>} : vector<256x4xbf16>, vector<4x128xbf16>, vector<256x128xf32> -> vector<256x128xf32>
    %65 = arith.addf %60, %64 : vector<256x128xf32>
    %c0_78 = arith.constant 0 : index
    %c0_79 = arith.constant 0 : index
    %66 = vector.load %arg9[%c0_78, %c0_79] : memref<256x128xf32, #tpu.memory_space<vmem>>, vector<256x128xf32>
    tpu.vector_store %arg9[%c0_78, %c0_79], %65 {strides = array<i32>} : memref<256x128xf32, #tpu.memory_space<vmem>>, vector<256x128xf32>,
    %c0_80 = arith.constant 0 : index
    %c0_81 = arith.constant 0 : index
    %67 = vector.load %arg9[%c0_80, %c0_81] : memref<256x128xf32, #tpu.memory_space<vmem>>, vector<256x128xf32>
    %c201 = arith.constant 201 : index
    %c0_82 = arith.constant 0 : index
    %68 = vector.load %arg8[%c201, %c0_82] : memref<512x4xbf16, #tpu.memory_space<vmem>>, vector<256x4xbf16>
    %c9 = arith.constant 9 : index
    %c0_83 = arith.constant 0 : index
    %c0_84 = arith.constant 0 : index
    %69 = vector.load %arg4[%c9, %c0_83, %c0_84] : memref<12x4x128xbf16, #tpu.memory_space<vmem>>, vector<1x4x128xbf16>
    %70 = vector.shape_cast %69 : vector<1x4x128xbf16> to vector<4x128xbf16>
    %cst_85 = arith.constant dense<0.000000e+00> : vector<256x128xf32>
    %71 = tpu.matmul %68, %70, %cst_85 {dimension_numbers = #tpu.dot_dimension_numbers<[1], [0], [0], [1], [0, 0, 1, 1], [], []>} : vector<256x4xbf16>, vector<4x128xbf16>, vector<256x128xf32> -> vector<256x128xf32>
    %72 = arith.addf %67, %71 : vector<256x128xf32>
    %c0_86 = arith.constant 0 : index
    %c0_87 = arith.constant 0 : index
    %73 = vector.load %arg9[%c0_86, %c0_87] : memref<256x128xf32, #tpu.memory_space<vmem>>, vector<256x128xf32>
    tpu.vector_store %arg9[%c0_86, %c0_87], %72 {strides = array<i32>} : memref<256x128xf32, #tpu.memory_space<vmem>>, vector<256x128xf32>,
    %c0_88 = arith.constant 0 : index
    %c0_89 = arith.constant 0 : index
    %74 = vector.load %arg9[%c0_88, %c0_89] : memref<256x128xf32, #tpu.memory_space<vmem>>, vector<256x128xf32>
    %c210 = arith.constant 210 : index
    %c0_90 = arith.constant 0 : index
    %75 = vector.load %arg8[%c210, %c0_90] : memref<512x4xbf16, #tpu.memory_space<vmem>>, vector<256x4xbf16>
    %c10_91 = arith.constant 10 : index
    %c0_92 = arith.constant 0 : index
    %c0_93 = arith.constant 0 : index
    %76 = vector.load %arg4[%c10_91, %c0_92, %c0_93] : memref<12x4x128xbf16, #tpu.memory_space<vmem>>, vector<1x4x128xbf16>
    %77 = vector.shape_cast %76 : vector<1x4x128xbf16> to vector<4x128xbf16>
    %cst_94 = arith.constant dense<0.000000e+00> : vector<256x128xf32>
    %78 = tpu.matmul %75, %77, %cst_94 {dimension_numbers = #tpu.dot_dimension_numbers<[1], [0], [0], [1], [0, 0, 1, 1], [], []>} : vector<256x4xbf16>, vector<4x128xbf16>, vector<256x128xf32> -> vector<256x128xf32>
    %79 = arith.addf %74, %78 : vector<256x128xf32>
    %c0_95 = arith.constant 0 : index
    %c0_96 = arith.constant 0 : index
    %80 = vector.load %arg9[%c0_95, %c0_96] : memref<256x128xf32, #tpu.memory_space<vmem>>, vector<256x128xf32>
    tpu.vector_store %arg9[%c0_95, %c0_96], %79 {strides = array<i32>} : memref<256x128xf32, #tpu.memory_space<vmem>>, vector<256x128xf32>,
    %c0_97 = arith.constant 0 : index
    %c0_98 = arith.constant 0 : index
    %81 = vector.load %arg9[%c0_97, %c0_98] : memref<256x128xf32, #tpu.memory_space<vmem>>, vector<256x128xf32>
    %c211 = arith.constant 211 : index
    %c0_99 = arith.constant 0 : index
    %82 = vector.load %arg8[%c211, %c0_99] : memref<512x4xbf16, #tpu.memory_space<vmem>>, vector<256x4xbf16>
    %c11_100 = arith.constant 11 : index
    %c0_101 = arith.constant 0 : index
    %c0_102 = arith.constant 0 : index
    %83 = vector.load %arg4[%c11_100, %c0_101, %c0_102] : memref<12x4x128xbf16, #tpu.memory_space<vmem>>, vector<1x4x128xbf16>
    %84 = vector.shape_cast %83 : vector<1x4x128xbf16> to vector<4x128xbf16>
    %cst_103 = arith.constant dense<0.000000e+00> : vector<256x128xf32>
    %85 = tpu.matmul %82, %84, %cst_103 {dimension_numbers = #tpu.dot_dimension_numbers<[1], [0], [0], [1], [0, 0, 1, 1], [], []>} : vector<256x4xbf16>, vector<4x128xbf16>, vector<256x128xf32> -> vector<256x128xf32>
    %86 = arith.addf %81, %85 : vector<256x128xf32>
    %c0_104 = arith.constant 0 : index
    %c0_105 = arith.constant 0 : index
    %87 = vector.load %arg9[%c0_104, %c0_105] : memref<256x128xf32, #tpu.memory_space<vmem>>, vector<256x128xf32>
    tpu.vector_store %arg9[%c0_104, %c0_105], %86 {strides = array<i32>} : memref<256x128xf32, #tpu.memory_space<vmem>>, vector<256x128xf32>,
    %c0_106 = arith.constant 0 : index
    %c0_107 = arith.constant 0 : index
    %88 = vector.load %arg9[%c0_106, %c0_107] : memref<256x128xf32, #tpu.memory_space<vmem>>, vector<256x128xf32>
    %c0_108 = arith.constant 0 : index
    %c0_109 = arith.constant 0 : index
    %89 = vector.load %arg5[%c0_108, %c0_109] : memref<1x128xf32, #tpu.memory_space<vmem>>, vector<1x128xf32>
    %90 = vector.broadcast %89 : vector<1x128xf32> to vector<256x128xf32>
    %91 = arith.addf %88, %90 : vector<256x128xf32>
    %c0_110 = arith.constant 0 : index
    %c0_111 = arith.constant 0 : index
    %c0_112 = arith.constant 0 : index
    %92 = vector.load %arg6[%c0_110, %c0_111, %c0_112] : memref<1x1x128xf32, #tpu.memory_space<vmem>>, vector<1x1x128xf32>
    %93 = vector.shape_cast %92 : vector<1x1x128xf32> to vector<1x128xf32>
    %94 = vector.broadcast %93 : vector<1x128xf32> to vector<256x128xf32>
    %95 = arith.mulf %91, %94 : vector<256x128xf32>
    %c0_113 = arith.constant 0 : index
    %c0_114 = arith.constant 0 : index
    %c0_115 = arith.constant 0 : index
    %96 = vector.load %arg7[%c0_113, %c0_114, %c0_115] : memref<1x256x128xf32, #tpu.memory_space<vmem>>, vector<1x256x128xf32>
    %97 = vector.shape_cast %96 : vector<1x256x128xf32> to vector<256x128xf32>
    %98 = vector.shape_cast %95 : vector<256x128xf32> to vector<1x256x128xf32>
    tpu.vector_store %arg7[%c0_113, %c0_114, %c0_115], %98 {strides = array<i32>} : memref<1x256x128xf32, #tpu.memory_space<vmem>>, vector<1x256x128xf32>,
    return
  }
  func.func @transform_0(%arg0: i32, %arg1: i32) -> (i32, i32, i32) {
    %c0_i32 = arith.constant 0 : i32
    %c0_i32_0 = arith.constant 0 : i32
    return %arg0, %arg1, %c0_i32 : i32, i32, i32
  }
  func.func @transform_1(%arg0: i32, %arg1: i32) -> (i32, i32, i32) {
    %c1_i32 = arith.constant 1 : i32
    %0 = arith.addi %arg1, %c1_i32 : i32
    %c0_i32 = arith.constant 0 : i32
    %c0_i32_0 = arith.constant 0 : i32
    return %arg0, %0, %c0_i32 : i32, i32, i32
  }
  func.func @transform_2(%arg0: i32, %arg1: i32) -> (i32, i32, i32) {
    %c0_i32 = arith.constant 0 : i32
    %c0_i32_0 = arith.constant 0 : i32
    %c0_i32_1 = arith.constant 0 : i32
    %c0_i32_2 = arith.constant 0 : i32
    return %c0_i32, %c0_i32_0, %c0_i32_1 : i32, i32, i32
  }
  func.func @transform_3(%arg0: i32, %arg1: i32) -> (i32, i32) {
    %c0_i32 = arith.constant 0 : i32
    %c0_i32_0 = arith.constant 0 : i32
    %c0_i32_1 = arith.constant 0 : i32
    return %c0_i32, %c0_i32_0 : i32, i32
  }
  func.func @transform_4(%arg0: i32, %arg1: i32) -> (i32, i32, i32) {
    %c0_i32 = arith.constant 0 : i32
    %c0_i32_0 = arith.constant 0 : i32
    %c0_i32_1 = arith.constant 0 : i32
    return %arg0, %c0_i32, %c0_i32_0 : i32, i32, i32
  }
  func.func @transform_5(%arg0: i32, %arg1: i32) -> (i32, i32, i32) {
    %c0_i32 = arith.constant 0 : i32
    %c0_i32_0 = arith.constant 0 : i32
    return %arg0, %arg1, %c0_i32 : i32, i32, i32
  }
}

</mosaic_0001>

<llo_original>
// kernel: tpu_custom_call.1
$region0: #{tpu_custom_call.1}
  #allocation0 [shape = 'u32[]', space=smem, size = 0x4, offset = 0x4, fixed_abs, tag = 'smem constant byte address 0x4 - core index']
  #allocation1 [shape = 'u32[144,128]{1,0:T(1,128)}', space=vmem, size = 0x12000, scoped, tag = 'internal scratch']
  #allocation2 [shape = 'bf16[512,4]{1,0:T(16,128)(2,1)}', space=vmem, size = 0x20000, scoped, tag = 'scratch operand']
  #allocation3 [shape = 'f32[256,128]{1,0:T(8,128)}', space=vmem, size = 0x20000, scoped, tag = 'scratch operand']
  %s0 = inlined_call_operand.vmem [shape: bf16[2,768,4], index: 0, kind: input, shape index: {}]
  %s1 = inlined_call_operand.vmem [shape: bf16[2,768,4], index: 1, kind: input, shape index: {}]
  %s2 = inlined_call_operand.vmem [shape: bf16[12,4,128], index: 2, kind: input, shape index: {}]
  %s3 = inlined_call_operand.vmem [shape: f32[1,128], index: 3, kind: input, shape index: {}]
  %s4 = inlined_call_operand.vmem [shape: f32[2,1,128], index: 4, kind: input, shape index: {}]
  %s5 = inlined_call_operand.hbm [shape: f32[2,512,128], index: 5, kind: output, shape index: {}]
  %s6 = sld [smem:[#allocation0]]
  $region53: #{tpu_custom_call.1} parent=0
    _
  %s8 = ssub.s32 1, %s6
  %s9 = scalar_select 0, %s8, %s6
  $region1: #{tpu_custom_call.1} parent=0
    #allocation4 [shape = 'u8[262144]{0}', space=vmem, size = 0x40000, scoped, tag = 'output window, operand 0']
    #allocation5 [shape = 's32[2]{0}', space=sflag, size = 0x8, scoped, tag = 'scoped memory for tpu_custom_call.1']
    %10 = vsyncpa [#allocation5], 0
    %s11 = scalar_lea.sflag [#allocation5], 1
    %12 = vsyncpa %s11, 0
    loop: start=0, step=1, limit=6
    $region2: #{tpu_custom_call.1} parent=1 // loop_pre_header
      _
    $region3: #{tpu_custom_call.1} parent=1 // loop_header
      %s14 = sphi 0, %s18
      %p15 = scmp.ge.s32.totalorder %s14, 6
      %s21 = sphi 0, %s33
      %s22 = sphi 0, %s29
      %s23 = sphi 0, %s21
      %s24 = sphi 0, %s22
      %s25 = sphi 0, %s23
      %s26 = sphi 0, %s24
      %s38 = sphi 0, %s40
      %s41 = sphi 0, %s38
      %s42 = sphi 0, %s41
      %s58 = sphi 0, %s42
      %s68 = sphi 0, %s70
      %s71 = sphi 0, %s68
      %s72 = sphi 0, %s71
      %s88 = sphi 0, %s72
      %s92 = sphi 0, %s92
      %s94 = sphi 0, %s92
      %s95 = sphi 0, %s94
      %s109 = sphi 0, %s95
      %s113 = sphi 0, %s113
      %s115 = sphi 0, %s113
      %s116 = sphi 0, %s115
      %s130 = sphi 0, %s116
      %s136 = sphi 0, %s138
      %s139 = sphi 0, %s136
      %s140 = sphi 0, %s139
      %s156 = sphi 0, %s140
      %s164 = sphi 0, %s166
      %s167 = sphi 0, %s164
      %s168 = sphi 0, %s167
      %s184 = sphi 0, %s168
    $region4: #{tpu_custom_call.1} parent=1 // loop_header_branch
      %17 = sbr.rel (%p15) target = $region8
    $region5: #{tpu_custom_call.1} parent=1 // loop_body
      %s19 = ssub.s32 %s14, 1
      %s20 = ssub.s32 %s14, 2
      %s27 = sadd.s32 1, %s22
      %p28 = scmp.ge.s32.totalorder %s27, 2
      %s29 = scalar_select %p28, 0, %s27
      %s30 = sadd.s32 1, %s21
      %s31 = scalar_select %p28, %s30, %s21
      %p32 = scmp.ge.s32.totalorder %s31, 2
      %s33 = scalar_select %p32, 0, %s31
      %s34 = ssub.s32 %s21, %s33
      %s35 = ssub.s32 %s22, %s29
      %s36 = sor.u32 %s34, %s35
      %p37 = scmp.eq.s32.totalorder %s36, 0
      %s39 = sadd.s32 %s38, 1
      %s40 = scalar_select %p37, %s38, %s39
      %p43 = pneg %p37
      %p44 = scmp.eq.s32.totalorder %s14, 3
      %p45 = por %p43, %p44
      %p46 = scmp.ne.s32.totalorder %s38, %s41
      %p47 = scmp.eq.s32.totalorder %s14, 0
      %p48 = por %p46, %p47
      %p49 = scmp.ne.s32.totalorder %s38, %s41
      %p50 = scmp.eq.s32.totalorder %s19, 3
      %p51 = por %p49, %p50
      %p52 = scmp.ne.s32.totalorder %s41, %s42
      %p53 = scmp.eq.s32.totalorder %s19, 0
      %p54 = por %p52, %p53
      %p55 = scmp.ne.s32.totalorder %s41, %s42
      %p56 = scmp.eq.s32.totalorder %s20, 3
      %p57 = por %p55, %p56
      %p59 = scmp.ne.s32.totalorder %s42, %s58
      %p60 = scmp.eq.s32.totalorder %s20, 0
      %p61 = por %p59, %p60
      %s62 = sadd.s32 %s22, 1
      %s63 = sadd.s32 %s29, 1
      %s64 = ssub.s32 %s21, %s33
      %s65 = ssub.s32 %s62, %s63
      %s66 = sor.u32 %s64, %s65
      %p67 = scmp.eq.s32.totalorder %s66, 0
      %s69 = sadd.s32 %s68, 1
      %s70 = scalar_select %p67, %s68, %s69
      %p73 = pneg %p67
      %p74 = scmp.eq.s32.totalorder %s14, 3
      %p75 = por %p73, %p74
      %p76 = scmp.ne.s32.totalorder %s68, %s71
      %p77 = scmp.eq.s32.totalorder %s14, 0
      %p78 = por %p76, %p77
      %p79 = scmp.ne.s32.totalorder %s68, %s71
      %p80 = scmp.eq.s32.totalorder %s19, 3
      %p81 = por %p79, %p80
      %p82 = scmp.ne.s32.totalorder %s71, %s72
      %p83 = scmp.eq.s32.totalorder %s19, 0
      %p84 = por %p82, %p83
      %p85 = scmp.ne.s32.totalorder %s71, %s72
      %p86 = scmp.eq.s32.totalorder %s20, 3
      %p87 = por %p85, %p86
      %p89 = scmp.ne.s32.totalorder %s72, %s88
      %p90 = scmp.eq.s32.totalorder %s20, 0
      %p91 = por %p89, %p90
      %s93 = sadd.s32 %s92, 1
      %p96 = scmp.eq.s32.totalorder %s14, 3
      %p97 = scmp.ne.s32.totalorder %s92, %s94
      %p98 = scmp.eq.s32.totalorder %s14, 0
      %p99 = por %p97, %p98
      %p100 = scmp.ne.s32.totalorder %s92, %s94
      %p101 = scmp.eq.s32.totalorder %s19, 3
      %p102 = por %p100, %p101
      %p103 = scmp.ne.s32.totalorder %s94, %s95
      %p104 = scmp.eq.s32.totalorder %s19, 0
      %p105 = por %p103, %p104
      %p106 = scmp.ne.s32.totalorder %s94, %s95
      %p107 = scmp.eq.s32.totalorder %s20, 3
      %p108 = por %p106, %p107
      %p110 = scmp.ne.s32.totalorder %s95, %s109
      %p111 = scmp.eq.s32.totalorder %s20, 0
      %p112 = por %p110, %p111
      %s114 = sadd.s32 %s113, 1
      %p117 = scmp.eq.s32.totalorder %s14, 3
      %p118 = scmp.ne.s32.totalorder %s113, %s115
      %p119 = scmp.eq.s32.totalorder %s14, 0
      %p120 = por %p118, %p119
      %p121 = scmp.ne.s32.totalorder %s113, %s115
      %p122 = scmp.eq.s32.totalorder %s19, 3
      %p123 = por %p121, %p122
      %p124 = scmp.ne.s32.totalorder %s115, %s116
      %p125 = scmp.eq.s32.totalorder %s19, 0
      %p126 = por %p124, %p125
      %p127 = scmp.ne.s32.totalorder %s115, %s116
      %p128 = scmp.eq.s32.totalorder %s20, 3
      %p129 = por %p127, %p128
      %p131 = scmp.ne.s32.totalorder %s116, %s130
      %p132 = scmp.eq.s32.totalorder %s20, 0
      %p133 = por %p131, %p132
      %s134 = ssub.s32 %s21, %s33
      %p135 = scmp.eq.s32.totalorder %s134, 0
      %s137 = sadd.s32 %s136, 1
      %s138 = scalar_select %p135, %s136, %s137
      %p141 = pneg %p135
      %p142 = scmp.eq.s32.totalorder %s14, 3
      %p143 = por %p141, %p142
      %p144 = scmp.ne.s32.totalorder %s136, %s139
      %p145 = scmp.eq.s32.totalorder %s14, 0
      %p146 = por %p144, %p145
      %p147 = scmp.ne.s32.totalorder %s136, %s139
      %p148 = scmp.eq.s32.totalorder %s19, 3
      %p149 = por %p147, %p148
      %p150 = scmp.ne.s32.totalorder %s139, %s140
      %p151 = scmp.eq.s32.totalorder %s19, 0
      %p152 = por %p150, %p151
      %p153 = scmp.ne.s32.totalorder %s139, %s140
      %p154 = scmp.eq.s32.totalorder %s20, 3
      %p155 = por %p153, %p154
      %p157 = scmp.ne.s32.totalorder %s140, %s156
      %p158 = scmp.eq.s32.totalorder %s20, 0
      %p159 = por %p157, %p158
      %s160 = ssub.s32 %s21, %s33
      %s161 = ssub.s32 %s22, %s29
      %s162 = sor.u32 %s160, %s161
      %p163 = scmp.eq.s32.totalorder %s162, 0
      %s165 = sadd.s32 %s164, 1
      %s166 = scalar_select %p163, %s164, %s165
      %p169 = pneg %p163
      %p170 = scmp.eq.s32.totalorder %s14, 3
      %p171 = por %p169, %p170
      %p172 = scmp.ne.s32.totalorder %s164, %s167
      %p173 = scmp.eq.s32.totalorder %s14, 0
      %p174 = por %p172, %p173
      %p175 = scmp.ne.s32.totalorder %s164, %s167
      %p176 = scmp.eq.s32.totalorder %s19, 3
      %p177 = por %p175, %p176
      %p178 = scmp.ne.s32.totalorder %s167, %s168
      %p179 = scmp.eq.s32.totalorder %s19, 0
      %p180 = por %p178, %p179
      %p181 = scmp.ne.s32.totalorder %s167, %s168
      %p182 = scmp.eq.s32.totalorder %s20, 3
      %p183 = por %p181, %p182
      %p185 = scmp.ne.s32.totalorder %s168, %s184
      %p186 = scmp.eq.s32.totalorder %s20, 0
      %p187 = por %p185, %p186
      %p188 = scmp.le.s32.totalorder 1, %s14
      %p189 = scmp.lt.s32.totalorder %s14, 5
      %p190 = pnand %p188, %p189
      %p191 = pneg %p190
      // Predicated region
      $region9: #{tpu_custom_call.1} parent=5 // pred_check
        _
      $region10: #{tpu_custom_call.1} parent=5 // pred_check_branch
        %193 = sbr.rel (%p190) target = $region12
      $region11: #{tpu_custom_call.1} parent=5 // pred_region
        %s194 = ssub.s32 %s14, 1
        // Predicated region
        $region13: #{tpu_custom_call.1} parent=11 // pred_check
          %p195 = pneg %p105
        $region14: #{tpu_custom_call.1} parent=11 // pred_check_branch
          %197 = sbr.rel (%p195) target = $region16
        $region15: #{tpu_custom_call.1} parent=11 // pred_region
          _
        $region16: #{tpu_custom_call.1} parent=11 // pred_fallthru
          _
        // Predicated region
        $region17: #{tpu_custom_call.1} parent=11 // pred_check
          %p198 = pneg %p126
        $region18: #{tpu_custom_call.1} parent=11 // pred_check_branch
          %200 = sbr.rel (%p198) target = $region20
        $region19: #{tpu_custom_call.1} parent=11 // pred_region
          _
        $region20: #{tpu_custom_call.1} parent=11 // pred_fallthru
          _
      $region12: #{tpu_custom_call.1} parent=5 // pred_fallthru
        _
      %p201 = scmp.lt.s32.totalorder %s14, 4
      // Predicated region
      $region21: #{tpu_custom_call.1} parent=5 // pred_check
        %p202 = pneg %p201
      $region22: #{tpu_custom_call.1} parent=5 // pred_check_branch
        %204 = sbr.rel (%p202) target = $region24
      $region23: #{tpu_custom_call.1} parent=5 // pred_region
        // Predicated region
        $region25: #{tpu_custom_call.1} parent=23 // pred_check
          %p205 = pneg %p48
        $region26: #{tpu_custom_call.1} parent=23 // pred_check_branch
          %207 = sbr.rel (%p205) target = $region28
        $region27: #{tpu_custom_call.1} parent=23 // pred_region
          %s208 = smul.u32 32, %s22
          %p209 = scmp.lt.s32.totalorder %s21, 1
          %s210 = scalar_select %p209, %s21, 1
          %p211 = scmp.lt.s32.totalorder %s208, 95
          %s212 = scalar_select %p211, %s208, 95
          %s213 = smul.addr %s210, 96
          %s214 = sadd.s32 %s212, %s213
          %s215 = smul.addr %s214, 4
          %s216 = scalar_lea.vmem %s0, %s215
          %s217 = smul.u32 32, %s22
        $region28: #{tpu_custom_call.1} parent=23 // pred_fallthru
          _
        // Predicated region
        $region29: #{tpu_custom_call.1} parent=23 // pred_check
          %p218 = pneg %p78
        $region30: #{tpu_custom_call.1} parent=23 // pred_check_branch
          %220 = sbr.rel (%p218) target = $region32
        $region31: #{tpu_custom_call.1} parent=23 // pred_region
          %s221 = sadd.s32 %s22, 1
          %s222 = smul.u32 32, %s221
          %p223 = scmp.lt.s32.totalorder %s21, 1
          %s224 = scalar_select %p223, %s21, 1
          %p225 = scmp.lt.s32.totalorder %s222, 95
          %s226 = scalar_select %p225, %s222, 95
          %s227 = smul.addr %s224, 96
          %s228 = sadd.s32 %s226, %s227
          %s229 = smul.addr %s228, 4
          %s230 = scalar_lea.vmem %s1, %s229
          %s231 = sadd.s32 %s22, 1
          %s232 = smul.u32 32, %s231
        $region32: #{tpu_custom_call.1} parent=23 // pred_fallthru
          _
        // Predicated region
        $region33: #{tpu_custom_call.1} parent=23 // pred_check
          %p233 = pneg %p146
        $region34: #{tpu_custom_call.1} parent=23 // pred_check_branch
          %235 = sbr.rel (%p233) target = $region36
        $region35: #{tpu_custom_call.1} parent=23 // pred_region
          %p236 = scmp.lt.s32.totalorder %s21, 1
          %s237 = scalar_select %p236, %s21, 1
          %s238 = scalar_lea.vmem %s4, %s237
        $region36: #{tpu_custom_call.1} parent=23 // pred_fallthru
          _
      $region24: #{tpu_custom_call.1} parent=5 // pred_fallthru
        _
      %p239 = scmp.le.s32.totalorder 1, %s14
      %p240 = scmp.lt.s32.totalorder %s14, 5
      %p241 = pnand %p239, %p240
      %p242 = pneg %p241
      // Predicated region
      $region37: #{tpu_custom_call.1} parent=5 // pred_check
        _
      $region38: #{tpu_custom_call.1} parent=5 // pred_check_branch
        %244 = sbr.rel (%p241) target = $region40
      $region39: #{tpu_custom_call.1} parent=5 // pred_region
        %s245 = ssub.s32 %s14, 1
        %s246 = smul.u32 32, %s24
        %p247 = scmp.lt.s32.totalorder %s23, 1
        %s248 = scalar_select %p247, %s23, 1
        %p249 = scmp.lt.s32.totalorder %s246, 95
        %s250 = scalar_select %p249, %s246, 95
        %s251 = smul.addr %s248, 96
        %s252 = sadd.s32 %s250, %s251
        %s253 = smul.addr %s252, 4
        %s254 = scalar_lea.vmem %s0, %s253
        %p255 = pneg %p54
        %p256 = pneg %p51
        %s257 = sadd.s32 %s24, 1
        %s258 = smul.u32 32, %s257
        %p259 = scmp.lt.s32.totalorder %s23, 1
        %s260 = scalar_select %p259, %s23, 1
        %p261 = scmp.lt.s32.totalorder %s258, 95
        %s262 = scalar_select %p261, %s258, 95
        %s263 = smul.addr %s260, 96
        %s264 = sadd.s32 %s262, %s263
        %s265 = smul.addr %s264, 4
        %s266 = scalar_lea.vmem %s1, %s265
        %p267 = pneg %p84
        %p268 = pneg %p81
        %p269 = pneg %p105
        %p270 = pneg %p102
        %p271 = pneg %p126
        %p272 = pneg %p123
        %p273 = scmp.lt.s32.totalorder %s23, 1
        %s274 = scalar_select %p273, %s23, 1
        %s275 = scalar_lea.vmem %s4, %s274
        %p276 = pneg %p152
        %p277 = pneg %p149
        %p278 = pneg %p180
        %p279 = pneg %p177
        %s280 = sand.u32 %s167, 1
        %s281 = scalar_lea.sflag [#allocation5], %s280
        %s282 = sand.u32 %s167, 1
        %s283 = smul.addr %s282, 256
        %s284 = scalar_lea.vmem [#allocation4], %s283
        %s285 = smul.u32 32, %s24
        %p286 = scmp.lt.s32.totalorder %s23, 1
        %s287 = scalar_select %p286, %s23, 1
        %p288 = scmp.lt.s32.totalorder %s285, 95
        %s289 = scalar_select %p288, %s285, 95
        %s290 = smul.addr %s287, 96
        %s291 = sadd.s32 %s289, %s290
        %s292 = smul.addr %s291, 4
        %s293 = scalar_lea.vmem %s0, %s292
        %s294 = smul.u32 32, %s24
        %s295 = sadd.s32 %s24, 1
        %s296 = smul.u32 32, %s295
        %p297 = scmp.lt.s32.totalorder %s23, 1
        %s298 = scalar_select %p297, %s23, 1
        %p299 = scmp.lt.s32.totalorder %s296, 95
        %s300 = scalar_select %p299, %s296, 95
        %s301 = smul.addr %s298, 96
        %s302 = sadd.s32 %s300, %s301
        %s303 = smul.addr %s302, 4
        %s304 = scalar_lea.vmem %s1, %s303
        %s305 = sadd.s32 %s24, 1
        %s306 = smul.u32 32, %s305
        %p307 = scmp.lt.s32.totalorder %s23, 1
        %s308 = scalar_select %p307, %s23, 1
        %s309 = scalar_lea.vmem %s4, %s308
        %s310 = smul.u32 32, %s24
        %v312 = vld [vmem:[%s293] sm:$0xf]
        %v313 = vld [vmem:[%s293 + $0x4] sm:$0xf]
        %v314 = vld [vmem:[%s293 + $0x8] sm:$0xf]
        %v315 = vld [vmem:[%s293 + $0xc] sm:$0xf]
        %v316 = vld [vmem:[%s293 + $0x10] sm:$0xf]
        %v317 = vld [vmem:[%s293 + $0x14] sm:$0xf]
        %v318 = vld [vmem:[%s293 + $0x18] sm:$0xf]
        %v319 = vld [vmem:[%s293 + $0x1c] sm:$0xf]
        %v320 = vld [vmem:[%s293 + $0x20] sm:$0xf]
        %v321 = vld [vmem:[%s293 + $0x24] sm:$0xf]
        %v322 = vld [vmem:[%s293 + $0x28] sm:$0xf]
        %v323 = vld [vmem:[%s293 + $0x2c] sm:$0xf]
        %v324 = vld [vmem:[%s293 + $0x30] sm:$0xf]
        %v325 = vld [vmem:[%s293 + $0x34] sm:$0xf]
        %v326 = vld [vmem:[%s293 + $0x38] sm:$0xf]
        %v327 = vld [vmem:[%s293 + $0x3c] sm:$0xf]
        %v328 = vld [vmem:[%s293 + $0x40] sm:$0xf]
        %v329 = vld [vmem:[%s293 + $0x44] sm:$0xf]
        %v330 = vld [vmem:[%s293 + $0x48] sm:$0xf]
        %v331 = vld [vmem:[%s293 + $0x4c] sm:$0xf]
        %v332 = vld [vmem:[%s293 + $0x50] sm:$0xf]
        %v333 = vld [vmem:[%s293 + $0x54] sm:$0xf]
        %v334 = vld [vmem:[%s293 + $0x58] sm:$0xf]
        %v335 = vld [vmem:[%s293 + $0x5c] sm:$0xf]
        %v336 = vld [vmem:[%s293 + $0x60] sm:$0xf]
        %v337 = vld [vmem:[%s293 + $0x64] sm:$0xf]
        %v338 = vld [vmem:[%s293 + $0x68] sm:$0xf]
        %v339 = vld [vmem:[%s293 + $0x6c] sm:$0xf]
        %v340 = vld [vmem:[%s293 + $0x70] sm:$0xf]
        %v341 = vld [vmem:[%s293 + $0x74] sm:$0xf]
        %v342 = vld [vmem:[%s293 + $0x78] sm:$0xf]
        %v343 = vld [vmem:[%s293 + $0x7c] sm:$0xf]
        %v376 = vunpack.c.l.b16 %v312
        %v377 = vunpack.c.l.b16 %v313
        %v378 = vunpack.c.l.b16 %v314
        %v379 = vunpack.c.l.b16 %v315
        %v380 = vunpack.c.l.b16 %v316
        %v381 = vunpack.c.l.b16 %v317
        %v382 = vunpack.c.l.b16 %v318
        %v383 = vunpack.c.l.b16 %v319
        %v384 = vunpack.c.l.b16 %v320
        %v385 = vunpack.c.l.b16 %v321
        %v386 = vunpack.c.l.b16 %v322
        %v387 = vunpack.c.l.b16 %v323
        %v388 = vunpack.c.l.b16 %v324
        %v389 = vunpack.c.l.b16 %v325
        %v390 = vunpack.c.l.b16 %v326
        %v391 = vunpack.c.l.b16 %v327
        %v392 = vunpack.c.l.b16 %v328
        %v393 = vunpack.c.l.b16 %v329
        %v394 = vunpack.c.l.b16 %v330
        %v395 = vunpack.c.l.b16 %v331
        %v396 = vunpack.c.l.b16 %v332
        %v397 = vunpack.c.l.b16 %v333
        %v398 = vunpack.c.l.b16 %v334
        %v399 = vunpack.c.l.b16 %v335
        %v400 = vunpack.c.l.b16 %v336
        %v401 = vunpack.c.l.b16 %v337
        %v402 = vunpack.c.l.b16 %v338
        %v403 = vunpack.c.l.b16 %v339
        %v404 = vunpack.c.l.b16 %v340
        %v405 = vunpack.c.l.b16 %v341
        %v406 = vunpack.c.l.b16 %v342
        %v407 = vunpack.c.l.b16 %v343
        %v408 = vpack.c.b16 %v377, %v376
        %v409 = vpack.c.b16 %v379, %v378
        %v410 = vpack.c.b16 %v381, %v380
        %v411 = vpack.c.b16 %v383, %v382
        %v412 = vpack.c.b16 %v385, %v384
        %v413 = vpack.c.b16 %v387, %v386
        %v414 = vpack.c.b16 %v389, %v388
        %v415 = vpack.c.b16 %v391, %v390
        %v416 = vpack.c.b16 %v393, %v392
        %v417 = vpack.c.b16 %v395, %v394
        %v418 = vpack.c.b16 %v397, %v396
        %v419 = vpack.c.b16 %v399, %v398
        %v420 = vpack.c.b16 %v401, %v400
        %v421 = vpack.c.b16 %v403, %v402
        %v422 = vpack.c.b16 %v405, %v404
        %v423 = vpack.c.b16 %v407, %v406
        %vm440 = vcmask 31744
        %441 = vst.msk [vmem:[#allocation2] sm:$0xff] %vm440, %v408
        %442 = vst.msk [vmem:[#allocation2 + $0x8] sm:$0xff] %vm440, %v409
        %443 = vst.msk [vmem:[#allocation2 + $0x10] sm:$0xff] %vm440, %v410
        %444 = vst.msk [vmem:[#allocation2 + $0x18] sm:$0xff] %vm440, %v411
        %445 = vst.msk [vmem:[#allocation2 + $0x20] sm:$0xff] %vm440, %v412
        %446 = vst.msk [vmem:[#allocation2 + $0x28] sm:$0xff] %vm440, %v413
        %447 = vst.msk [vmem:[#allocation2 + $0x30] sm:$0xff] %vm440, %v414
        %448 = vst.msk [vmem:[#allocation2 + $0x38] sm:$0xff] %vm440, %v415
        %449 = vst.msk [vmem:[#allocation2 + $0x40] sm:$0xff] %vm440, %v416
        %450 = vst.msk [vmem:[#allocation2 + $0x48] sm:$0xff] %vm440, %v417
        %451 = vst.msk [vmem:[#allocation2 + $0x50] sm:$0xff] %vm440, %v418
        %452 = vst.msk [vmem:[#allocation2 + $0x58] sm:$0xff] %vm440, %v419
        %453 = vst.msk [vmem:[#allocation2 + $0x60] sm:$0xff] %vm440, %v420
        %454 = vst.msk [vmem:[#allocation2 + $0x68] sm:$0xff] %vm440, %v421
        %455 = vst.msk [vmem:[#allocation2 + $0x70] sm:$0xff] %vm440, %v422
        %456 = vst.msk [vmem:[#allocation2 + $0x78] sm:$0xff] %vm440, %v423
        %v457 = vld [vmem:[%s304] sm:$0xf]
        %v458 = vld [vmem:[%s304 + $0x4] sm:$0xf]
        %v459 = vld [vmem:[%s304 + $0x8] sm:$0xf]
        %v460 = vld [vmem:[%s304 + $0xc] sm:$0xf]
        %v461 = vld [vmem:[%s304 + $0x10] sm:$0xf]
        %v462 = vld [vmem:[%s304 + $0x14] sm:$0xf]
        %v463 = vld [vmem:[%s304 + $0x18] sm:$0xf]
        %v464 = vld [vmem:[%s304 + $0x1c] sm:$0xf]
        %v465 = vld [vmem:[%s304 + $0x20] sm:$0xf]
        %v466 = vld [vmem:[%s304 + $0x24] sm:$0xf]
        %v467 = vld [vmem:[%s304 + $0x28] sm:$0xf]
        %v468 = vld [vmem:[%s304 + $0x2c] sm:$0xf]
        %v469 = vld [vmem:[%s304 + $0x30] sm:$0xf]
        %v470 = vld [vmem:[%s304 + $0x34] sm:$0xf]
        %v471 = vld [vmem:[%s304 + $0x38] sm:$0xf]
        %v472 = vld [vmem:[%s304 + $0x3c] sm:$0xf]
        %v473 = vld [vmem:[%s304 + $0x40] sm:$0xf]
        %v474 = vld [vmem:[%s304 + $0x44] sm:$0xf]
        %v475 = vld [vmem:[%s304 + $0x48] sm:$0xf]
        %v476 = vld [vmem:[%s304 + $0x4c] sm:$0xf]
        %v477 = vld [vmem:[%s304 + $0x50] sm:$0xf]
        %v478 = vld [vmem:[%s304 + $0x54] sm:$0xf]
        %v479 = vld [vmem:[%s304 + $0x58] sm:$0xf]
        %v480 = vld [vmem:[%s304 + $0x5c] sm:$0xf]
        %v481 = vld [vmem:[%s304 + $0x60] sm:$0xf]
        %v482 = vld [vmem:[%s304 + $0x64] sm:$0xf]
        %v483 = vld [vmem:[%s304 + $0x68] sm:$0xf]
        %v484 = vld [vmem:[%s304 + $0x6c] sm:$0xf]
        %v485 = vld [vmem:[%s304 + $0x70] sm:$0xf]
        %v486 = vld [vmem:[%s304 + $0x74] sm:$0xf]
        %v487 = vld [vmem:[%s304 + $0x78] sm:$0xf]
        %v488 = vld [vmem:[%s304 + $0x7c] sm:$0xf]
        %v521 = vunpack.c.l.b16 %v457
        %v522 = vunpack.c.l.b16 %v458
        %v523 = vunpack.c.l.b16 %v459
        %v524 = vunpack.c.l.b16 %v460
        %v525 = vunpack.c.l.b16 %v461
        %v526 = vunpack.c.l.b16 %v462
        %v527 = vunpack.c.l.b16 %v463
        %v528 = vunpack.c.l.b16 %v464
        %v529 = vunpack.c.l.b16 %v465
        %v530 = vunpack.c.l.b16 %v466
        %v531 = vunpack.c.l.b16 %v467
        %v532 = vunpack.c.l.b16 %v468
        %v533 = vunpack.c.l.b16 %v469
        %v534 = vunpack.c.l.b16 %v470
        %v535 = vunpack.c.l.b16 %v471
        %v536 = vunpack.c.l.b16 %v472
        %v537 = vunpack.c.l.b16 %v473
        %v538 = vunpack.c.l.b16 %v474
        %v539 = vunpack.c.l.b16 %v475
        %v540 = vunpack.c.l.b16 %v476
        %v541 = vunpack.c.l.b16 %v477
        %v542 = vunpack.c.l.b16 %v478
        %v543 = vunpack.c.l.b16 %v479
        %v544 = vunpack.c.l.b16 %v480
        %v545 = vunpack.c.l.b16 %v481
        %v546 = vunpack.c.l.b16 %v482
        %v547 = vunpack.c.l.b16 %v483
        %v548 = vunpack.c.l.b16 %v484
        %v549 = vunpack.c.l.b16 %v485
        %v550 = vunpack.c.l.b16 %v486
        %v551 = vunpack.c.l.b16 %v487
        %v552 = vunpack.c.l.b16 %v488
        %v553 = vpack.c.b16 %v522, %v521
        %v554 = vpack.c.b16 %v524, %v523
        %v555 = vpack.c.b16 %v526, %v525
        %v556 = vpack.c.b16 %v528, %v527
        %v557 = vpack.c.b16 %v530, %v529
        %v558 = vpack.c.b16 %v532, %v531
        %v559 = vpack.c.b16 %v534, %v533
        %v560 = vpack.c.b16 %v536, %v535
        %v561 = vpack.c.b16 %v538, %v537
        %v562 = vpack.c.b16 %v540, %v539
        %v563 = vpack.c.b16 %v542, %v541
        %v564 = vpack.c.b16 %v544, %v543
        %v565 = vpack.c.b16 %v546, %v545
        %v566 = vpack.c.b16 %v548, %v547
        %v567 = vpack.c.b16 %v550, %v549
        %v568 = vpack.c.b16 %v552, %v551
        %585 = vst.msk [vmem:[#allocation2 + $0x80] sm:$0xff] %vm440, %v553
        %586 = vst.msk [vmem:[#allocation2 + $0x88] sm:$0xff] %vm440, %v554
        %587 = vst.msk [vmem:[#allocation2 + $0x90] sm:$0xff] %vm440, %v555
        %588 = vst.msk [vmem:[#allocation2 + $0x98] sm:$0xff] %vm440, %v556
        %589 = vst.msk [vmem:[#allocation2 + $0xa0] sm:$0xff] %vm440, %v557
        %590 = vst.msk [vmem:[#allocation2 + $0xa8] sm:$0xff] %vm440, %v558
        %591 = vst.msk [vmem:[#allocation2 + $0xb0] sm:$0xff] %vm440, %v559
        %592 = vst.msk [vmem:[#allocation2 + $0xb8] sm:$0xff] %vm440, %v560
        %593 = vst.msk [vmem:[#allocation2 + $0xc0] sm:$0xff] %vm440, %v561
        %594 = vst.msk [vmem:[#allocation2 + $0xc8] sm:$0xff] %vm440, %v562
        %595 = vst.msk [vmem:[#allocation2 + $0xd0] sm:$0xff] %vm440, %v563
        %596 = vst.msk [vmem:[#allocation2 + $0xd8] sm:$0xff] %vm440, %v564
        %597 = vst.msk [vmem:[#allocation2 + $0xe0] sm:$0xff] %vm440, %v565
        %598 = vst.msk [vmem:[#allocation2 + $0xe8] sm:$0xff] %vm440, %v566
        %599 = vst.msk [vmem:[#allocation2 + $0xf0] sm:$0xff] %vm440, %v567
        %600 = vst.msk [vmem:[#allocation2 + $0xf8] sm:$0xff] %vm440, %v568
        %v601 = vld [vmem:[#allocation2] sm:$0xff]
        %v602 = vld [vmem:[#allocation2 + $0x8] sm:$0xff]
        %v603 = vld [vmem:[#allocation2 + $0x10] sm:$0xff]
        %v604 = vld [vmem:[#allocation2 + $0x18] sm:$0xff]
        %v605 = vld [vmem:[#allocation2 + $0x20] sm:$0xff]
        %v606 = vld [vmem:[#allocation2 + $0x28] sm:$0xff]
        %v607 = vld [vmem:[#allocation2 + $0x30] sm:$0xff]
        %v608 = vld [vmem:[#allocation2 + $0x38] sm:$0xff]
        %v609 = vld [vmem:[#allocation2 + $0x40] sm:$0xff]
        %v610 = vld [vmem:[#allocation2 + $0x48] sm:$0xff]
        %v611 = vld [vmem:[#allocation2 + $0x50] sm:$0xff]
        %v612 = vld [vmem:[#allocation2 + $0x58] sm:$0xff]
        %v613 = vld [vmem:[#allocation2 + $0x60] sm:$0xff]
        %v614 = vld [vmem:[#allocation2 + $0x68] sm:$0xff]
        %v615 = vld [vmem:[#allocation2 + $0x70] sm:$0xff]
        %v616 = vld [vmem:[#allocation2 + $0x78] sm:$0xff]
        %v617 = vld [vmem:[%s2] sm:$0x3]
        %v619 = vsel %vm440, %v601, 0
        %v622 = vsel %vm440, %v602, 0
        %v625 = vsel %vm440, %v603, 0
        %v628 = vsel %vm440, %v604, 0
        %v631 = vsel %vm440, %v605, 0
        %v634 = vsel %vm440, %v606, 0
        %v637 = vsel %vm440, %v607, 0
        %v640 = vsel %vm440, %v608, 0
        %v643 = vsel %vm440, %v609, 0
        %v646 = vsel %vm440, %v610, 0
        %v649 = vsel %vm440, %v611, 0
        %v652 = vsel %vm440, %v612, 0
        %v655 = vsel %vm440, %v613, 0
        %v658 = vsel %vm440, %v614, 0
        %v661 = vsel %vm440, %v615, 0
        %v664 = vsel %vm440, %v616, 0
        %vm666 = vcmask 1041408
        %v668 = vsel %vm666, %v617, 0
        %670 = vmatprep.subr.bf16.mxu0 0
        %671 = vmatpush1.bf16.msra.mxu0 %v668
        %672 = vmatprep.subr.bf16.mxu0 0
        %673 = vmatpush1.bf16.msra.mxu0 0
        %674 = vmatprep.subr.bf16.mxu0 0
        %675 = vmatpush1.bf16.msra.mxu0 0
        %676 = vmatprep.subr.bf16.mxu0 0
        %677 = vmatpush1.bf16.msra.mxu0 0
        %678 = vmatprep.subr.bf16.mxu0 0
        %679 = vmatpush1.bf16.msra.mxu0 0
        %680 = vmatprep.subr.bf16.mxu0 0
        %681 = vmatpush1.bf16.msra.mxu0 0
        %682 = vmatprep.subr.bf16.mxu0 0
        %683 = vmatpush1.bf16.msra.mxu0 0
        %684 = vmatprep.subr.bf16.mxu0 0
        %685 = vmatpush1.bf16.msra.mxu0 0
        %686 = vmatprep.subr.bf16.mxu0 0
        %687 = vmatpush1.bf16.msra.mxu0 0
        %688 = vmatprep.subr.bf16.mxu0 0
        %689 = vmatpush1.bf16.msra.mxu0 0
        %690 = vmatprep.subr.bf16.mxu0 0
        %691 = vmatpush1.bf16.msra.mxu0 0
        %692 = vmatprep.subr.bf16.mxu0 0
        %693 = vmatpush1.bf16.msra.mxu0 0
        %694 = vmatprep.subr.bf16.mxu0 0
        %695 = vmatpush1.bf16.msra.mxu0 0
        %696 = vmatprep.subr.bf16.mxu0 0
        %697 = vmatpush1.bf16.msra.mxu0 0
        %698 = vmatprep.subr.bf16.mxu0 0
        %699 = vmatpush1.bf16.msra.mxu0 0
        %700 = vmatprep.subr.bf16.mxu0 0
        %701 = vmatpush1.bf16.msra.mxu0 0
        %702 = vmatprep.mubr.bf16.mxu0 0
        %703 = vmatmul.mubr.bf16.gmra.mrb[0].mxu0 %v619
        %v704 = vpop.f32.mrb[0].mxu0
        %v705 = vadd.f32 0.0, %v704
        %v706 = vpop.f32.mrb[0].mxu0
        %v707 = vpop.f32.mrb[0].mxu0
        %v708 = vadd.f32 0.0, %v707
        %v709 = vpop.f32.mrb[0].mxu0
        %710 = vmatprep.mubr.bf16.mxu0 0
        %711 = vmatmul.mubr.bf16.gmra.mrb[0].mxu0 %v622
        %v712 = vpop.f32.mrb[0].mxu0
        %v713 = vadd.f32 0.0, %v712
        %v714 = vpop.f32.mrb[0].mxu0
        %v715 = vpop.f32.mrb[0].mxu0
        %v716 = vadd.f32 0.0, %v715
        %v717 = vpop.f32.mrb[0].mxu0
        %718 = vmatprep.mubr.bf16.mxu0 0
        %719 = vmatmul.mubr.bf16.gmra.mrb[0].mxu0 %v625
        %v720 = vpop.f32.mrb[0].mxu0
        %v721 = vadd.f32 0.0, %v720
        %v722 = vpop.f32.mrb[0].mxu0
        %v723 = vpop.f32.mrb[0].mxu0
        %v724 = vadd.f32 0.0, %v723
        %v725 = vpop.f32.mrb[0].mxu0
        %726 = vmatprep.mubr.bf16.mxu0 0
        %727 = vmatmul.mubr.bf16.gmra.mrb[0].mxu0 %v628
        %v728 = vpop.f32.mrb[0].mxu0
        %v729 = vadd.f32 0.0, %v728
        %v730 = vpop.f32.mrb[0].mxu0
        %v731 = vpop.f32.mrb[0].mxu0
        %v732 = vadd.f32 0.0, %v731
        %v733 = vpop.f32.mrb[0].mxu0
        %734 = vmatprep.mubr.bf16.mxu0 0
        %735 = vmatmul.mubr.bf16.gmra.mrb[0].mxu0 %v631
        %v736 = vpop.f32.mrb[0].mxu0
        %v737 = vadd.f32 0.0, %v736
        %v738 = vpop.f32.mrb[0].mxu0
        %v739 = vpop.f32.mrb[0].mxu0
        %v740 = vadd.f32 0.0, %v739
        %v741 = vpop.f32.mrb[0].mxu0
        %742 = vmatprep.mubr.bf16.mxu0 0
        %743 = vmatmul.mubr.bf16.gmra.mrb[0].mxu0 %v634
        %v744 = vpop.f32.mrb[0].mxu0
        %v745 = vadd.f32 0.0, %v744
        %v746 = vpop.f32.mrb[0].mxu0
        %v747 = vpop.f32.mrb[0].mxu0
        %v748 = vadd.f32 0.0, %v747
        %v749 = vpop.f32.mrb[0].mxu0
        %750 = vmatprep.mubr.bf16.mxu0 0
        %751 = vmatmul.mubr.bf16.gmra.mrb[0].mxu0 %v637
        %v752 = vpop.f32.mrb[0].mxu0
        %v753 = vadd.f32 0.0, %v752
        %v754 = vpop.f32.mrb[0].mxu0
        %v755 = vpop.f32.mrb[0].mxu0
        %v756 = vadd.f32 0.0, %v755
        %v757 = vpop.f32.mrb[0].mxu0
        %758 = vmatprep.mubr.bf16.mxu0 0
        %759 = vmatmul.mubr.bf16.gmra.mrb[0].mxu0 %v640
        %v760 = vpop.f32.mrb[0].mxu0
        %v761 = vadd.f32 0.0, %v760
        %v762 = vpop.f32.mrb[0].mxu0
        %v763 = vpop.f32.mrb[0].mxu0
        %v764 = vadd.f32 0.0, %v763
        %v765 = vpop.f32.mrb[0].mxu0
        %766 = vmatprep.mubr.bf16.mxu0 0
        %767 = vmatmul.mubr.bf16.gmra.mrb[0].mxu0 %v643
        %v768 = vpop.f32.mrb[0].mxu0
        %v769 = vadd.f32 0.0, %v768
        %v770 = vpop.f32.mrb[0].mxu0
        %v771 = vpop.f32.mrb[0].mxu0
        %v772 = vadd.f32 0.0, %v771
        %v773 = vpop.f32.mrb[0].mxu0
        %774 = vmatprep.mubr.bf16.mxu0 0
        %775 = vmatmul.mubr.bf16.gmra.mrb[0].mxu0 %v646
        %v776 = vpop.f32.mrb[0].mxu0
        %v777 = vadd.f32 0.0, %v776
        %v778 = vpop.f32.mrb[0].mxu0
        %v779 = vpop.f32.mrb[0].mxu0
        %v780 = vadd.f32 0.0, %v779
        %v781 = vpop.f32.mrb[0].mxu0
        %782 = vmatprep.mubr.bf16.mxu0 0
        %783 = vmatmul.mubr.bf16.gmra.mrb[0].mxu0 %v649
        %v784 = vpop.f32.mrb[0].mxu0
        %v785 = vadd.f32 0.0, %v784
        %v786 = vpop.f32.mrb[0].mxu0
        %v787 = vpop.f32.mrb[0].mxu0
        %v788 = vadd.f32 0.0, %v787
        %v789 = vpop.f32.mrb[0].mxu0
        %790 = vmatprep.mubr.bf16.mxu0 0
        %791 = vmatmul.mubr.bf16.gmra.mrb[0].mxu0 %v652
        %v792 = vpop.f32.mrb[0].mxu0
        %v793 = vadd.f32 0.0, %v792
        %v794 = vpop.f32.mrb[0].mxu0
        %v795 = vpop.f32.mrb[0].mxu0
        %v796 = vadd.f32 0.0, %v795
        %v797 = vpop.f32.mrb[0].mxu0
        %798 = vmatprep.mubr.bf16.mxu0 0
        %799 = vmatmul.mubr.bf16.gmra.mrb[0].mxu0 %v655
        %v800 = vpop.f32.mrb[0].mxu0
        %v801 = vadd.f32 0.0, %v800
        %v802 = vpop.f32.mrb[0].mxu0
        %v803 = vpop.f32.mrb[0].mxu0
        %v804 = vadd.f32 0.0, %v803
        %v805 = vpop.f32.mrb[0].mxu0
        %806 = vmatprep.mubr.bf16.mxu0 0
        %807 = vmatmul.mubr.bf16.gmra.mrb[0].mxu0 %v658
        %v808 = vpop.f32.mrb[0].mxu0
        %v809 = vadd.f32 0.0, %v808
        %v810 = vpop.f32.mrb[0].mxu0
        %v811 = vpop.f32.mrb[0].mxu0
        %v812 = vadd.f32 0.0, %v811
        %v813 = vpop.f32.mrb[0].mxu0
        %814 = vmatprep.mubr.bf16.mxu0 0
        %815 = vmatmul.mubr.bf16.gmra.mrb[0].mxu0 %v661
        %v816 = vpop.f32.mrb[0].mxu0
        %v817 = vadd.f32 0.0, %v816
        %v818 = vpop.f32.mrb[0].mxu0
        %v819 = vpop.f32.mrb[0].mxu0
        %v820 = vadd.f32 0.0, %v819
        %v821 = vpop.f32.mrb[0].mxu0
        %822 = vmatprep.mubr.bf16.mxu0 0
        %823 = vmatmul.mubr.bf16.gmra.mrb[0].mxu0 %v664
        %v824 = vpop.f32.mrb[0].mxu0
        %v825 = vadd.f32 0.0, %v824
        %v826 = vpop.f32.mrb[0].mxu0
        %v827 = vpop.f32.mrb[0].mxu0
        %v828 = vadd.f32 0.0, %v827
        %v829 = vpop.f32.mrb[0].mxu0
        %830 = vdwg.mxu0
        %831 = vst [vmem:[#allocation3] sm:$0xff] %v705
        %832 = vst [vmem:[#allocation3 + $0x8] sm:$0xff] %v708
        %833 = vst [vmem:[#allocation3 + $0x10] sm:$0xff] %v713
        %834 = vst [vmem:[#allocation3 + $0x18] sm:$0xff] %v716
        %835 = vst [vmem:[#allocation3 + $0x20] sm:$0xff] %v721
        %836 = vst [vmem:[#allocation3 + $0x28] sm:$0xff] %v724
        %837 = vst [vmem:[#allocation3 + $0x30] sm:$0xff] %v729
        %838 = vst [vmem:[#allocation3 + $0x38] sm:$0xff] %v732
        %839 = vst [vmem:[#allocation3 + $0x40] sm:$0xff] %v737
        %840 = vst [vmem:[#allocation3 + $0x48] sm:$0xff] %v740
        %841 = vst [vmem:[#allocation3 + $0x50] sm:$0xff] %v745
        %842 = vst [vmem:[#allocation3 + $0x58] sm:$0xff] %v748
        %843 = vst [vmem:[#allocation3 + $0x60] sm:$0xff] %v753
        %844 = vst [vmem:[#allocation3 + $0x68] sm:$0xff] %v756
        %845 = vst [vmem:[#allocation3 + $0x70] sm:$0xff] %v761
        %846 = vst [vmem:[#allocation3 + $0x78] sm:$0xff] %v764
        %847 = vst [vmem:[#allocation3 + $0x80] sm:$0xff] %v769
        %848 = vst [vmem:[#allocation3 + $0x88] sm:$0xff] %v772
        %849 = vst [vmem:[#allocation3 + $0x90] sm:$0xff] %v777
        %850 = vst [vmem:[#allocation3 + $0x98] sm:$0xff] %v780
        %851 = vst [vmem:[#allocation3 + $0xa0] sm:$0xff] %v785
        %852 = vst [vmem:[#allocation3 + $0xa8] sm:$0xff] %v788
        %853 = vst [vmem:[#allocation3 + $0xb0] sm:$0xff] %v793
        %854 = vst [vmem:[#allocation3 + $0xb8] sm:$0xff] %v796
        %855 = vst [vmem:[#allocation3 + $0xc0] sm:$0xff] %v801
        %856 = vst [vmem:[#allocation3 + $0xc8] sm:$0xff] %v804
        %857 = vst [vmem:[#allocation3 + $0xd0] sm:$0xff] %v809
        %858 = vst [vmem:[#allocation3 + $0xd8] sm:$0xff] %v812
        %859 = vst [vmem:[#allocation3 + $0xe0] sm:$0xff] %v817
        %860 = vst [vmem:[#allocation3 + $0xe8] sm:$0xff] %v820
        %861 = vst [vmem:[#allocation3 + $0xf0] sm:$0xff] %v825
        %862 = vst [vmem:[#allocation3 + $0xf8] sm:$0xff] %v828
        %v863 = vld [vmem:[#allocation3] sm:$0xff]
        %v864 = vld [vmem:[#allocation3 + $0x8] sm:$0xff]
        %v865 = vld [vmem:[#allocation3 + $0x10] sm:$0xff]
        %v866 = vld [vmem:[#allocation3 + $0x18] sm:$0xff]
        %v867 = vld [vmem:[#allocation3 + $0x20] sm:$0xff]
        %v868 = vld [vmem:[#allocation3 + $0x28] sm:$0xff]
        %v869 = vld [vmem:[#allocation3 + $0x30] sm:$0xff]
        %v870 = vld [vmem:[#allocation3 + $0x38] sm:$0xff]
        %v871 = vld [vmem:[#allocation3 + $0x40] sm:$0xff]
        %v872 = vld [vmem:[#allocation3 + $0x48] sm:$0xff]
        %v873 = vld [vmem:[#allocation3 + $0x50] sm:$0xff]
        %v874 = vld [vmem:[#allocation3 + $0x58] sm:$0xff]
        %v875 = vld [vmem:[#allocation3 + $0x60] sm:$0xff]
        %v876 = vld [vmem:[#allocation3 + $0x68] sm:$0xff]
        %v877 = vld [vmem:[#allocation3 + $0x70] sm:$0xff]
        %v878 = vld [vmem:[#allocation3 + $0x78] sm:$0xff]
        %v879 = vld [vmem:[#allocation3 + $0x80] sm:$0xff]
        %v880 = vld [vmem:[#allocation3 + $0x88] sm:$0xff]
        %v881 = vld [vmem:[#allocation3 + $0x90] sm:$0xff]
        %v882 = vld [vmem:[#allocation3 + $0x98] sm:$0xff]
        %v883 = vld [vmem:[#allocation3 + $0xa0] sm:$0xff]
        %v884 = vld [vmem:[#allocation3 + $0xa8] sm:$0xff]
        %v885 = vld [vmem:[#allocation3 + $0xb0] sm:$0xff]
        %v886 = vld [vmem:[#allocation3 + $0xb8] sm:$0xff]
        %v887 = vld [vmem:[#allocation3 + $0xc0] sm:$0xff]
        %v888 = vld [vmem:[#allocation3 + $0xc8] sm:$0xff]
        %v889 = vld [vmem:[#allocation3 + $0xd0] sm:$0xff]
        %v890 = vld [vmem:[#allocation3 + $0xd8] sm:$0xff]
        %v891 = vld [vmem:[#allocation3 + $0xe0] sm:$0xff]
        %v892 = vld [vmem:[#allocation3 + $0xe8] sm:$0xff]
        %v893 = vld [vmem:[#allocation3 + $0xf0] sm:$0xff]
        %v894 = vld [vmem:[#allocation3 + $0xf8] sm:$0xff]
        %v895 = vld [vmem:[#allocation2] sm:$0xff]
        %v896 = vld [vmem:[#allocation2 + $0x8] sm:$0xff]
        %v897 = vld [vmem:[#allocation2 + $0x10] sm:$0xff]
        %v898 = vld [vmem:[#allocation2 + $0x18] sm:$0xff]
        %v899 = vld [vmem:[#allocation2 + $0x20] sm:$0xff]
        %v900 = vld [vmem:[#allocation2 + $0x28] sm:$0xff]
        %v901 = vld [vmem:[#allocation2 + $0x30] sm:$0xff]
        %v902 = vld [vmem:[#allocation2 + $0x38] sm:$0xff]
        %v903 = vld [vmem:[#allocation2 + $0x40] sm:$0xff]
        %v904 = vld [vmem:[#allocation2 + $0x48] sm:$0xff]
        %v905 = vld [vmem:[#allocation2 + $0x50] sm:$0xff]
        %v906 = vld [vmem:[#allocation2 + $0x58] sm:$0xff]
        %v907 = vld [vmem:[#allocation2 + $0x60] sm:$0xff]
        %v908 = vld [vmem:[#allocation2 + $0x68] sm:$0xff]
        %v909 = vld [vmem:[#allocation2 + $0x70] sm:$0xff]
        %v910 = vld [vmem:[#allocation2 + $0x78] sm:$0xff]
        %v911 = vld [vmem:[#allocation2 + $0x80] sm:$0x1]
        %s912 = scalar_lea.vmem %s2, 2
        %v913 = vld [vmem:[%s912] sm:$0x3]
        %vm914 = vsmask.f32 7424
        %v916 = vshrl.u32 %v895, 16
        %v918 = vshll.u32 %v895, 16
        %v920 = vrot.slane %v918, 1
        %v921 = vor.u32 %v916, %v920
        %v923 = vshll.u32 %v896, 16
        %v925 = vrot.slane %v923, 1
        %v926 = vsel %vm914, %v921, %v925
        %v927 = vshrl.u32 %v896, 16
        %v929 = vor.u32 %v927, %v925
        %v931 = vshll.u32 %v897, 16
        %v933 = vrot.slane %v931, 1
        %v934 = vsel %vm914, %v929, %v933
        %v935 = vshrl.u32 %v897, 16
        %v937 = vor.u32 %v935, %v933
        %v939 = vshll.u32 %v898, 16
        %v941 = vrot.slane %v939, 1
        %v942 = vsel %vm914, %v937, %v941
        %v943 = vshrl.u32 %v898, 16
        %v945 = vor.u32 %v943, %v941
        %v947 = vshll.u32 %v899, 16
        %v949 = vrot.slane %v947, 1
        %v950 = vsel %vm914, %v945, %v949
        %v951 = vshrl.u32 %v899, 16
        %v953 = vor.u32 %v951, %v949
        %v955 = vshll.u32 %v900, 16
        %v957 = vrot.slane %v955, 1
        %v958 = vsel %vm914, %v953, %v957
        %v959 = vshrl.u32 %v900, 16
        %v961 = vor.u32 %v959, %v957
        %v963 = vshll.u32 %v901, 16
        %v965 = vrot.slane %v963, 1
        %v966 = vsel %vm914, %v961, %v965
        %v967 = vshrl.u32 %v901, 16
        %v969 = vor.u32 %v967, %v965
        %v971 = vshll.u32 %v902, 16
        %v973 = vrot.slane %v971, 1
        %v974 = vsel %vm914, %v969, %v973
        %v975 = vshrl.u32 %v902, 16
        %v977 = vor.u32 %v975, %v973
        %v979 = vshll.u32 %v903, 16
        %v981 = vrot.slane %v979, 1
        %v982 = vsel %vm914, %v977, %v981
        %v983 = vshrl.u32 %v903, 16
        %v985 = vor.u32 %v983, %v981
        %v987 = vshll.u32 %v904, 16
        %v989 = vrot.slane %v987, 1
        %v990 = vsel %vm914, %v985, %v989
        %v991 = vshrl.u32 %v904, 16
        %v993 = vor.u32 %v991, %v989
        %v995 = vshll.u32 %v905, 16
        %v997 = vrot.slane %v995, 1
        %v998 = vsel %vm914, %v993, %v997
        %v999 = vshrl.u32 %v905, 16
        %v1001 = vor.u32 %v999, %v997
        %v1003 = vshll.u32 %v906, 16
        %v1005 = vrot.slane %v1003, 1
        %v1006 = vsel %vm914, %v1001, %v1005
        %v1007 = vshrl.u32 %v906, 16
        %v1009 = vor.u32 %v1007, %v1005
        %v1011 = vshll.u32 %v907, 16
        %v1013 = vrot.slane %v1011, 1
        %v1014 = vsel %vm914, %v1009, %v1013
        %v1015 = vshrl.u32 %v907, 16
        %v1017 = vor.u32 %v1015, %v1013
        %v1019 = vshll.u32 %v908, 16
        %v1021 = vrot.slane %v1019, 1
        %v1022 = vsel %vm914, %v1017, %v1021
        %v1023 = vshrl.u32 %v908, 16
        %v1025 = vor.u32 %v1023, %v1021
        %v1027 = vshll.u32 %v909, 16
        %v1029 = vrot.slane %v1027, 1
        %v1030 = vsel %vm914, %v1025, %v1029
        %v1031 = vshrl.u32 %v909, 16
        %v1033 = vor.u32 %v1031, %v1029
        %v1035 = vshll.u32 %v910, 16
        %v1037 = vrot.slane %v1035, 1
        %v1038 = vsel %vm914, %v1033, %v1037
        %v1039 = vshrl.u32 %v910, 16
        %v1041 = vor.u32 %v1039, %v1037
        %v1043 = vshll.u32 %v911, 16
        %v1045 = vrot.slane %v1043, 1
        %v1046 = vsel %vm914, %v1041, %v1045
        %v1048 = vsel %vm440, %v926, 0
        %v1051 = vsel %vm440, %v934, 0
        %v1054 = vsel %vm440, %v942, 0
        %v1057 = vsel %vm440, %v950, 0
        %v1060 = vsel %vm440, %v958, 0
        %v1063 = vsel %vm440, %v966, 0
        %v1066 = vsel %vm440, %v974, 0
        %v1069 = vsel %vm440, %v982, 0
        %v1072 = vsel %vm440, %v990, 0
        %v1075 = vsel %vm440, %v998, 0
        %v1078 = vsel %vm440, %v1006, 0
        %v1081 = vsel %vm440, %v1014, 0
        %v1084 = vsel %vm440, %v1022, 0
        %v1087 = vsel %vm440, %v1030, 0
        %v1090 = vsel %vm440, %v1038, 0
        %v1093 = vsel %vm440, %v1046, 0
        %v1096 = vsel %vm666, %v913, 0
        %1098 = vmatprep.subr.bf16.mxu0 0
        %1099 = vmatpush1.bf16.msra.mxu0 %v1096
        %1100 = vmatprep.subr.bf16.mxu0 0
        %1101 = vmatpush1.bf16.msra.mxu0 0
        %1102 = vmatprep.subr.bf16.mxu0 0
        %1103 = vmatpush1.bf16.msra.mxu0 0
        %1104 = vmatprep.subr.bf16.mxu0 0
        %1105 = vmatpush1.bf16.msra.mxu0 0
        %1106 = vmatprep.subr.bf16.mxu0 0
        %1107 = vmatpush1.bf16.msra.mxu0 0
        %1108 = vmatprep.subr.bf16.mxu0 0
        %1109 = vmatpush1.bf16.msra.mxu0 0
        %1110 = vmatprep.subr.bf16.mxu0 0
        %1111 = vmatpush1.bf16.msra.mxu0 0
        %1112 = vmatprep.subr.bf16.mxu0 0
        %1113 = vmatpush1.bf16.msra.mxu0 0
        %1114 = vmatprep.subr.bf16.mxu0 0
        %1115 = vmatpush1.bf16.msra.mxu0 0
        %1116 = vmatprep.subr.bf16.mxu0 0
        %1117 = vmatpush1.bf16.msra.mxu0 0
        %1118 = vmatprep.subr.bf16.mxu0 0
        %1119 = vmatpush1.bf16.msra.mxu0 0
        %1120 = vmatprep.subr.bf16.mxu0 0
        %1121 = vmatpush1.bf16.msra.mxu0 0
        %1122 = vmatprep.subr.bf16.mxu0 0
        %1123 = vmatpush1.bf16.msra.mxu0 0
        %1124 = vmatprep.subr.bf16.mxu0 0
        %1125 = vmatpush1.bf16.msra.mxu0 0
        %1126 = vmatprep.subr.bf16.mxu0 0
        %1127 = vmatpush1.bf16.msra.mxu0 0
        %1128 = vmatprep.subr.bf16.mxu0 0
        %1129 = vmatpush1.bf16.msra.mxu0 0
        %1130 = vmatprep.mubr.bf16.mxu0 0
        %1131 = vmatmul.mubr.bf16.gmra.mrb[0].mxu0 %v1048
        %v1132 = vpop.f32.mrb[0].mxu0
        %v1133 = vadd.f32 0.0, %v1132
        %v1134 = vpop.f32.mrb[0].mxu0
        %v1135 = vpop.f32.mrb[0].mxu0
        %v1136 = vadd.f32 0.0, %v1135
        %v1137 = vpop.f32.mrb[0].mxu0
        %1138 = vmatprep.mubr.bf16.mxu0 0
        %1139 = vmatmul.mubr.bf16.gmra.mrb[0].mxu0 %v1051
        %v1140 = vpop.f32.mrb[0].mxu0
        %v1141 = vadd.f32 0.0, %v1140
        %v1142 = vpop.f32.mrb[0].mxu0
        %v1143 = vpop.f32.mrb[0].mxu0
        %v1144 = vadd.f32 0.0, %v1143
        %v1145 = vpop.f32.mrb[0].mxu0
        %1146 = vmatprep.mubr.bf16.mxu0 0
        %1147 = vmatmul.mubr.bf16.gmra.mrb[0].mxu0 %v1054
        %v1148 = vpop.f32.mrb[0].mxu0
        %v1149 = vadd.f32 0.0, %v1148
        %v1150 = vpop.f32.mrb[0].mxu0
        %v1151 = vpop.f32.mrb[0].mxu0
        %v1152 = vadd.f32 0.0, %v1151
        %v1153 = vpop.f32.mrb[0].mxu0
        %1154 = vmatprep.mubr.bf16.mxu0 0
        %1155 = vmatmul.mubr.bf16.gmra.mrb[0].mxu0 %v1057
        %v1156 = vpop.f32.mrb[0].mxu0
        %v1157 = vadd.f32 0.0, %v1156
        %v1158 = vpop.f32.mrb[0].mxu0
        %v1159 = vpop.f32.mrb[0].mxu0
        %v1160 = vadd.f32 0.0, %v1159
        %v1161 = vpop.f32.mrb[0].mxu0
        %1162 = vmatprep.mubr.bf16.mxu0 0
        %1163 = vmatmul.mubr.bf16.gmra.mrb[0].mxu0 %v1060
        %v1164 = vpop.f32.mrb[0].mxu0
        %v1165 = vadd.f32 0.0, %v1164
        %v1166 = vpop.f32.mrb[0].mxu0
        %v1167 = vpop.f32.mrb[0].mxu0
        %v1168 = vadd.f32 0.0, %v1167
        %v1169 = vpop.f32.mrb[0].mxu0
        %1170 = vmatprep.mubr.bf16.mxu0 0
        %1171 = vmatmul.mubr.bf16.gmra.mrb[0].mxu0 %v1063
        %v1172 = vpop.f32.mrb[0].mxu0
        %v1173 = vadd.f32 0.0, %v1172
        %v1174 = vpop.f32.mrb[0].mxu0
        %v1175 = vpop.f32.mrb[0].mxu0
        %v1176 = vadd.f32 0.0, %v1175
        %v1177 = vpop.f32.mrb[0].mxu0
        %1178 = vmatprep.mubr.bf16.mxu0 0
        %1179 = vmatmul.mubr.bf16.gmra.mrb[0].mxu0 %v1066
        %v1180 = vpop.f32.mrb[0].mxu0
        %v1181 = vadd.f32 0.0, %v1180
        %v1182 = vpop.f32.mrb[0].mxu0
        %v1183 = vpop.f32.mrb[0].mxu0
        %v1184 = vadd.f32 0.0, %v1183
        %v1185 = vpop.f32.mrb[0].mxu0
        %1186 = vmatprep.mubr.bf16.mxu0 0
        %1187 = vmatmul.mubr.bf16.gmra.mrb[0].mxu0 %v1069
        %v1188 = vpop.f32.mrb[0].mxu0
        %v1189 = vadd.f32 0.0, %v1188
        %v1190 = vpop.f32.mrb[0].mxu0
        %v1191 = vpop.f32.mrb[0].mxu0
        %v1192 = vadd.f32 0.0, %v1191
        %v1193 = vpop.f32.mrb[0].mxu0
        %1194 = vmatprep.mubr.bf16.mxu0 0
        %1195 = vmatmul.mubr.bf16.gmra.mrb[0].mxu0 %v1072
        %v1196 = vpop.f32.mrb[0].mxu0
        %v1197 = vadd.f32 0.0, %v1196
        %v1198 = vpop.f32.mrb[0].mxu0
        %v1199 = vpop.f32.mrb[0].mxu0
        %v1200 = vadd.f32 0.0, %v1199
        %v1201 = vpop.f32.mrb[0].mxu0
        %1202 = vmatprep.mubr.bf16.mxu0 0
        %1203 = vmatmul.mubr.bf16.gmra.mrb[0].mxu0 %v1075
        %v1204 = vpop.f32.mrb[0].mxu0
        %v1205 = vadd.f32 0.0, %v1204
        %v1206 = vpop.f32.mrb[0].mxu0
        %v1207 = vpop.f32.mrb[0].mxu0
        %v1208 = vadd.f32 0.0, %v1207
        %v1209 = vpop.f32.mrb[0].mxu0
        %1210 = vmatprep.mubr.bf16.mxu0 0
        %1211 = vmatmul.mubr.bf16.gmra.mrb[0].mxu0 %v1078
        %v1212 = vpop.f32.mrb[0].mxu0
        %v1213 = vadd.f32 0.0, %v1212
        %v1214 = vpop.f32.mrb[0].mxu0
        %v1215 = vpop.f32.mrb[0].mxu0
        %v1216 = vadd.f32 0.0, %v1215
        %v1217 = vpop.f32.mrb[0].mxu0
        %1218 = vmatprep.mubr.bf16.mxu0 0
        %1219 = vmatmul.mubr.bf16.gmra.mrb[0].mxu0 %v1081
        %v1220 = vpop.f32.mrb[0].mxu0
        %v1221 = vadd.f32 0.0, %v1220
        %v1222 = vpop.f32.mrb[0].mxu0
        %v1223 = vpop.f32.mrb[0].mxu0
        %v1224 = vadd.f32 0.0, %v1223
        %v1225 = vpop.f32.mrb[0].mxu0
        %1226 = vmatprep.mubr.bf16.mxu0 0
        %1227 = vmatmul.mubr.bf16.gmra.mrb[0].mxu0 %v1084
        %v1228 = vpop.f32.mrb[0].mxu0
        %v1229 = vadd.f32 0.0, %v1228
        %v1230 = vpop.f32.mrb[0].mxu0
        %v1231 = vpop.f32.mrb[0].mxu0
        %v1232 = vadd.f32 0.0, %v1231
        %v1233 = vpop.f32.mrb[0].mxu0
        %1234 = vmatprep.mubr.bf16.mxu0 0
        %1235 = vmatmul.mubr.bf16.gmra.mrb[0].mxu0 %v1087
        %v1236 = vpop.f32.mrb[0].mxu0
        %v1237 = vadd.f32 0.0, %v1236
        %v1238 = vpop.f32.mrb[0].mxu0
        %v1239 = vpop.f32.mrb[0].mxu0
        %v1240 = vadd.f32 0.0, %v1239
        %v1241 = vpop.f32.mrb[0].mxu0
        %1242 = vmatprep.mubr.bf16.mxu0 0
        %1243 = vmatmul.mubr.bf16.gmra.mrb[0].mxu0 %v1090
        %v1244 = vpop.f32.mrb[0].mxu0
        %v1245 = vadd.f32 0.0, %v1244
        %v1246 = vpop.f32.mrb[0].mxu0
        %v1247 = vpop.f32.mrb[0].mxu0
        %v1248 = vadd.f32 0.0, %v1247
        %v1249 = vpop.f32.mrb[0].mxu0
        %1250 = vmatprep.mubr.bf16.mxu0 0
        %1251 = vmatmul.mubr.bf16.gmra.mrb[0].mxu0 %v1093
        %v1252 = vpop.f32.mrb[0].mxu0
        %v1253 = vadd.f32 0.0, %v1252
        %v1254 = vpop.f32.mrb[0].mxu0
        %v1255 = vpop.f32.mrb[0].mxu0
        %v1256 = vadd.f32 0.0, %v1255
        %v1257 = vpop.f32.mrb[0].mxu0
        %1258 = vdwg.mxu0
        %v1259 = vadd.f32 %v863, %v1133
        %v1260 = vadd.f32 %v864, %v1136
        %v1261 = vadd.f32 %v865, %v1141
        %v1262 = vadd.f32 %v866, %v1144
        %v1263 = vadd.f32 %v867, %v1149
        %v1264 = vadd.f32 %v868, %v1152
        %v1265 = vadd.f32 %v869, %v1157
        %v1266 = vadd.f32 %v870, %v1160
        %v1267 = vadd.f32 %v871, %v1165
        %v1268 = vadd.f32 %v872, %v1168
        %v1269 = vadd.f32 %v873, %v1173
        %v1270 = vadd.f32 %v874, %v1176
        %v1271 = vadd.f32 %v875, %v1181
        %v1272 = vadd.f32 %v876, %v1184
        %v1273 = vadd.f32 %v877, %v1189
        %v1274 = vadd.f32 %v878, %v1192
        %v1275 = vadd.f32 %v879, %v1197
        %v1276 = vadd.f32 %v880, %v1200
        %v1277 = vadd.f32 %v881, %v1205
        %v1278 = vadd.f32 %v882, %v1208
        %v1279 = vadd.f32 %v883, %v1213
        %v1280 = vadd.f32 %v884, %v1216
        %v1281 = vadd.f32 %v885, %v1221
        %v1282 = vadd.f32 %v886, %v1224
        %v1283 = vadd.f32 %v887, %v1229
        %v1284 = vadd.f32 %v888, %v1232
        %v1285 = vadd.f32 %v889, %v1237
        %v1286 = vadd.f32 %v890, %v1240
        %v1287 = vadd.f32 %v891, %v1245
        %v1288 = vadd.f32 %v892, %v1248
        %v1289 = vadd.f32 %v893, %v1253
        %v1290 = vadd.f32 %v894, %v1256
        %1291 = vst [vmem:[#allocation3] sm:$0xff] %v1259
        %1292 = vst [vmem:[#allocation3 + $0x8] sm:$0xff] %v1260
        %1293 = vst [vmem:[#allocation3 + $0x10] sm:$0xff] %v1261
        %1294 = vst [vmem:[#allocation3 + $0x18] sm:$0xff] %v1262
        %1295 = vst [vmem:[#allocation3 + $0x20] sm:$0xff] %v1263
        %1296 = vst [vmem:[#allocation3 + $0x28] sm:$0xff] %v1264
        %1297 = vst [vmem:[#allocation3 + $0x30] sm:$0xff] %v1265
        %1298 = vst [vmem:[#allocation3 + $0x38] sm:$0xff] %v1266
        %1299 = vst [vmem:[#allocation3 + $0x40] sm:$0xff] %v1267
        %1300 = vst [vmem:[#allocation3 + $0x48] sm:$0xff] %v1268
        %1301 = vst [vmem:[#allocation3 + $0x50] sm:$0xff] %v1269
        %1302 = vst [vmem:[#allocation3 + $0x58] sm:$0xff] %v1270
        %1303 = vst [vmem:[#allocation3 + $0x60] sm:$0xff] %v1271
        %1304 = vst [vmem:[#allocation3 + $0x68] sm:$0xff] %v1272
        %1305 = vst [vmem:[#allocation3 + $0x70] sm:$0xff] %v1273
        %1306 = vst [vmem:[#allocation3 + $0x78] sm:$0xff] %v1274
        %1307 = vst [vmem:[#allocation3 + $0x80] sm:$0xff] %v1275
        %1308 = vst [vmem:[#allocation3 + $0x88] sm:$0xff] %v1276
        %1309 = vst [vmem:[#allocation3 + $0x90] sm:$0xff] %v1277
        %1310 = vst [vmem:[#allocation3 + $0x98] sm:$0xff] %v1278
        %1311 = vst [vmem:[#allocation3 + $0xa0] sm:$0xff] %v1279
        %1312 = vst [vmem:[#allocation3 + $0xa8] sm:$0xff] %v1280
        %1313 = vst [vmem:[#allocation3 + $0xb0] sm:$0xff] %v1281
        %1314 = vst [vmem:[#allocation3 + $0xb8] sm:$0xff] %v1282
        %1315 = vst [vmem:[#allocation3 + $0xc0] sm:$0xff] %v1283
        %1316 = vst [vmem:[#allocation3 + $0xc8] sm:$0xff] %v1284
        %1317 = vst [vmem:[#allocation3 + $0xd0] sm:$0xff] %v1285
        %1318 = vst [vmem:[#allocation3 + $0xd8] sm:$0xff] %v1286
        %1319 = vst [vmem:[#allocation3 + $0xe0] sm:$0xff] %v1287
        %1320 = vst [vmem:[#allocation3 + $0xe8] sm:$0xff] %v1288
        %1321 = vst [vmem:[#allocation3 + $0xf0] sm:$0xff] %v1289
        %1322 = vst [vmem:[#allocation3 + $0xf8] sm:$0xff] %v1290
        %v1323 = vld [vmem:[#allocation3] sm:$0xff]
        %v1324 = vld [vmem:[#allocation3 + $0x8] sm:$0xff]
        %v1325 = vld [vmem:[#allocation3 + $0x10] sm:$0xff]
        %v1326 = vld [vmem:[#allocation3 + $0x18] sm:$0xff]
        %v1327 = vld [vmem:[#allocation3 + $0x20] sm:$0xff]
        %v1328 = vld [vmem:[#allocation3 + $0x28] sm:$0xff]
        %v1329 = vld [vmem:[#allocation3 + $0x30] sm:$0xff]
        %v1330 = vld [vmem:[#allocation3 + $0x38] sm:$0xff]
        %v1331 = vld [vmem:[#allocation3 + $0x40] sm:$0xff]
        %v1332 = vld [vmem:[#allocation3 + $0x48] sm:$0xff]
        %v1333 = vld [vmem:[#allocation3 + $0x50] sm:$0xff]
        %v1334 = vld [vmem:[#allocation3 + $0x58] sm:$0xff]
        %v1335 = vld [vmem:[#allocation3 + $0x60] sm:$0xff]
        %v1336 = vld [vmem:[#allocation3 + $0x68] sm:$0xff]
        %v1337 = vld [vmem:[#allocation3 + $0x70] sm:$0xff]
        %v1338 = vld [vmem:[#allocation3 + $0x78] sm:$0xff]
        %v1339 = vld [vmem:[#allocation3 + $0x80] sm:$0xff]
        %v1340 = vld [vmem:[#allocation3 + $0x88] sm:$0xff]
        %v1341 = vld [vmem:[#allocation3 + $0x90] sm:$0xff]
        %v1342 = vld [vmem:[#allocation3 + $0x98] sm:$0xff]
        %v1343 = vld [vmem:[#allocation3 + $0xa0] sm:$0xff]
        %v1344 = vld [vmem:[#allocation3 + $0xa8] sm:$0xff]
        %v1345 = vld [vmem:[#allocation3 + $0xb0] sm:$0xff]
        %v1346 = vld [vmem:[#allocation3 + $0xb8] sm:$0xff]
        %v1347 = vld [vmem:[#allocation3 + $0xc0] sm:$0xff]
        %v1348 = vld [vmem:[#allocation3 + $0xc8] sm:$0xff]
        %v1349 = vld [vmem:[#allocation3 + $0xd0] sm:$0xff]
        %v1350 = vld [vmem:[#allocation3 + $0xd8] sm:$0xff]
        %v1351 = vld [vmem:[#allocation3 + $0xe0] sm:$0xff]
        %v1352 = vld [vmem:[#allocation3 + $0xe8] sm:$0xff]
        %v1353 = vld [vmem:[#allocation3 + $0xf0] sm:$0xff]
        %v1354 = vld [vmem:[#allocation3 + $0xf8] sm:$0xff]
        %v1355 = vld [vmem:[#allocation2] sm:$0xe0]
        %v1356 = vld [vmem:[#allocation2 + $0x8] sm:$0xff]
        %v1357 = vld [vmem:[#allocation2 + $0x10] sm:$0xff]
        %v1358 = vld [vmem:[#allocation2 + $0x18] sm:$0xff]
        %v1359 = vld [vmem:[#allocation2 + $0x20] sm:$0xff]
        %v1360 = vld [vmem:[#allocation2 + $0x28] sm:$0xff]
        %v1361 = vld [vmem:[#allocation2 + $0x30] sm:$0xff]
        %v1362 = vld [vmem:[#allocation2 + $0x38] sm:$0xff]
        %v1363 = vld [vmem:[#allocation2 + $0x40] sm:$0xff]
        %v1364 = vld [vmem:[#allocation2 + $0x48] sm:$0xff]
        %v1365 = vld [vmem:[#allocation2 + $0x50] sm:$0xff]
        %v1366 = vld [vmem:[#allocation2 + $0x58] sm:$0xff]
        %v1367 = vld [vmem:[#allocation2 + $0x60] sm:$0xff]
        %v1368 = vld [vmem:[#allocation2 + $0x68] sm:$0xff]
        %v1369 = vld [vmem:[#allocation2 + $0x70] sm:$0xff]
        %v1370 = vld [vmem:[#allocation2 + $0x78] sm:$0xff]
        %v1371 = vld [vmem:[#allocation2 + $0x80] sm:$0x1f]
        %s1372 = scalar_lea.vmem %s2, 4
        %v1373 = vld [vmem:[%s1372] sm:$0x3]
        %vm1391 = vcmask 1042432
        %v1392 = vrot.slane %v1355, 5
        %v1393 = vrot.slane %v1356, 5
        %v1394 = vsel %vm1391, %v1392, %v1393
        %v1395 = vrot.slane %v1357, 5
        %v1396 = vsel %vm1391, %v1393, %v1395
        %v1397 = vrot.slane %v1358, 5
        %v1398 = vsel %vm1391, %v1395, %v1397
        %v1399 = vrot.slane %v1359, 5
        %v1400 = vsel %vm1391, %v1397, %v1399
        %v1401 = vrot.slane %v1360, 5
        %v1402 = vsel %vm1391, %v1399, %v1401
        %v1403 = vrot.slane %v1361, 5
        %v1404 = vsel %vm1391, %v1401, %v1403
        %v1405 = vrot.slane %v1362, 5
        %v1406 = vsel %vm1391, %v1403, %v1405
        %v1407 = vrot.slane %v1363, 5
        %v1408 = vsel %vm1391, %v1405, %v1407
        %v1409 = vrot.slane %v1364, 5
        %v1410 = vsel %vm1391, %v1407, %v1409
        %v1411 = vrot.slane %v1365, 5
        %v1412 = vsel %vm1391, %v1409, %v1411
        %v1413 = vrot.slane %v1366, 5
        %v1414 = vsel %vm1391, %v1411, %v1413
        %v1415 = vrot.slane %v1367, 5
        %v1416 = vsel %vm1391, %v1413, %v1415
        %v1417 = vrot.slane %v1368, 5
        %v1418 = vsel %vm1391, %v1415, %v1417
        %v1419 = vrot.slane %v1369, 5
        %v1420 = vsel %vm1391, %v1417, %v1419
        %v1421 = vrot.slane %v1370, 5
        %v1422 = vsel %vm1391, %v1419, %v1421
        %v1423 = vrot.slane %v1371, 5
        %v1424 = vsel %vm1391, %v1421, %v1423
        %v1426 = vsel %vm440, %v1394, 0
        %v1429 = vsel %vm440, %v1396, 0
        %v1432 = vsel %vm440, %v1398, 0
        %v1435 = vsel %vm440, %v1400, 0
        %v1438 = vsel %vm440, %v1402, 0
        %v1441 = vsel %vm440, %v1404, 0
        %v1444 = vsel %vm440, %v1406, 0
        %v1447 = vsel %vm440, %v1408, 0
        %v1450 = vsel %vm440, %v1410, 0
        %v1453 = vsel %vm440, %v1412, 0
        %v1456 = vsel %vm440, %v1414, 0
        %v1459 = vsel %vm440, %v1416, 0
        %v1462 = vsel %vm440, %v1418, 0
        %v1465 = vsel %vm440, %v1420, 0
        %v1468 = vsel %vm440, %v1422, 0
        %v1471 = vsel %vm440, %v1424, 0
        %v1474 = vsel %vm666, %v1373, 0
        %1476 = vmatprep.subr.bf16.mxu0 0
        %1477 = vmatpush1.bf16.msra.mxu0 %v1474
        %1478 = vmatprep.subr.bf16.mxu0 0
        %1479 = vmatpush1.bf16.msra.mxu0 0
        %1480 = vmatprep.subr.bf16.mxu0 0
        %1481 = vmatpush1.bf16.msra.mxu0 0
        %1482 = vmatprep.subr.bf16.mxu0 0
        %1483 = vmatpush1.bf16.msra.mxu0 0
        %1484 = vmatprep.subr.bf16.mxu0 0
        %1485 = vmatpush1.bf16.msra.mxu0 0
        %1486 = vmatprep.subr.bf16.mxu0 0
        %1487 = vmatpush1.bf16.msra.mxu0 0
        %1488 = vmatprep.subr.bf16.mxu0 0
        %1489 = vmatpush1.bf16.msra.mxu0 0
        %1490 = vmatprep.subr.bf16.mxu0 0
        %1491 = vmatpush1.bf16.msra.mxu0 0
        %1492 = vmatprep.subr.bf16.mxu0 0
        %1493 = vmatpush1.bf16.msra.mxu0 0
        %1494 = vmatprep.subr.bf16.mxu0 0
        %1495 = vmatpush1.bf16.msra.mxu0 0
        %1496 = vmatprep.subr.bf16.mxu0 0
        %1497 = vmatpush1.bf16.msra.mxu0 0
        %1498 = vmatprep.subr.bf16.mxu0 0
        %1499 = vmatpush1.bf16.msra.mxu0 0
        %1500 = vmatprep.subr.bf16.mxu0 0
        %1501 = vmatpush1.bf16.msra.mxu0 0
        %1502 = vmatprep.subr.bf16.mxu0 0
        %1503 = vmatpush1.bf16.msra.mxu0 0
        %1504 = vmatprep.subr.bf16.mxu0 0
        %1505 = vmatpush1.bf16.msra.mxu0 0
        %1506 = vmatprep.subr.bf16.mxu0 0
        %1507 = vmatpush1.bf16.msra.mxu0 0
        %1508 = vmatprep.mubr.bf16.mxu0 0
        %1509 = vmatmul.mubr.bf16.gmra.mrb[0].mxu0 %v1426
        %v1510 = vpop.f32.mrb[0].mxu0
        %v1511 = vadd.f32 0.0, %v1510
        %v1512 = vpop.f32.mrb[0].mxu0
        %v1513 = vpop.f32.mrb[0].mxu0
        %v1514 = vadd.f32 0.0, %v1513
        %v1515 = vpop.f32.mrb[0].mxu0
        %1516 = vmatprep.mubr.bf16.mxu0 0
        %1517 = vmatmul.mubr.bf16.gmra.mrb[0].mxu0 %v1429
        %v1518 = vpop.f32.mrb[0].mxu0
        %v1519 = vadd.f32 0.0, %v1518
        %v1520 = vpop.f32.mrb[0].mxu0
        %v1521 = vpop.f32.mrb[0].mxu0
        %v1522 = vadd.f32 0.0, %v1521
        %v1523 = vpop.f32.mrb[0].mxu0
        %1524 = vmatprep.mubr.bf16.mxu0 0
        %1525 = vmatmul.mubr.bf16.gmra.mrb[0].mxu0 %v1432
        %v1526 = vpop.f32.mrb[0].mxu0
        %v1527 = vadd.f32 0.0, %v1526
        %v1528 = vpop.f32.mrb[0].mxu0
        %v1529 = vpop.f32.mrb[0].mxu0
        %v1530 = vadd.f32 0.0, %v1529
        %v1531 = vpop.f32.mrb[0].mxu0
        %1532 = vmatprep.mubr.bf16.mxu0 0
        %1533 = vmatmul.mubr.bf16.gmra.mrb[0].mxu0 %v1435
        %v1534 = vpop.f32.mrb[0].mxu0
        %v1535 = vadd.f32 0.0, %v1534
        %v1536 = vpop.f32.mrb[0].mxu0
        %v1537 = vpop.f32.mrb[0].mxu0
        %v1538 = vadd.f32 0.0, %v1537
        %v1539 = vpop.f32.mrb[0].mxu0
        %1540 = vmatprep.mubr.bf16.mxu0 0
        %1541 = vmatmul.mubr.bf16.gmra.mrb[0].mxu0 %v1438
        %v1542 = vpop.f32.mrb[0].mxu0
        %v1543 = vadd.f32 0.0, %v1542
        %v1544 = vpop.f32.mrb[0].mxu0
        %v1545 = vpop.f32.mrb[0].mxu0
        %v1546 = vadd.f32 0.0, %v1545
        %v1547 = vpop.f32.mrb[0].mxu0
        %1548 = vmatprep.mubr.bf16.mxu0 0
        %1549 = vmatmul.mubr.bf16.gmra.mrb[0].mxu0 %v1441
        %v1550 = vpop.f32.mrb[0].mxu0
        %v1551 = vadd.f32 0.0, %v1550
        %v1552 = vpop.f32.mrb[0].mxu0
        %v1553 = vpop.f32.mrb[0].mxu0
        %v1554 = vadd.f32 0.0, %v1553
        %v1555 = vpop.f32.mrb[0].mxu0
        %1556 = vmatprep.mubr.bf16.mxu0 0
        %1557 = vmatmul.mubr.bf16.gmra.mrb[0].mxu0 %v1444
        %v1558 = vpop.f32.mrb[0].mxu0
        %v1559 = vadd.f32 0.0, %v1558
        %v1560 = vpop.f32.mrb[0].mxu0
        %v1561 = vpop.f32.mrb[0].mxu0
        %v1562 = vadd.f32 0.0, %v1561
        %v1563 = vpop.f32.mrb[0].mxu0
        %1564 = vmatprep.mubr.bf16.mxu0 0
        %1565 = vmatmul.mubr.bf16.gmra.mrb[0].mxu0 %v1447
        %v1566 = vpop.f32.mrb[0].mxu0
        %v1567 = vadd.f32 0.0, %v1566
        %v1568 = vpop.f32.mrb[0].mxu0
        %v1569 = vpop.f32.mrb[0].mxu0
        %v1570 = vadd.f32 0.0, %v1569
        %v1571 = vpop.f32.mrb[0].mxu0
        %1572 = vmatprep.mubr.bf16.mxu0 0
        %1573 = vmatmul.mubr.bf16.gmra.mrb[0].mxu0 %v1450
        %v1574 = vpop.f32.mrb[0].mxu0
        %v1575 = vadd.f32 0.0, %v1574
        %v1576 = vpop.f32.mrb[0].mxu0
        %v1577 = vpop.f32.mrb[0].mxu0
        %v1578 = vadd.f32 0.0, %v1577
        %v1579 = vpop.f32.mrb[0].mxu0
        %1580 = vmatprep.mubr.bf16.mxu0 0
        %1581 = vmatmul.mubr.bf16.gmra.mrb[0].mxu0 %v1453
        %v1582 = vpop.f32.mrb[0].mxu0
        %v1583 = vadd.f32 0.0, %v1582
        %v1584 = vpop.f32.mrb[0].mxu0
        %v1585 = vpop.f32.mrb[0].mxu0
        %v1586 = vadd.f32 0.0, %v1585
        %v1587 = vpop.f32.mrb[0].mxu0
        %1588 = vmatprep.mubr.bf16.mxu0 0
        %1589 = vmatmul.mubr.bf16.gmra.mrb[0].mxu0 %v1456
        %v1590 = vpop.f32.mrb[0].mxu0
        %v1591 = vadd.f32 0.0, %v1590
        %v1592 = vpop.f32.mrb[0].mxu0
        %v1593 = vpop.f32.mrb[0].mxu0
        %v1594 = vadd.f32 0.0, %v1593
        %v1595 = vpop.f32.mrb[0].mxu0
        %1596 = vmatprep.mubr.bf16.mxu0 0
        %1597 = vmatmul.mubr.bf16.gmra.mrb[0].mxu0 %v1459
        %v1598 = vpop.f32.mrb[0].mxu0
        %v1599 = vadd.f32 0.0, %v1598
        %v1600 = vpop.f32.mrb[0].mxu0
        %v1601 = vpop.f32.mrb[0].mxu0
        %v1602 = vadd.f32 0.0, %v1601
        %v1603 = vpop.f32.mrb[0].mxu0
        %1604 = vmatprep.mubr.bf16.mxu0 0
        %1605 = vmatmul.mubr.bf16.gmra.mrb[0].mxu0 %v1462
        %v1606 = vpop.f32.mrb[0].mxu0
        %v1607 = vadd.f32 0.0, %v1606
        %v1608 = vpop.f32.mrb[0].mxu0
        %v1609 = vpop.f32.mrb[0].mxu0
        %v1610 = vadd.f32 0.0, %v1609
        %v1611 = vpop.f32.mrb[0].mxu0
        %1612 = vmatprep.mubr.bf16.mxu0 0
        %1613 = vmatmul.mubr.bf16.gmra.mrb[0].mxu0 %v1465
        %v1614 = vpop.f32.mrb[0].mxu0
        %v1615 = vadd.f32 0.0, %v1614
        %v1616 = vpop.f32.mrb[0].mxu0
        %v1617 = vpop.f32.mrb[0].mxu0
        %v1618 = vadd.f32 0.0, %v1617
        %v1619 = vpop.f32.mrb[0].mxu0
        %1620 = vmatprep.mubr.bf16.mxu0 0
        %1621 = vmatmul.mubr.bf16.gmra.mrb[0].mxu0 %v1468
        %v1622 = vpop.f32.mrb[0].mxu0
        %v1623 = vadd.f32 0.0, %v1622
        %v1624 = vpop.f32.mrb[0].mxu0
        %v1625 = vpop.f32.mrb[0].mxu0
        %v1626 = vadd.f32 0.0, %v1625
        %v1627 = vpop.f32.mrb[0].mxu0
        %1628 = vmatprep.mubr.bf16.mxu0 0
        %1629 = vmatmul.mubr.bf16.gmra.mrb[0].mxu0 %v1471
        %v1630 = vpop.f32.mrb[0].mxu0
        %v1631 = vadd.f32 0.0, %v1630
        %v1632 = vpop.f32.mrb[0].mxu0
        %v1633 = vpop.f32.mrb[0].mxu0
        %v1634 = vadd.f32 0.0, %v1633
        %v1635 = vpop.f32.mrb[0].mxu0
        %1636 = vdwg.mxu0
        %v1637 = vadd.f32 %v1323, %v1511
        %v1638 = vadd.f32 %v1324, %v1514
        %v1639 = vadd.f32 %v1325, %v1519
        %v1640 = vadd.f32 %v1326, %v1522
        %v1641 = vadd.f32 %v1327, %v1527
        %v1642 = vadd.f32 %v1328, %v1530
        %v1643 = vadd.f32 %v1329, %v1535
        %v1644 = vadd.f32 %v1330, %v1538
        %v1645 = vadd.f32 %v1331, %v1543
        %v1646 = vadd.f32 %v1332, %v1546
        %v1647 = vadd.f32 %v1333, %v1551
        %v1648 = vadd.f32 %v1334, %v1554
        %v1649 = vadd.f32 %v1335, %v1559
        %v1650 = vadd.f32 %v1336, %v1562
        %v1651 = vadd.f32 %v1337, %v1567
        %v1652 = vadd.f32 %v1338, %v1570
        %v1653 = vadd.f32 %v1339, %v1575
        %v1654 = vadd.f32 %v1340, %v1578
        %v1655 = vadd.f32 %v1341, %v1583
        %v1656 = vadd.f32 %v1342, %v1586
        %v1657 = vadd.f32 %v1343, %v1591
        %v1658 = vadd.f32 %v1344, %v1594
        %v1659 = vadd.f32 %v1345, %v1599
        %v1660 = vadd.f32 %v1346, %v1602
        %v1661 = vadd.f32 %v1347, %v1607
        %v1662 = vadd.f32 %v1348, %v1610
        %v1663 = vadd.f32 %v1349, %v1615
        %v1664 = vadd.f32 %v1350, %v1618
        %v1665 = vadd.f32 %v1351, %v1623
        %v1666 = vadd.f32 %v1352, %v1626
        %v1667 = vadd.f32 %v1353, %v1631
        %v1668 = vadd.f32 %v1354, %v1634
        %1669 = vst [vmem:[#allocation3] sm:$0xff] %v1637
        %1670 = vst [vmem:[#allocation3 + $0x8] sm:$0xff] %v1638
        %1671 = vst [vmem:[#allocation3 + $0x10] sm:$0xff] %v1639
        %1672 = vst [vmem:[#allocation3 + $0x18] sm:$0xff] %v1640
        %1673 = vst [vmem:[#allocation3 + $0x20] sm:$0xff] %v1641
        %1674 = vst [vmem:[#allocation3 + $0x28] sm:$0xff] %v1642
        %1675 = vst [vmem:[#allocation3 + $0x30] sm:$0xff] %v1643
        %1676 = vst [vmem:[#allocation3 + $0x38] sm:$0xff] %v1644
        %1677 = vst [vmem:[#allocation3 + $0x40] sm:$0xff] %v1645
        %1678 = vst [vmem:[#allocation3 + $0x48] sm:$0xff] %v1646
        %1679 = vst [vmem:[#allocation3 + $0x50] sm:$0xff] %v1647
        %1680 = vst [vmem:[#allocation3 + $0x58] sm:$0xff] %v1648
        %1681 = vst [vmem:[#allocation3 + $0x60] sm:$0xff] %v1649
        %1682 = vst [vmem:[#allocation3 + $0x68] sm:$0xff] %v1650
        %1683 = vst [vmem:[#allocation3 + $0x70] sm:$0xff] %v1651
        %1684 = vst [vmem:[#allocation3 + $0x78] sm:$0xff] %v1652
        %1685 = vst [vmem:[#allocation3 + $0x80] sm:$0xff] %v1653
        %1686 = vst [vmem:[#allocation3 + $0x88] sm:$0xff] %v1654
        %1687 = vst [vmem:[#allocation3 + $0x90] sm:$0xff] %v1655
        %1688 = vst [vmem:[#allocation3 + $0x98] sm:$0xff] %v1656
        %1689 = vst [vmem:[#allocation3 + $0xa0] sm:$0xff] %v1657
        %1690 = vst [vmem:[#allocation3 + $0xa8] sm:$0xff] %v1658
        %1691 = vst [vmem:[#allocation3 + $0xb0] sm:$0xff] %v1659
        %1692 = vst [vmem:[#allocation3 + $0xb8] sm:$0xff] %v1660
        %1693 = vst [vmem:[#allocation3 + $0xc0] sm:$0xff] %v1661
        %1694 = vst [vmem:[#allocation3 + $0xc8] sm:$0xff] %v1662
        %1695 = vst [vmem:[#allocation3 + $0xd0] sm:$0xff] %v1663
        %1696 = vst [vmem:[#allocation3 + $0xd8] sm:$0xff] %v1664
        %1697 = vst [vmem:[#allocation3 + $0xe0] sm:$0xff] %v1665
        %1698 = vst [vmem:[#allocation3 + $0xe8] sm:$0xff] %v1666
        %1699 = vst [vmem:[#allocation3 + $0xf0] sm:$0xff] %v1667
        %1700 = vst [vmem:[#allocation3 + $0xf8] sm:$0xff] %v1668
        %v1701 = vld [vmem:[#allocation3] sm:$0xff]
        %v1702 = vld [vmem:[#allocation3 + $0x8] sm:$0xff]
        %v1703 = vld [vmem:[#allocation3 + $0x10] sm:$0xff]
        %v1704 = vld [vmem:[#allocation3 + $0x18] sm:$0xff]
        %v1705 = vld [vmem:[#allocation3 + $0x20] sm:$0xff]
        %v1706 = vld [vmem:[#allocation3 + $0x28] sm:$0xff]
        %v1707 = vld [vmem:[#allocation3 + $0x30] sm:$0xff]
        %v1708 = vld [vmem:[#allocation3 + $0x38] sm:$0xff]
        %v1709 = vld [vmem:[#allocation3 + $0x40] sm:$0xff]
        %v1710 = vld [vmem:[#allocation3 + $0x48] sm:$0xff]
        %v1711 = vld [vmem:[#allocation3 + $0x50] sm:$0xff]
        %v1712 = vld [vmem:[#allocation3 + $0x58] sm:$0xff]
        %v1713 = vld [vmem:[#allocation3 + $0x60] sm:$0xff]
        %v1714 = vld [vmem:[#allocation3 + $0x68] sm:$0xff]
        %v1715 = vld [vmem:[#allocation3 + $0x70] sm:$0xff]
        %v1716 = vld [vmem:[#allocation3 + $0x78] sm:$0xff]
        %v1717 = vld [vmem:[#allocation3 + $0x80] sm:$0xff]
        %v1718 = vld [vmem:[#allocation3 + $0x88] sm:$0xff]
        %v1719 = vld [vmem:[#allocation3 + $0x90] sm:$0xff]
        %v1720 = vld [vmem:[#allocation3 + $0x98] sm:$0xff]
        %v1721 = vld [vmem:[#allocation3 + $0xa0] sm:$0xff]
        %v1722 = vld [vmem:[#allocation3 + $0xa8] sm:$0xff]
        %v1723 = vld [vmem:[#allocation3 + $0xb0] sm:$0xff]
        %v1724 = vld [vmem:[#allocation3 + $0xb8] sm:$0xff]
        %v1725 = vld [vmem:[#allocation3 + $0xc0] sm:$0xff]
        %v1726 = vld [vmem:[#allocation3 + $0xc8] sm:$0xff]
        %v1727 = vld [vmem:[#allocation3 + $0xd0] sm:$0xff]
        %v1728 = vld [vmem:[#allocation3 + $0xd8] sm:$0xff]
        %v1729 = vld [vmem:[#allocation3 + $0xe0] sm:$0xff]
        %v1730 = vld [vmem:[#allocation3 + $0xe8] sm:$0xff]
        %v1731 = vld [vmem:[#allocation3 + $0xf0] sm:$0xff]
        %v1732 = vld [vmem:[#allocation3 + $0xf8] sm:$0xff]
        %v1733 = vld [vmem:[#allocation2] sm:$0xe0]
        %v1734 = vld [vmem:[#allocation2 + $0x8] sm:$0xff]
        %v1735 = vld [vmem:[#allocation2 + $0x10] sm:$0xff]
        %v1736 = vld [vmem:[#allocation2 + $0x18] sm:$0xff]
        %v1737 = vld [vmem:[#allocation2 + $0x20] sm:$0xff]
        %v1738 = vld [vmem:[#allocation2 + $0x28] sm:$0xff]
        %v1739 = vld [vmem:[#allocation2 + $0x30] sm:$0xff]
        %v1740 = vld [vmem:[#allocation2 + $0x38] sm:$0xff]
        %v1741 = vld [vmem:[#allocation2 + $0x40] sm:$0xff]
        %v1742 = vld [vmem:[#allocation2 + $0x48] sm:$0xff]
        %v1743 = vld [vmem:[#allocation2 + $0x50] sm:$0xff]
        %v1744 = vld [vmem:[#allocation2 + $0x58] sm:$0xff]
        %v1745 = vld [vmem:[#allocation2 + $0x60] sm:$0xff]
        %v1746 = vld [vmem:[#allocation2 + $0x68] sm:$0xff]
        %v1747 = vld [vmem:[#allocation2 + $0x70] sm:$0xff]
        %v1748 = vld [vmem:[#allocation2 + $0x78] sm:$0xff]
        %v1749 = vld [vmem:[#allocation2 + $0x80] sm:$0x3f]
        %s1750 = scalar_lea.vmem %s2, 6
        %v1751 = vld [vmem:[%s1750] sm:$0x3]
        %vm1752 = vsmask.f32 2304
        %v1754 = vshrl.u32 %v1733, 16
        %v1756 = vrot.slane %v1754, 5
        %v1757 = vshll.u32 %v1733, 16
        %v1759 = vrot.slane %v1757, 6
        %v1760 = vor.u32 %v1756, %v1759
        %v1762 = vshrl.u32 %v1734, 16
        %v1764 = vrot.slane %v1762, 5
        %v1765 = vshll.u32 %v1734, 16
        %v1767 = vrot.slane %v1765, 6
        %v1768 = vor.u32 %v1764, %v1767
        %v1769 = vsel %vm1752, %v1760, %v1768
        %v1771 = vshrl.u32 %v1735, 16
        %v1773 = vrot.slane %v1771, 5
        %v1774 = vshll.u32 %v1735, 16
        %v1776 = vrot.slane %v1774, 6
        %v1777 = vor.u32 %v1773, %v1776
        %v1778 = vsel %vm1752, %v1768, %v1777
        %v1780 = vshrl.u32 %v1736, 16
        %v1782 = vrot.slane %v1780, 5
        %v1783 = vshll.u32 %v1736, 16
        %v1785 = vrot.slane %v1783, 6
        %v1786 = vor.u32 %v1782, %v1785
        %v1787 = vsel %vm1752, %v1777, %v1786
        %v1789 = vshrl.u32 %v1737, 16
        %v1791 = vrot.slane %v1789, 5
        %v1792 = vshll.u32 %v1737, 16
        %v1794 = vrot.slane %v1792, 6
        %v1795 = vor.u32 %v1791, %v1794
        %v1796 = vsel %vm1752, %v1786, %v1795
        %v1798 = vshrl.u32 %v1738, 16
        %v1800 = vrot.slane %v1798, 5
        %v1801 = vshll.u32 %v1738, 16
        %v1803 = vrot.slane %v1801, 6
        %v1804 = vor.u32 %v1800, %v1803
        %v1805 = vsel %vm1752, %v1795, %v1804
        %v1807 = vshrl.u32 %v1739, 16
        %v1809 = vrot.slane %v1807, 5
        %v1810 = vshll.u32 %v1739, 16
        %v1812 = vrot.slane %v1810, 6
        %v1813 = vor.u32 %v1809, %v1812
        %v1814 = vsel %vm1752, %v1804, %v1813
        %v1816 = vshrl.u32 %v1740, 16
        %v1818 = vrot.slane %v1816, 5
        %v1819 = vshll.u32 %v1740, 16
        %v1821 = vrot.slane %v1819, 6
        %v1822 = vor.u32 %v1818, %v1821
        %v1823 = vsel %vm1752, %v1813, %v1822
        %v1825 = vshrl.u32 %v1741, 16
        %v1827 = vrot.slane %v1825, 5
        %v1828 = vshll.u32 %v1741, 16
        %v1830 = vrot.slane %v1828, 6
        %v1831 = vor.u32 %v1827, %v1830
        %v1832 = vsel %vm1752, %v1822, %v1831
        %v1834 = vshrl.u32 %v1742, 16
        %v1836 = vrot.slane %v1834, 5
        %v1837 = vshll.u32 %v1742, 16
        %v1839 = vrot.slane %v1837, 6
        %v1840 = vor.u32 %v1836, %v1839
        %v1841 = vsel %vm1752, %v1831, %v1840
        %v1843 = vshrl.u32 %v1743, 16
        %v1845 = vrot.slane %v1843, 5
        %v1846 = vshll.u32 %v1743, 16
        %v1848 = vrot.slane %v1846, 6
        %v1849 = vor.u32 %v1845, %v1848
        %v1850 = vsel %vm1752, %v1840, %v1849
        %v1852 = vshrl.u32 %v1744, 16
        %v1854 = vrot.slane %v1852, 5
        %v1855 = vshll.u32 %v1744, 16
        %v1857 = vrot.slane %v1855, 6
        %v1858 = vor.u32 %v1854, %v1857
        %v1859 = vsel %vm1752, %v1849, %v1858
        %v1861 = vshrl.u32 %v1745, 16
        %v1863 = vrot.slane %v1861, 5
        %v1864 = vshll.u32 %v1745, 16
        %v1866 = vrot.slane %v1864, 6
        %v1867 = vor.u32 %v1863, %v1866
        %v1868 = vsel %vm1752, %v1858, %v1867
        %v1870 = vshrl.u32 %v1746, 16
        %v1872 = vrot.slane %v1870, 5
        %v1873 = vshll.u32 %v1746, 16
        %v1875 = vrot.slane %v1873, 6
        %v1876 = vor.u32 %v1872, %v1875
        %v1877 = vsel %vm1752, %v1867, %v1876
        %v1879 = vshrl.u32 %v1747, 16
        %v1881 = vrot.slane %v1879, 5
        %v1882 = vshll.u32 %v1747, 16
        %v1884 = vrot.slane %v1882, 6
        %v1885 = vor.u32 %v1881, %v1884
        %v1886 = vsel %vm1752, %v1876, %v1885
        %v1888 = vshrl.u32 %v1748, 16
        %v1890 = vrot.slane %v1888, 5
        %v1891 = vshll.u32 %v1748, 16
        %v1893 = vrot.slane %v1891, 6
        %v1894 = vor.u32 %v1890, %v1893
        %v1895 = vsel %vm1752, %v1885, %v1894
        %v1897 = vshrl.u32 %v1749, 16
        %v1899 = vrot.slane %v1897, 5
        %v1900 = vshll.u32 %v1749, 16
        %v1902 = vrot.slane %v1900, 6
        %v1903 = vor.u32 %v1899, %v1902
        %v1904 = vsel %vm1752, %v1894, %v1903
        %v1906 = vsel %vm440, %v1769, 0
        %v1909 = vsel %vm440, %v1778, 0
        %v1912 = vsel %vm440, %v1787, 0
        %v1915 = vsel %vm440, %v1796, 0
        %v1918 = vsel %vm440, %v1805, 0
        %v1921 = vsel %vm440, %v1814, 0
        %v1924 = vsel %vm440, %v1823, 0
        %v1927 = vsel %vm440, %v1832, 0
        %v1930 = vsel %vm440, %v1841, 0
        %v1933 = vsel %vm440, %v1850, 0
        %v1936 = vsel %vm440, %v1859, 0
        %v1939 = vsel %vm440, %v1868, 0
        %v1942 = vsel %vm440, %v1877, 0
        %v1945 = vsel %vm440, %v1886, 0
        %v1948 = vsel %vm440, %v1895, 0
        %v1951 = vsel %vm440, %v1904, 0
        %v1954 = vsel %vm666, %v1751, 0
        %1956 = vmatprep.subr.bf16.mxu0 0
        %1957 = vmatpush1.bf16.msra.mxu0 %v1954
        %1958 = vmatprep.subr.bf16.mxu0 0
        %1959 = vmatpush1.bf16.msra.mxu0 0
        %1960 = vmatprep.subr.bf16.mxu0 0
        %1961 = vmatpush1.bf16.msra.mxu0 0
        %1962 = vmatprep.subr.bf16.mxu0 0
        %1963 = vmatpush1.bf16.msra.mxu0 0
        %1964 = vmatprep.subr.bf16.mxu0 0
        %1965 = vmatpush1.bf16.msra.mxu0 0
        %1966 = vmatprep.subr.bf16.mxu0 0
        %1967 = vmatpush1.bf16.msra.mxu0 0
        %1968 = vmatprep.subr.bf16.mxu0 0
        %1969 = vmatpush1.bf16.msra.mxu0 0
        %1970 = vmatprep.subr.bf16.mxu0 0
        %1971 = vmatpush1.bf16.msra.mxu0 0
        %1972 = vmatprep.subr.bf16.mxu0 0
        %1973 = vmatpush1.bf16.msra.mxu0 0
        %1974 = vmatprep.subr.bf16.mxu0 0
        %1975 = vmatpush1.bf16.msra.mxu0 0
        %1976 = vmatprep.subr.bf16.mxu0 0
        %1977 = vmatpush1.bf16.msra.mxu0 0
        %1978 = vmatprep.subr.bf16.mxu0 0
        %1979 = vmatpush1.bf16.msra.mxu0 0
        %1980 = vmatprep.subr.bf16.mxu0 0
        %1981 = vmatpush1.bf16.msra.mxu0 0
        %1982 = vmatprep.subr.bf16.mxu0 0
        %1983 = vmatpush1.bf16.msra.mxu0 0
        %1984 = vmatprep.subr.bf16.mxu0 0
        %1985 = vmatpush1.bf16.msra.mxu0 0
        %1986 = vmatprep.subr.bf16.mxu0 0
        %1987 = vmatpush1.bf16.msra.mxu0 0
        %1988 = vmatprep.mubr.bf16.mxu0 0
        %1989 = vmatmul.mubr.bf16.gmra.mrb[0].mxu0 %v1906
        %v1990 = vpop.f32.mrb[0].mxu0
        %v1991 = vadd.f32 0.0, %v1990
        %v1992 = vpop.f32.mrb[0].mxu0
        %v1993 = vpop.f32.mrb[0].mxu0
        %v1994 = vadd.f32 0.0, %v1993
        %v1995 = vpop.f32.mrb[0].mxu0
        %1996 = vmatprep.mubr.bf16.mxu0 0
        %1997 = vmatmul.mubr.bf16.gmra.mrb[0].mxu0 %v1909
        %v1998 = vpop.f32.mrb[0].mxu0
        %v1999 = vadd.f32 0.0, %v1998
        %v2000 = vpop.f32.mrb[0].mxu0
        %v2001 = vpop.f32.mrb[0].mxu0
        %v2002 = vadd.f32 0.0, %v2001
        %v2003 = vpop.f32.mrb[0].mxu0
        %2004 = vmatprep.mubr.bf16.mxu0 0
        %2005 = vmatmul.mubr.bf16.gmra.mrb[0].mxu0 %v1912
        %v2006 = vpop.f32.mrb[0].mxu0
        %v2007 = vadd.f32 0.0, %v2006
        %v2008 = vpop.f32.mrb[0].mxu0
        %v2009 = vpop.f32.mrb[0].mxu0
        %v2010 = vadd.f32 0.0, %v2009
        %v2011 = vpop.f32.mrb[0].mxu0
        %2012 = vmatprep.mubr.bf16.mxu0 0
        %2013 = vmatmul.mubr.bf16.gmra.mrb[0].mxu0 %v1915
        %v2014 = vpop.f32.mrb[0].mxu0
        %v2015 = vadd.f32 0.0, %v2014
        %v2016 = vpop.f32.mrb[0].mxu0
        %v2017 = vpop.f32.mrb[0].mxu0
        %v2018 = vadd.f32 0.0, %v2017
        %v2019 = vpop.f32.mrb[0].mxu0
        %2020 = vmatprep.mubr.bf16.mxu0 0
        %2021 = vmatmul.mubr.bf16.gmra.mrb[0].mxu0 %v1918
        %v2022 = vpop.f32.mrb[0].mxu0
        %v2023 = vadd.f32 0.0, %v2022
        %v2024 = vpop.f32.mrb[0].mxu0
        %v2025 = vpop.f32.mrb[0].mxu0
        %v2026 = vadd.f32 0.0, %v2025
        %v2027 = vpop.f32.mrb[0].mxu0
        %2028 = vmatprep.mubr.bf16.mxu0 0
        %2029 = vmatmul.mubr.bf16.gmra.mrb[0].mxu0 %v1921
        %v2030 = vpop.f32.mrb[0].mxu0
        %v2031 = vadd.f32 0.0, %v2030
        %v2032 = vpop.f32.mrb[0].mxu0
        %v2033 = vpop.f32.mrb[0].mxu0
        %v2034 = vadd.f32 0.0, %v2033
        %v2035 = vpop.f32.mrb[0].mxu0
        %2036 = vmatprep.mubr.bf16.mxu0 0
        %2037 = vmatmul.mubr.bf16.gmra.mrb[0].mxu0 %v1924
        %v2038 = vpop.f32.mrb[0].mxu0
        %v2039 = vadd.f32 0.0, %v2038
        %v2040 = vpop.f32.mrb[0].mxu0
        %v2041 = vpop.f32.mrb[0].mxu0
        %v2042 = vadd.f32 0.0, %v2041
        %v2043 = vpop.f32.mrb[0].mxu0
        %2044 = vmatprep.mubr.bf16.mxu0 0
        %2045 = vmatmul.mubr.bf16.gmra.mrb[0].mxu0 %v1927
        %v2046 = vpop.f32.mrb[0].mxu0
        %v2047 = vadd.f32 0.0, %v2046
        %v2048 = vpop.f32.mrb[0].mxu0
        %v2049 = vpop.f32.mrb[0].mxu0
        %v2050 = vadd.f32 0.0, %v2049
        %v2051 = vpop.f32.mrb[0].mxu0
        %2052 = vmatprep.mubr.bf16.mxu0 0
        %2053 = vmatmul.mubr.bf16.gmra.mrb[0].mxu0 %v1930
        %v2054 = vpop.f32.mrb[0].mxu0
        %v2055 = vadd.f32 0.0, %v2054
        %v2056 = vpop.f32.mrb[0].mxu0
        %v2057 = vpop.f32.mrb[0].mxu0
        %v2058 = vadd.f32 0.0, %v2057
        %v2059 = vpop.f32.mrb[0].mxu0
        %2060 = vmatprep.mubr.bf16.mxu0 0
        %2061 = vmatmul.mubr.bf16.gmra.mrb[0].mxu0 %v1933
        %v2062 = vpop.f32.mrb[0].mxu0
        %v2063 = vadd.f32 0.0, %v2062
        %v2064 = vpop.f32.mrb[0].mxu0
        %v2065 = vpop.f32.mrb[0].mxu0
        %v2066 = vadd.f32 0.0, %v2065
        %v2067 = vpop.f32.mrb[0].mxu0
        %2068 = vmatprep.mubr.bf16.mxu0 0
        %2069 = vmatmul.mubr.bf16.gmra.mrb[0].mxu0 %v1936
        %v2070 = vpop.f32.mrb[0].mxu0
        %v2071 = vadd.f32 0.0, %v2070
        %v2072 = vpop.f32.mrb[0].mxu0
        %v2073 = vpop.f32.mrb[0].mxu0
        %v2074 = vadd.f32 0.0, %v2073
        %v2075 = vpop.f32.mrb[0].mxu0
        %2076 = vmatprep.mubr.bf16.mxu0 0
        %2077 = vmatmul.mubr.bf16.gmra.mrb[0].mxu0 %v1939
        %v2078 = vpop.f32.mrb[0].mxu0
        %v2079 = vadd.f32 0.0, %v2078
        %v2080 = vpop.f32.mrb[0].mxu0
        %v2081 = vpop.f32.mrb[0].mxu0
        %v2082 = vadd.f32 0.0, %v2081
        %v2083 = vpop.f32.mrb[0].mxu0
        %2084 = vmatprep.mubr.bf16.mxu0 0
        %2085 = vmatmul.mubr.bf16.gmra.mrb[0].mxu0 %v1942
        %v2086 = vpop.f32.mrb[0].mxu0
        %v2087 = vadd.f32 0.0, %v2086
        %v2088 = vpop.f32.mrb[0].mxu0
        %v2089 = vpop.f32.mrb[0].mxu0
        %v2090 = vadd.f32 0.0, %v2089
        %v2091 = vpop.f32.mrb[0].mxu0
        %2092 = vmatprep.mubr.bf16.mxu0 0
        %2093 = vmatmul.mubr.bf16.gmra.mrb[0].mxu0 %v1945
        %v2094 = vpop.f32.mrb[0].mxu0
        %v2095 = vadd.f32 0.0, %v2094
        %v2096 = vpop.f32.mrb[0].mxu0
        %v2097 = vpop.f32.mrb[0].mxu0
        %v2098 = vadd.f32 0.0, %v2097
        %v2099 = vpop.f32.mrb[0].mxu0
        %2100 = vmatprep.mubr.bf16.mxu0 0
        %2101 = vmatmul.mubr.bf16.gmra.mrb[0].mxu0 %v1948
        %v2102 = vpop.f32.mrb[0].mxu0
        %v2103 = vadd.f32 0.0, %v2102
        %v2104 = vpop.f32.mrb[0].mxu0
        %v2105 = vpop.f32.mrb[0].mxu0
        %v2106 = vadd.f32 0.0, %v2105
        %v2107 = vpop.f32.mrb[0].mxu0
        %2108 = vmatprep.mubr.bf16.mxu0 0
        %2109 = vmatmul.mubr.bf16.gmra.mrb[0].mxu0 %v1951
        %v2110 = vpop.f32.mrb[0].mxu0
        %v2111 = vadd.f32 0.0, %v2110
        %v2112 = vpop.f32.mrb[0].mxu0
        %v2113 = vpop.f32.mrb[0].mxu0
        %v2114 = vadd.f32 0.0, %v2113
        %v2115 = vpop.f32.mrb[0].mxu0
        %2116 = vdwg.mxu0
        %v2117 = vadd.f32 %v1701, %v1991
        %v2118 = vadd.f32 %v1702, %v1994
        %v2119 = vadd.f32 %v1703, %v1999
        %v2120 = vadd.f32 %v1704, %v2002
        %v2121 = vadd.f32 %v1705, %v2007
        %v2122 = vadd.f32 %v1706, %v2010
        %v2123 = vadd.f32 %v1707, %v2015
        %v2124 = vadd.f32 %v1708, %v2018
        %v2125 = vadd.f32 %v1709, %v2023
        %v2126 = vadd.f32 %v1710, %v2026
        %v2127 = vadd.f32 %v1711, %v2031
        %v2128 = vadd.f32 %v1712, %v2034
        %v2129 = vadd.f32 %v1713, %v2039
        %v2130 = vadd.f32 %v1714, %v2042
        %v2131 = vadd.f32 %v1715, %v2047
        %v2132 = vadd.f32 %v1716, %v2050
        %v2133 = vadd.f32 %v1717, %v2055
        %v2134 = vadd.f32 %v1718, %v2058
        %v2135 = vadd.f32 %v1719, %v2063
        %v2136 = vadd.f32 %v1720, %v2066
        %v2137 = vadd.f32 %v1721, %v2071
        %v2138 = vadd.f32 %v1722, %v2074
        %v2139 = vadd.f32 %v1723, %v2079
        %v2140 = vadd.f32 %v1724, %v2082
        %v2141 = vadd.f32 %v1725, %v2087
        %v2142 = vadd.f32 %v1726, %v2090
        %v2143 = vadd.f32 %v1727, %v2095
        %v2144 = vadd.f32 %v1728, %v2098
        %v2145 = vadd.f32 %v1729, %v2103
        %v2146 = vadd.f32 %v1730, %v2106
        %v2147 = vadd.f32 %v1731, %v2111
        %v2148 = vadd.f32 %v1732, %v2114
        %2149 = vst [vmem:[#allocation3] sm:$0xff] %v2117
        %2150 = vst [vmem:[#allocation3 + $0x8] sm:$0xff] %v2118
        %2151 = vst [vmem:[#allocation3 + $0x10] sm:$0xff] %v2119
        %2152 = vst [vmem:[#allocation3 + $0x18] sm:$0xff] %v2120
        %2153 = vst [vmem:[#allocation3 + $0x20] sm:$0xff] %v2121
        %2154 = vst [vmem:[#allocation3 + $0x28] sm:$0xff] %v2122
        %2155 = vst [vmem:[#allocation3 + $0x30] sm:$0xff] %v2123
        %2156 = vst [vmem:[#allocation3 + $0x38] sm:$0xff] %v2124
        %2157 = vst [vmem:[#allocation3 + $0x40] sm:$0xff] %v2125
        %2158 = vst [vmem:[#allocation3 + $0x48] sm:$0xff] %v2126
        %2159 = vst [vmem:[#allocation3 + $0x50] sm:$0xff] %v2127
        %2160 = vst [vmem:[#allocation3 + $0x58] sm:$0xff] %v2128
        %2161 = vst [vmem:[#allocation3 + $0x60] sm:$0xff] %v2129
        %2162 = vst [vmem:[#allocation3 + $0x68] sm:$0xff] %v2130
        %2163 = vst [vmem:[#allocation3 + $0x70] sm:$0xff] %v2131
        %2164 = vst [vmem:[#allocation3 + $0x78] sm:$0xff] %v2132
        %2165 = vst [vmem:[#allocation3 + $0x80] sm:$0xff] %v2133
        %2166 = vst [vmem:[#allocation3 + $0x88] sm:$0xff] %v2134
        %2167 = vst [vmem:[#allocation3 + $0x90] sm:$0xff] %v2135
        %2168 = vst [vmem:[#allocation3 + $0x98] sm:$0xff] %v2136
        %2169 = vst [vmem:[#allocation3 + $0xa0] sm:$0xff] %v2137
        %2170 = vst [vmem:[#allocation3 + $0xa8] sm:$0xff] %v2138
        %2171 = vst [vmem:[#allocation3 + $0xb0] sm:$0xff] %v2139
        %2172 = vst [vmem:[#allocation3 + $0xb8] sm:$0xff] %v2140
        %2173 = vst [vmem:[#allocation3 + $0xc0] sm:$0xff] %v2141
        %2174 = vst [vmem:[#allocation3 + $0xc8] sm:$0xff] %v2142
        %2175 = vst [vmem:[#allocation3 + $0xd0] sm:$0xff] %v2143
        %2176 = vst [vmem:[#allocation3 + $0xd8] sm:$0xff] %v2144
        %2177 = vst [vmem:[#allocation3 + $0xe0] sm:$0xff] %v2145
        %2178 = vst [vmem:[#allocation3 + $0xe8] sm:$0xff] %v2146
        %2179 = vst [vmem:[#allocation3 + $0xf0] sm:$0xff] %v2147
        %2180 = vst [vmem:[#allocation3 + $0xf8] sm:$0xff] %v2148
        %v2181 = vld [vmem:[#allocation3] sm:$0xff]
        %v2182 = vld [vmem:[#allocation3 + $0x8] sm:$0xff]
        %v2183 = vld [vmem:[#allocation3 + $0x10] sm:$0xff]
        %v2184 = vld [vmem:[#allocation3 + $0x18] sm:$0xff]
        %v2185 = vld [vmem:[#allocation3 + $0x20] sm:$0xff]
        %v2186 = vld [vmem:[#allocation3 + $0x28] sm:$0xff]
        %v2187 = vld [vmem:[#allocation3 + $0x30] sm:$0xff]
        %v2188 = vld [vmem:[#allocation3 + $0x38] sm:$0xff]
        %v2189 = vld [vmem:[#allocation3 + $0x40] sm:$0xff]
        %v2190 = vld [vmem:[#allocation3 + $0x48] sm:$0xff]
        %v2191 = vld [vmem:[#allocation3 + $0x50] sm:$0xff]
        %v2192 = vld [vmem:[#allocation3 + $0x58] sm:$0xff]
        %v2193 = vld [vmem:[#allocation3 + $0x60] sm:$0xff]
        %v2194 = vld [vmem:[#allocation3 + $0x68] sm:$0xff]
        %v2195 = vld [vmem:[#allocation3 + $0x70] sm:$0xff]
        %v2196 = vld [vmem:[#allocation3 + $0x78] sm:$0xff]
        %v2197 = vld [vmem:[#allocation3 + $0x80] sm:$0xff]
        %v2198 = vld [vmem:[#allocation3 + $0x88] sm:$0xff]
        %v2199 = vld [vmem:[#allocation3 + $0x90] sm:$0xff]
        %v2200 = vld [vmem:[#allocation3 + $0x98] sm:$0xff]
        %v2201 = vld [vmem:[#allocation3 + $0xa0] sm:$0xff]
        %v2202 = vld [vmem:[#allocation3 + $0xa8] sm:$0xff]
        %v2203 = vld [vmem:[#allocation3 + $0xb0] sm:$0xff]
        %v2204 = vld [vmem:[#allocation3 + $0xb8] sm:$0xff]
        %v2205 = vld [vmem:[#allocation3 + $0xc0] sm:$0xff]
        %v2206 = vld [vmem:[#allocation3 + $0xc8] sm:$0xff]
        %v2207 = vld [vmem:[#allocation3 + $0xd0] sm:$0xff]
        %v2208 = vld [vmem:[#allocation3 + $0xd8] sm:$0xff]
        %v2209 = vld [vmem:[#allocation3 + $0xe0] sm:$0xff]
        %v2210 = vld [vmem:[#allocation3 + $0xe8] sm:$0xff]
        %v2211 = vld [vmem:[#allocation3 + $0xf0] sm:$0xff]
        %v2212 = vld [vmem:[#allocation3 + $0xf8] sm:$0xff]
        %v2213 = vld [vmem:[#allocation2 + $0x30] sm:$0xfc]
        %v2214 = vld [vmem:[#allocation2 + $0x38] sm:$0xff]
        %v2215 = vld [vmem:[#allocation2 + $0x40] sm:$0xff]
        %v2216 = vld [vmem:[#allocation2 + $0x48] sm:$0xff]
        %v2217 = vld [vmem:[#allocation2 + $0x50] sm:$0xff]
        %v2218 = vld [vmem:[#allocation2 + $0x58] sm:$0xff]
        %v2219 = vld [vmem:[#allocation2 + $0x60] sm:$0xff]
        %v2220 = vld [vmem:[#allocation2 + $0x68] sm:$0xff]
        %v2221 = vld [vmem:[#allocation2 + $0x70] sm:$0xff]
        %v2222 = vld [vmem:[#allocation2 + $0x78] sm:$0xff]
        %v2223 = vld [vmem:[#allocation2 + $0x80] sm:$0xff]
        %v2224 = vld [vmem:[#allocation2 + $0x88] sm:$0xff]
        %v2225 = vld [vmem:[#allocation2 + $0x90] sm:$0xff]
        %v2226 = vld [vmem:[#allocation2 + $0x98] sm:$0xff]
        %v2227 = vld [vmem:[#allocation2 + $0xa0] sm:$0xff]
        %v2228 = vld [vmem:[#allocation2 + $0xa8] sm:$0xff]
        %v2229 = vld [vmem:[#allocation2 + $0xb0] sm:$0x3]
        %s2230 = scalar_lea.vmem %s2, 8
        %v2231 = vld [vmem:[%s2230] sm:$0x3]
        %vm2249 = vcmask 1045504
        %v2250 = vrot.slane %v2213, 2
        %v2251 = vrot.slane %v2214, 2
        %v2252 = vsel %vm2249, %v2250, %v2251
        %v2253 = vrot.slane %v2215, 2
        %v2254 = vsel %vm2249, %v2251, %v2253
        %v2255 = vrot.slane %v2216, 2
        %v2256 = vsel %vm2249, %v2253, %v2255
        %v2257 = vrot.slane %v2217, 2
        %v2258 = vsel %vm2249, %v2255, %v2257
        %v2259 = vrot.slane %v2218, 2
        %v2260 = vsel %vm2249, %v2257, %v2259
        %v2261 = vrot.slane %v2219, 2
        %v2262 = vsel %vm2249, %v2259, %v2261
        %v2263 = vrot.slane %v2220, 2
        %v2264 = vsel %vm2249, %v2261, %v2263
        %v2265 = vrot.slane %v2221, 2
        %v2266 = vsel %vm2249, %v2263, %v2265
        %v2267 = vrot.slane %v2222, 2
        %v2268 = vsel %vm2249, %v2265, %v2267
        %v2269 = vrot.slane %v2223, 2
        %v2270 = vsel %vm2249, %v2267, %v2269
        %v2271 = vrot.slane %v2224, 2
        %v2272 = vsel %vm2249, %v2269, %v2271
        %v2273 = vrot.slane %v2225, 2
        %v2274 = vsel %vm2249, %v2271, %v2273
        %v2275 = vrot.slane %v2226, 2
        %v2276 = vsel %vm2249, %v2273, %v2275
        %v2277 = vrot.slane %v2227, 2
        %v2278 = vsel %vm2249, %v2275, %v2277
        %v2279 = vrot.slane %v2228, 2
        %v2280 = vsel %vm2249, %v2277, %v2279
        %v2281 = vrot.slane %v2229, 2
        %v2282 = vsel %vm2249, %v2279, %v2281
        %v2284 = vsel %vm440, %v2252, 0
        %v2287 = vsel %vm440, %v2254, 0
        %v2290 = vsel %vm440, %v2256, 0
        %v2293 = vsel %vm440, %v2258, 0
        %v2296 = vsel %vm440, %v2260, 0
        %v2299 = vsel %vm440, %v2262, 0
        %v2302 = vsel %vm440, %v2264, 0
        %v2305 = vsel %vm440, %v2266, 0
        %v2308 = vsel %vm440, %v2268, 0
        %v2311 = vsel %vm440, %v2270, 0
        %v2314 = vsel %vm440, %v2272, 0
        %v2317 = vsel %vm440, %v2274, 0
        %v2320 = vsel %vm440, %v2276, 0
        %v2323 = vsel %vm440, %v2278, 0
        %v2326 = vsel %vm440, %v2280, 0
        %v2329 = vsel %vm440, %v2282, 0
        %v2332 = vsel %vm666, %v2231, 0
        %2334 = vmatprep.subr.bf16.mxu0 0
        %2335 = vmatpush1.bf16.msra.mxu0 %v2332
        %2336 = vmatprep.subr.bf16.mxu0 0
        %2337 = vmatpush1.bf16.msra.mxu0 0
        %2338 = vmatprep.subr.bf16.mxu0 0
        %2339 = vmatpush1.bf16.msra.mxu0 0
        %2340 = vmatprep.subr.bf16.mxu0 0
        %2341 = vmatpush1.bf16.msra.mxu0 0
        %2342 = vmatprep.subr.bf16.mxu0 0
        %2343 = vmatpush1.bf16.msra.mxu0 0
        %2344 = vmatprep.subr.bf16.mxu0 0
        %2345 = vmatpush1.bf16.msra.mxu0 0
        %2346 = vmatprep.subr.bf16.mxu0 0
        %2347 = vmatpush1.bf16.msra.mxu0 0
        %2348 = vmatprep.subr.bf16.mxu0 0
        %2349 = vmatpush1.bf16.msra.mxu0 0
        %2350 = vmatprep.subr.bf16.mxu0 0
        %2351 = vmatpush1.bf16.msra.mxu0 0
        %2352 = vmatprep.subr.bf16.mxu0 0
        %2353 = vmatpush1.bf16.msra.mxu0 0
        %2354 = vmatprep.subr.bf16.mxu0 0
        %2355 = vmatpush1.bf16.msra.mxu0 0
        %2356 = vmatprep.subr.bf16.mxu0 0
        %2357 = vmatpush1.bf16.msra.mxu0 0
        %2358 = vmatprep.subr.bf16.mxu0 0
        %2359 = vmatpush1.bf16.msra.mxu0 0
        %2360 = vmatprep.subr.bf16.mxu0 0
        %2361 = vmatpush1.bf16.msra.mxu0 0
        %2362 = vmatprep.subr.bf16.mxu0 0
        %2363 = vmatpush1.bf16.msra.mxu0 0
        %2364 = vmatprep.subr.bf16.mxu0 0
        %2365 = vmatpush1.bf16.msra.mxu0 0
        %2366 = vmatprep.mubr.bf16.mxu0 0
        %2367 = vmatmul.mubr.bf16.gmra.mrb[0].mxu0 %v2284
        %v2368 = vpop.f32.mrb[0].mxu0
        %v2369 = vadd.f32 0.0, %v2368
        %v2370 = vpop.f32.mrb[0].mxu0
        %v2371 = vpop.f32.mrb[0].mxu0
        %v2372 = vadd.f32 0.0, %v2371
        %v2373 = vpop.f32.mrb[0].mxu0
        %2374 = vmatprep.mubr.bf16.mxu0 0
        %2375 = vmatmul.mubr.bf16.gmra.mrb[0].mxu0 %v2287
        %v2376 = vpop.f32.mrb[0].mxu0
        %v2377 = vadd.f32 0.0, %v2376
        %v2378 = vpop.f32.mrb[0].mxu0
        %v2379 = vpop.f32.mrb[0].mxu0
        %v2380 = vadd.f32 0.0, %v2379
        %v2381 = vpop.f32.mrb[0].mxu0
        %2382 = vmatprep.mubr.bf16.mxu0 0
        %2383 = vmatmul.mubr.bf16.gmra.mrb[0].mxu0 %v2290
        %v2384 = vpop.f32.mrb[0].mxu0
        %v2385 = vadd.f32 0.0, %v2384
        %v2386 = vpop.f32.mrb[0].mxu0
        %v2387 = vpop.f32.mrb[0].mxu0
        %v2388 = vadd.f32 0.0, %v2387
        %v2389 = vpop.f32.mrb[0].mxu0
        %2390 = vmatprep.mubr.bf16.mxu0 0
        %2391 = vmatmul.mubr.bf16.gmra.mrb[0].mxu0 %v2293
        %v2392 = vpop.f32.mrb[0].mxu0
        %v2393 = vadd.f32 0.0, %v2392
        %v2394 = vpop.f32.mrb[0].mxu0
        %v2395 = vpop.f32.mrb[0].mxu0
        %v2396 = vadd.f32 0.0, %v2395
        %v2397 = vpop.f32.mrb[0].mxu0
        %2398 = vmatprep.mubr.bf16.mxu0 0
        %2399 = vmatmul.mubr.bf16.gmra.mrb[0].mxu0 %v2296
        %v2400 = vpop.f32.mrb[0].mxu0
        %v2401 = vadd.f32 0.0, %v2400
        %v2402 = vpop.f32.mrb[0].mxu0
        %v2403 = vpop.f32.mrb[0].mxu0
        %v2404 = vadd.f32 0.0, %v2403
        %v2405 = vpop.f32.mrb[0].mxu0
        %2406 = vmatprep.mubr.bf16.mxu0 0
        %2407 = vmatmul.mubr.bf16.gmra.mrb[0].mxu0 %v2299
        %v2408 = vpop.f32.mrb[0].mxu0
        %v2409 = vadd.f32 0.0, %v2408
        %v2410 = vpop.f32.mrb[0].mxu0
        %v2411 = vpop.f32.mrb[0].mxu0
        %v2412 = vadd.f32 0.0, %v2411
        %v2413 = vpop.f32.mrb[0].mxu0
        %2414 = vmatprep.mubr.bf16.mxu0 0
        %2415 = vmatmul.mubr.bf16.gmra.mrb[0].mxu0 %v2302
        %v2416 = vpop.f32.mrb[0].mxu0
        %v2417 = vadd.f32 0.0, %v2416
        %v2418 = vpop.f32.mrb[0].mxu0
        %v2419 = vpop.f32.mrb[0].mxu0
        %v2420 = vadd.f32 0.0, %v2419
        %v2421 = vpop.f32.mrb[0].mxu0
        %2422 = vmatprep.mubr.bf16.mxu0 0
        %2423 = vmatmul.mubr.bf16.gmra.mrb[0].mxu0 %v2305
        %v2424 = vpop.f32.mrb[0].mxu0
        %v2425 = vadd.f32 0.0, %v2424
        %v2426 = vpop.f32.mrb[0].mxu0
        %v2427 = vpop.f32.mrb[0].mxu0
        %v2428 = vadd.f32 0.0, %v2427
        %v2429 = vpop.f32.mrb[0].mxu0
        %2430 = vmatprep.mubr.bf16.mxu0 0
        %2431 = vmatmul.mubr.bf16.gmra.mrb[0].mxu0 %v2308
        %v2432 = vpop.f32.mrb[0].mxu0
        %v2433 = vadd.f32 0.0, %v2432
        %v2434 = vpop.f32.mrb[0].mxu0
        %v2435 = vpop.f32.mrb[0].mxu0
        %v2436 = vadd.f32 0.0, %v2435
        %v2437 = vpop.f32.mrb[0].mxu0
        %2438 = vmatprep.mubr.bf16.mxu0 0
        %2439 = vmatmul.mubr.bf16.gmra.mrb[0].mxu0 %v2311
        %v2440 = vpop.f32.mrb[0].mxu0
        %v2441 = vadd.f32 0.0, %v2440
        %v2442 = vpop.f32.mrb[0].mxu0
        %v2443 = vpop.f32.mrb[0].mxu0
        %v2444 = vadd.f32 0.0, %v2443
        %v2445 = vpop.f32.mrb[0].mxu0
        %2446 = vmatprep.mubr.bf16.mxu0 0
        %2447 = vmatmul.mubr.bf16.gmra.mrb[0].mxu0 %v2314
        %v2448 = vpop.f32.mrb[0].mxu0
        %v2449 = vadd.f32 0.0, %v2448
        %v2450 = vpop.f32.mrb[0].mxu0
        %v2451 = vpop.f32.mrb[0].mxu0
        %v2452 = vadd.f32 0.0, %v2451
        %v2453 = vpop.f32.mrb[0].mxu0
        %2454 = vmatprep.mubr.bf16.mxu0 0
        %2455 = vmatmul.mubr.bf16.gmra.mrb[0].mxu0 %v2317
        %v2456 = vpop.f32.mrb[0].mxu0
        %v2457 = vadd.f32 0.0, %v2456
        %v2458 = vpop.f32.mrb[0].mxu0
        %v2459 = vpop.f32.mrb[0].mxu0
        %v2460 = vadd.f32 0.0, %v2459
        %v2461 = vpop.f32.mrb[0].mxu0
        %2462 = vmatprep.mubr.bf16.mxu0 0
        %2463 = vmatmul.mubr.bf16.gmra.mrb[0].mxu0 %v2320
        %v2464 = vpop.f32.mrb[0].mxu0
        %v2465 = vadd.f32 0.0, %v2464
        %v2466 = vpop.f32.mrb[0].mxu0
        %v2467 = vpop.f32.mrb[0].mxu0
        %v2468 = vadd.f32 0.0, %v2467
        %v2469 = vpop.f32.mrb[0].mxu0
        %2470 = vmatprep.mubr.bf16.mxu0 0
        %2471 = vmatmul.mubr.bf16.gmra.mrb[0].mxu0 %v2323
        %v2472 = vpop.f32.mrb[0].mxu0
        %v2473 = vadd.f32 0.0, %v2472
        %v2474 = vpop.f32.mrb[0].mxu0
        %v2475 = vpop.f32.mrb[0].mxu0
        %v2476 = vadd.f32 0.0, %v2475
        %v2477 = vpop.f32.mrb[0].mxu0
        %2478 = vmatprep.mubr.bf16.mxu0 0
        %2479 = vmatmul.mubr.bf16.gmra.mrb[0].mxu0 %v2326
        %v2480 = vpop.f32.mrb[0].mxu0
        %v2481 = vadd.f32 0.0, %v2480
        %v2482 = vpop.f32.mrb[0].mxu0
        %v2483 = vpop.f32.mrb[0].mxu0
        %v2484 = vadd.f32 0.0, %v2483
        %v2485 = vpop.f32.mrb[0].mxu0
        %2486 = vmatprep.mubr.bf16.mxu0 0
        %2487 = vmatmul.mubr.bf16.gmra.mrb[0].mxu0 %v2329
        %v2488 = vpop.f32.mrb[0].mxu0
        %v2489 = vadd.f32 0.0, %v2488
        %v2490 = vpop.f32.mrb[0].mxu0
        %v2491 = vpop.f32.mrb[0].mxu0
        %v2492 = vadd.f32 0.0, %v2491
        %v2493 = vpop.f32.mrb[0].mxu0
        %2494 = vdwg.mxu0
        %v2495 = vadd.f32 %v2181, %v2369
        %v2496 = vadd.f32 %v2182, %v2372
        %v2497 = vadd.f32 %v2183, %v2377
        %v2498 = vadd.f32 %v2184, %v2380
        %v2499 = vadd.f32 %v2185, %v2385
        %v2500 = vadd.f32 %v2186, %v2388
        %v2501 = vadd.f32 %v2187, %v2393
        %v2502 = vadd.f32 %v2188, %v2396
        %v2503 = vadd.f32 %v2189, %v2401
        %v2504 = vadd.f32 %v2190, %v2404
        %v2505 = vadd.f32 %v2191, %v2409
        %v2506 = vadd.f32 %v2192, %v2412
        %v2507 = vadd.f32 %v2193, %v2417
        %v2508 = vadd.f32 %v2194, %v2420
        %v2509 = vadd.f32 %v2195, %v2425
        %v2510 = vadd.f32 %v2196, %v2428
        %v2511 = vadd.f32 %v2197, %v2433
        %v2512 = vadd.f32 %v2198, %v2436
        %v2513 = vadd.f32 %v2199, %v2441
        %v2514 = vadd.f32 %v2200, %v2444
        %v2515 = vadd.f32 %v2201, %v2449
        %v2516 = vadd.f32 %v2202, %v2452
        %v2517 = vadd.f32 %v2203, %v2457
        %v2518 = vadd.f32 %v2204, %v2460
        %v2519 = vadd.f32 %v2205, %v2465
        %v2520 = vadd.f32 %v2206, %v2468
        %v2521 = vadd.f32 %v2207, %v2473
        %v2522 = vadd.f32 %v2208, %v2476
        %v2523 = vadd.f32 %v2209, %v2481
        %v2524 = vadd.f32 %v2210, %v2484
        %v2525 = vadd.f32 %v2211, %v2489
        %v2526 = vadd.f32 %v2212, %v2492
        %2527 = vst [vmem:[#allocation3] sm:$0xff] %v2495
        %2528 = vst [vmem:[#allocation3 + $0x8] sm:$0xff] %v2496
        %2529 = vst [vmem:[#allocation3 + $0x10] sm:$0xff] %v2497
        %2530 = vst [vmem:[#allocation3 + $0x18] sm:$0xff] %v2498
        %2531 = vst [vmem:[#allocation3 + $0x20] sm:$0xff] %v2499
        %2532 = vst [vmem:[#allocation3 + $0x28] sm:$0xff] %v2500
        %2533 = vst [vmem:[#allocation3 + $0x30] sm:$0xff] %v2501
        %2534 = vst [vmem:[#allocation3 + $0x38] sm:$0xff] %v2502
        %2535 = vst [vmem:[#allocation3 + $0x40] sm:$0xff] %v2503
        %2536 = vst [vmem:[#allocation3 + $0x48] sm:$0xff] %v2504
        %2537 = vst [vmem:[#allocation3 + $0x50] sm:$0xff] %v2505
        %2538 = vst [vmem:[#allocation3 + $0x58] sm:$0xff] %v2506
        %2539 = vst [vmem:[#allocation3 + $0x60] sm:$0xff] %v2507
        %2540 = vst [vmem:[#allocation3 + $0x68] sm:$0xff] %v2508
        %2541 = vst [vmem:[#allocation3 + $0x70] sm:$0xff] %v2509
        %2542 = vst [vmem:[#allocation3 + $0x78] sm:$0xff] %v2510
        %2543 = vst [vmem:[#allocation3 + $0x80] sm:$0xff] %v2511
        %2544 = vst [vmem:[#allocation3 + $0x88] sm:$0xff] %v2512
        %2545 = vst [vmem:[#allocation3 + $0x90] sm:$0xff] %v2513
        %2546 = vst [vmem:[#allocation3 + $0x98] sm:$0xff] %v2514
        %2547 = vst [vmem:[#allocation3 + $0xa0] sm:$0xff] %v2515
        %2548 = vst [vmem:[#allocation3 + $0xa8] sm:$0xff] %v2516
        %2549 = vst [vmem:[#allocation3 + $0xb0] sm:$0xff] %v2517
        %2550 = vst [vmem:[#allocation3 + $0xb8] sm:$0xff] %v2518
        %2551 = vst [vmem:[#allocation3 + $0xc0] sm:$0xff] %v2519
        %2552 = vst [vmem:[#allocation3 + $0xc8] sm:$0xff] %v2520
        %2553 = vst [vmem:[#allocation3 + $0xd0] sm:$0xff] %v2521
        %2554 = vst [vmem:[#allocation3 + $0xd8] sm:$0xff] %v2522
        %2555 = vst [vmem:[#allocation3 + $0xe0] sm:$0xff] %v2523
        %2556 = vst [vmem:[#allocation3 + $0xe8] sm:$0xff] %v2524
        %2557 = vst [vmem:[#allocation3 + $0xf0] sm:$0xff] %v2525
        %2558 = vst [vmem:[#allocation3 + $0xf8] sm:$0xff] %v2526
        %v2559 = vld [vmem:[#allocation3] sm:$0xff]
        %v2560 = vld [vmem:[#allocation3 + $0x8] sm:$0xff]
        %v2561 = vld [vmem:[#allocation3 + $0x10] sm:$0xff]
        %v2562 = vld [vmem:[#allocation3 + $0x18] sm:$0xff]
        %v2563 = vld [vmem:[#allocation3 + $0x20] sm:$0xff]
        %v2564 = vld [vmem:[#allocation3 + $0x28] sm:$0xff]
        %v2565 = vld [vmem:[#allocation3 + $0x30] sm:$0xff]
        %v2566 = vld [vmem:[#allocation3 + $0x38] sm:$0xff]
        %v2567 = vld [vmem:[#allocation3 + $0x40] sm:$0xff]
        %v2568 = vld [vmem:[#allocation3 + $0x48] sm:$0xff]
        %v2569 = vld [vmem:[#allocation3 + $0x50] sm:$0xff]
        %v2570 = vld [vmem:[#allocation3 + $0x58] sm:$0xff]
        %v2571 = vld [vmem:[#allocation3 + $0x60] sm:$0xff]
        %v2572 = vld [vmem:[#allocation3 + $0x68] sm:$0xff]
        %v2573 = vld [vmem:[#allocation3 + $0x70] sm:$0xff]
        %v2574 = vld [vmem:[#allocation3 + $0x78] sm:$0xff]
        %v2575 = vld [vmem:[#allocation3 + $0x80] sm:$0xff]
        %v2576 = vld [vmem:[#allocation3 + $0x88] sm:$0xff]
        %v2577 = vld [vmem:[#allocation3 + $0x90] sm:$0xff]
        %v2578 = vld [vmem:[#allocation3 + $0x98] sm:$0xff]
        %v2579 = vld [vmem:[#allocation3 + $0xa0] sm:$0xff]
        %v2580 = vld [vmem:[#allocation3 + $0xa8] sm:$0xff]
        %v2581 = vld [vmem:[#allocation3 + $0xb0] sm:$0xff]
        %v2582 = vld [vmem:[#allocation3 + $0xb8] sm:$0xff]
        %v2583 = vld [vmem:[#allocation3 + $0xc0] sm:$0xff]
        %v2584 = vld [vmem:[#allocation3 + $0xc8] sm:$0xff]
        %v2585 = vld [vmem:[#allocation3 + $0xd0] sm:$0xff]
        %v2586 = vld [vmem:[#allocation3 + $0xd8] sm:$0xff]
        %v2587 = vld [vmem:[#allocation3 + $0xe0] sm:$0xff]
        %v2588 = vld [vmem:[#allocation3 + $0xe8] sm:$0xff]
        %v2589 = vld [vmem:[#allocation3 + $0xf0] sm:$0xff]
        %v2590 = vld [vmem:[#allocation3 + $0xf8] sm:$0xff]
        %v2591 = vld [vmem:[#allocation2 + $0x30] sm:$0xfc]
        %v2592 = vld [vmem:[#allocation2 + $0x38] sm:$0xff]
        %v2593 = vld [vmem:[#allocation2 + $0x40] sm:$0xff]
        %v2594 = vld [vmem:[#allocation2 + $0x48] sm:$0xff]
        %v2595 = vld [vmem:[#allocation2 + $0x50] sm:$0xff]
        %v2596 = vld [vmem:[#allocation2 + $0x58] sm:$0xff]
        %v2597 = vld [vmem:[#allocation2 + $0x60] sm:$0xff]
        %v2598 = vld [vmem:[#allocation2 + $0x68] sm:$0xff]
        %v2599 = vld [vmem:[#allocation2 + $0x70] sm:$0xff]
        %v2600 = vld [vmem:[#allocation2 + $0x78] sm:$0xff]
        %v2601 = vld [vmem:[#allocation2 + $0x80] sm:$0xff]
        %v2602 = vld [vmem:[#allocation2 + $0x88] sm:$0xff]
        %v2603 = vld [vmem:[#allocation2 + $0x90] sm:$0xff]
        %v2604 = vld [vmem:[#allocation2 + $0x98] sm:$0xff]
        %v2605 = vld [vmem:[#allocation2 + $0xa0] sm:$0xff]
        %v2606 = vld [vmem:[#allocation2 + $0xa8] sm:$0xff]
        %v2607 = vld [vmem:[#allocation2 + $0xb0] sm:$0x7]
        %s2608 = scalar_lea.vmem %s2, 10
        %v2609 = vld [vmem:[%s2608] sm:$0x3]
        %vm2610 = vsmask.f32 5376
        %v2612 = vshrl.u32 %v2591, 16
        %v2614 = vrot.slane %v2612, 2
        %v2615 = vshll.u32 %v2591, 16
        %v2617 = vrot.slane %v2615, 3
        %v2618 = vor.u32 %v2614, %v2617
        %v2620 = vshrl.u32 %v2592, 16
        %v2622 = vrot.slane %v2620, 2
        %v2623 = vshll.u32 %v2592, 16
        %v2625 = vrot.slane %v2623, 3
        %v2626 = vor.u32 %v2622, %v2625
        %v2627 = vsel %vm2610, %v2618, %v2626
        %v2629 = vshrl.u32 %v2593, 16
        %v2631 = vrot.slane %v2629, 2
        %v2632 = vshll.u32 %v2593, 16
        %v2634 = vrot.slane %v2632, 3
        %v2635 = vor.u32 %v2631, %v2634
        %v2636 = vsel %vm2610, %v2626, %v2635
        %v2638 = vshrl.u32 %v2594, 16
        %v2640 = vrot.slane %v2638, 2
        %v2641 = vshll.u32 %v2594, 16
        %v2643 = vrot.slane %v2641, 3
        %v2644 = vor.u32 %v2640, %v2643
        %v2645 = vsel %vm2610, %v2635, %v2644
        %v2647 = vshrl.u32 %v2595, 16
        %v2649 = vrot.slane %v2647, 2
        %v2650 = vshll.u32 %v2595, 16
        %v2652 = vrot.slane %v2650, 3
        %v2653 = vor.u32 %v2649, %v2652
        %v2654 = vsel %vm2610, %v2644, %v2653
        %v2656 = vshrl.u32 %v2596, 16
        %v2658 = vrot.slane %v2656, 2
        %v2659 = vshll.u32 %v2596, 16
        %v2661 = vrot.slane %v2659, 3
        %v2662 = vor.u32 %v2658, %v2661
        %v2663 = vsel %vm2610, %v2653, %v2662
        %v2665 = vshrl.u32 %v2597, 16
        %v2667 = vrot.slane %v2665, 2
        %v2668 = vshll.u32 %v2597, 16
        %v2670 = vrot.slane %v2668, 3
        %v2671 = vor.u32 %v2667, %v2670
        %v2672 = vsel %vm2610, %v2662, %v2671
        %v2674 = vshrl.u32 %v2598, 16
        %v2676 = vrot.slane %v2674, 2
        %v2677 = vshll.u32 %v2598, 16
        %v2679 = vrot.slane %v2677, 3
        %v2680 = vor.u32 %v2676, %v2679
        %v2681 = vsel %vm2610, %v2671, %v2680
        %v2683 = vshrl.u32 %v2599, 16
        %v2685 = vrot.slane %v2683, 2
        %v2686 = vshll.u32 %v2599, 16
        %v2688 = vrot.slane %v2686, 3
        %v2689 = vor.u32 %v2685, %v2688
        %v2690 = vsel %vm2610, %v2680, %v2689
        %v2692 = vshrl.u32 %v2600, 16
        %v2694 = vrot.slane %v2692, 2
        %v2695 = vshll.u32 %v2600, 16
        %v2697 = vrot.slane %v2695, 3
        %v2698 = vor.u32 %v2694, %v2697
        %v2699 = vsel %vm2610, %v2689, %v2698
        %v2701 = vshrl.u32 %v2601, 16
        %v2703 = vrot.slane %v2701, 2
        %v2704 = vshll.u32 %v2601, 16
        %v2706 = vrot.slane %v2704, 3
        %v2707 = vor.u32 %v2703, %v2706
        %v2708 = vsel %vm2610, %v2698, %v2707
        %v2710 = vshrl.u32 %v2602, 16
        %v2712 = vrot.slane %v2710, 2
        %v2713 = vshll.u32 %v2602, 16
        %v2715 = vrot.slane %v2713, 3
        %v2716 = vor.u32 %v2712, %v2715
        %v2717 = vsel %vm2610, %v2707, %v2716
        %v2719 = vshrl.u32 %v2603, 16
        %v2721 = vrot.slane %v2719, 2
        %v2722 = vshll.u32 %v2603, 16
        %v2724 = vrot.slane %v2722, 3
        %v2725 = vor.u32 %v2721, %v2724
        %v2726 = vsel %vm2610, %v2716, %v2725
        %v2728 = vshrl.u32 %v2604, 16
        %v2730 = vrot.slane %v2728, 2
        %v2731 = vshll.u32 %v2604, 16
        %v2733 = vrot.slane %v2731, 3
        %v2734 = vor.u32 %v2730, %v2733
        %v2735 = vsel %vm2610, %v2725, %v2734
        %v2737 = vshrl.u32 %v2605, 16
        %v2739 = vrot.slane %v2737, 2
        %v2740 = vshll.u32 %v2605, 16
        %v2742 = vrot.slane %v2740, 3
        %v2743 = vor.u32 %v2739, %v2742
        %v2744 = vsel %vm2610, %v2734, %v2743
        %v2746 = vshrl.u32 %v2606, 16
        %v2748 = vrot.slane %v2746, 2
        %v2749 = vshll.u32 %v2606, 16
        %v2751 = vrot.slane %v2749, 3
        %v2752 = vor.u32 %v2748, %v2751
        %v2753 = vsel %vm2610, %v2743, %v2752
        %v2755 = vshrl.u32 %v2607, 16
        %v2757 = vrot.slane %v2755, 2
        %v2758 = vshll.u32 %v2607, 16
        %v2760 = vrot.slane %v2758, 3
        %v2761 = vor.u32 %v2757, %v2760
        %v2762 = vsel %vm2610, %v2752, %v2761
        %v2764 = vsel %vm440, %v2627, 0
        %v2767 = vsel %vm440, %v2636, 0
        %v2770 = vsel %vm440, %v2645, 0
        %v2773 = vsel %vm440, %v2654, 0
        %v2776 = vsel %vm440, %v2663, 0
        %v2779 = vsel %vm440, %v2672, 0
        %v2782 = vsel %vm440, %v2681, 0
        %v2785 = vsel %vm440, %v2690, 0
        %v2788 = vsel %vm440, %v2699, 0
        %v2791 = vsel %vm440, %v2708, 0
        %v2794 = vsel %vm440, %v2717, 0
        %v2797 = vsel %vm440, %v2726, 0
        %v2800 = vsel %vm440, %v2735, 0
        %v2803 = vsel %vm440, %v2744, 0
        %v2806 = vsel %vm440, %v2753, 0
        %v2809 = vsel %vm440, %v2762, 0
        %v2812 = vsel %vm666, %v2609, 0
        %2814 = vmatprep.subr.bf16.mxu0 0
        %2815 = vmatpush1.bf16.msra.mxu0 %v2812
        %2816 = vmatprep.subr.bf16.mxu0 0
        %2817 = vmatpush1.bf16.msra.mxu0 0
        %2818 = vmatprep.subr.bf16.mxu0 0
        %2819 = vmatpush1.bf16.msra.mxu0 0
        %2820 = vmatprep.subr.bf16.mxu0 0
        %2821 = vmatpush1.bf16.msra.mxu0 0
        %2822 = vmatprep.subr.bf16.mxu0 0
        %2823 = vmatpush1.bf16.msra.mxu0 0
        %2824 = vmatprep.subr.bf16.mxu0 0
        %2825 = vmatpush1.bf16.msra.mxu0 0
        %2826 = vmatprep.subr.bf16.mxu0 0
        %2827 = vmatpush1.bf16.msra.mxu0 0
        %2828 = vmatprep.subr.bf16.mxu0 0
        %2829 = vmatpush1.bf16.msra.mxu0 0
        %2830 = vmatprep.subr.bf16.mxu0 0
        %2831 = vmatpush1.bf16.msra.mxu0 0
        %2832 = vmatprep.subr.bf16.mxu0 0
        %2833 = vmatpush1.bf16.msra.mxu0 0
        %2834 = vmatprep.subr.bf16.mxu0 0
        %2835 = vmatpush1.bf16.msra.mxu0 0
        %2836 = vmatprep.subr.bf16.mxu0 0
        %2837 = vmatpush1.bf16.msra.mxu0 0
        %2838 = vmatprep.subr.bf16.mxu0 0
        %2839 = vmatpush1.bf16.msra.mxu0 0
        %2840 = vmatprep.subr.bf16.mxu0 0
        %2841 = vmatpush1.bf16.msra.mxu0 0
        %2842 = vmatprep.subr.bf16.mxu0 0
        %2843 = vmatpush1.bf16.msra.mxu0 0
        %2844 = vmatprep.subr.bf16.mxu0 0
        %2845 = vmatpush1.bf16.msra.mxu0 0
        %2846 = vmatprep.mubr.bf16.mxu0 0
        %2847 = vmatmul.mubr.bf16.gmra.mrb[0].mxu0 %v2764
        %v2848 = vpop.f32.mrb[0].mxu0
        %v2849 = vadd.f32 0.0, %v2848
        %v2850 = vpop.f32.mrb[0].mxu0
        %v2851 = vpop.f32.mrb[0].mxu0
        %v2852 = vadd.f32 0.0, %v2851
        %v2853 = vpop.f32.mrb[0].mxu0
        %2854 = vmatprep.mubr.bf16.mxu0 0
        %2855 = vmatmul.mubr.bf16.gmra.mrb[0].mxu0 %v2767
        %v2856 = vpop.f32.mrb[0].mxu0
        %v2857 = vadd.f32 0.0, %v2856
        %v2858 = vpop.f32.mrb[0].mxu0
        %v2859 = vpop.f32.mrb[0].mxu0
        %v2860 = vadd.f32 0.0, %v2859
        %v2861 = vpop.f32.mrb[0].mxu0
        %2862 = vmatprep.mubr.bf16.mxu0 0
        %2863 = vmatmul.mubr.bf16.gmra.mrb[0].mxu0 %v2770
        %v2864 = vpop.f32.mrb[0].mxu0
        %v2865 = vadd.f32 0.0, %v2864
        %v2866 = vpop.f32.mrb[0].mxu0
        %v2867 = vpop.f32.mrb[0].mxu0
        %v2868 = vadd.f32 0.0, %v2867
        %v2869 = vpop.f32.mrb[0].mxu0
        %2870 = vmatprep.mubr.bf16.mxu0 0
        %2871 = vmatmul.mubr.bf16.gmra.mrb[0].mxu0 %v2773
        %v2872 = vpop.f32.mrb[0].mxu0
        %v2873 = vadd.f32 0.0, %v2872
        %v2874 = vpop.f32.mrb[0].mxu0
        %v2875 = vpop.f32.mrb[0].mxu0
        %v2876 = vadd.f32 0.0, %v2875
        %v2877 = vpop.f32.mrb[0].mxu0
        %2878 = vmatprep.mubr.bf16.mxu0 0
        %2879 = vmatmul.mubr.bf16.gmra.mrb[0].mxu0 %v2776
        %v2880 = vpop.f32.mrb[0].mxu0
        %v2881 = vadd.f32 0.0, %v2880
        %v2882 = vpop.f32.mrb[0].mxu0
        %v2883 = vpop.f32.mrb[0].mxu0
        %v2884 = vadd.f32 0.0, %v2883
        %v2885 = vpop.f32.mrb[0].mxu0
        %2886 = vmatprep.mubr.bf16.mxu0 0
        %2887 = vmatmul.mubr.bf16.gmra.mrb[0].mxu0 %v2779
        %v2888 = vpop.f32.mrb[0].mxu0
        %v2889 = vadd.f32 0.0, %v2888
        %v2890 = vpop.f32.mrb[0].mxu0
        %v2891 = vpop.f32.mrb[0].mxu0
        %v2892 = vadd.f32 0.0, %v2891
        %v2893 = vpop.f32.mrb[0].mxu0
        %2894 = vmatprep.mubr.bf16.mxu0 0
        %2895 = vmatmul.mubr.bf16.gmra.mrb[0].mxu0 %v2782
        %v2896 = vpop.f32.mrb[0].mxu0
        %v2897 = vadd.f32 0.0, %v2896
        %v2898 = vpop.f32.mrb[0].mxu0
        %v2899 = vpop.f32.mrb[0].mxu0
        %v2900 = vadd.f32 0.0, %v2899
        %v2901 = vpop.f32.mrb[0].mxu0
        %2902 = vmatprep.mubr.bf16.mxu0 0
        %2903 = vmatmul.mubr.bf16.gmra.mrb[0].mxu0 %v2785
        %v2904 = vpop.f32.mrb[0].mxu0
        %v2905 = vadd.f32 0.0, %v2904
        %v2906 = vpop.f32.mrb[0].mxu0
        %v2907 = vpop.f32.mrb[0].mxu0
        %v2908 = vadd.f32 0.0, %v2907
        %v2909 = vpop.f32.mrb[0].mxu0
        %2910 = vmatprep.mubr.bf16.mxu0 0
        %2911 = vmatmul.mubr.bf16.gmra.mrb[0].mxu0 %v2788
        %v2912 = vpop.f32.mrb[0].mxu0
        %v2913 = vadd.f32 0.0, %v2912
        %v2914 = vpop.f32.mrb[0].mxu0
        %v2915 = vpop.f32.mrb[0].mxu0
        %v2916 = vadd.f32 0.0, %v2915
        %v2917 = vpop.f32.mrb[0].mxu0
        %2918 = vmatprep.mubr.bf16.mxu0 0
        %2919 = vmatmul.mubr.bf16.gmra.mrb[0].mxu0 %v2791
        %v2920 = vpop.f32.mrb[0].mxu0
        %v2921 = vadd.f32 0.0, %v2920
        %v2922 = vpop.f32.mrb[0].mxu0
        %v2923 = vpop.f32.mrb[0].mxu0
        %v2924 = vadd.f32 0.0, %v2923
        %v2925 = vpop.f32.mrb[0].mxu0
        %2926 = vmatprep.mubr.bf16.mxu0 0
        %2927 = vmatmul.mubr.bf16.gmra.mrb[0].mxu0 %v2794
        %v2928 = vpop.f32.mrb[0].mxu0
        %v2929 = vadd.f32 0.0, %v2928
        %v2930 = vpop.f32.mrb[0].mxu0
        %v2931 = vpop.f32.mrb[0].mxu0
        %v2932 = vadd.f32 0.0, %v2931
        %v2933 = vpop.f32.mrb[0].mxu0
        %2934 = vmatprep.mubr.bf16.mxu0 0
        %2935 = vmatmul.mubr.bf16.gmra.mrb[0].mxu0 %v2797
        %v2936 = vpop.f32.mrb[0].mxu0
        %v2937 = vadd.f32 0.0, %v2936
        %v2938 = vpop.f32.mrb[0].mxu0
        %v2939 = vpop.f32.mrb[0].mxu0
        %v2940 = vadd.f32 0.0, %v2939
        %v2941 = vpop.f32.mrb[0].mxu0
        %2942 = vmatprep.mubr.bf16.mxu0 0
        %2943 = vmatmul.mubr.bf16.gmra.mrb[0].mxu0 %v2800
        %v2944 = vpop.f32.mrb[0].mxu0
        %v2945 = vadd.f32 0.0, %v2944
        %v2946 = vpop.f32.mrb[0].mxu0
        %v2947 = vpop.f32.mrb[0].mxu0
        %v2948 = vadd.f32 0.0, %v2947
        %v2949 = vpop.f32.mrb[0].mxu0
        %2950 = vmatprep.mubr.bf16.mxu0 0
        %2951 = vmatmul.mubr.bf16.gmra.mrb[0].mxu0 %v2803
        %v2952 = vpop.f32.mrb[0].mxu0
        %v2953 = vadd.f32 0.0, %v2952
        %v2954 = vpop.f32.mrb[0].mxu0
        %v2955 = vpop.f32.mrb[0].mxu0
        %v2956 = vadd.f32 0.0, %v2955
        %v2957 = vpop.f32.mrb[0].mxu0
        %2958 = vmatprep.mubr.bf16.mxu0 0
        %2959 = vmatmul.mubr.bf16.gmra.mrb[0].mxu0 %v2806
        %v2960 = vpop.f32.mrb[0].mxu0
        %v2961 = vadd.f32 0.0, %v2960
        %v2962 = vpop.f32.mrb[0].mxu0
        %v2963 = vpop.f32.mrb[0].mxu0
        %v2964 = vadd.f32 0.0, %v2963
        %v2965 = vpop.f32.mrb[0].mxu0
        %2966 = vmatprep.mubr.bf16.mxu0 0
        %2967 = vmatmul.mubr.bf16.gmra.mrb[0].mxu0 %v2809
        %v2968 = vpop.f32.mrb[0].mxu0
        %v2969 = vadd.f32 0.0, %v2968
        %v2970 = vpop.f32.mrb[0].mxu0
        %v2971 = vpop.f32.mrb[0].mxu0
        %v2972 = vadd.f32 0.0, %v2971
        %v2973 = vpop.f32.mrb[0].mxu0
        %2974 = vdwg.mxu0
        %v2975 = vadd.f32 %v2559, %v2849
        %v2976 = vadd.f32 %v2560, %v2852
        %v2977 = vadd.f32 %v2561, %v2857
        %v2978 = vadd.f32 %v2562, %v2860
        %v2979 = vadd.f32 %v2563, %v2865
        %v2980 = vadd.f32 %v2564, %v2868
        %v2981 = vadd.f32 %v2565, %v2873
        %v2982 = vadd.f32 %v2566, %v2876
        %v2983 = vadd.f32 %v2567, %v2881
        %v2984 = vadd.f32 %v2568, %v2884
        %v2985 = vadd.f32 %v2569, %v2889
        %v2986 = vadd.f32 %v2570, %v2892
        %v2987 = vadd.f32 %v2571, %v2897
        %v2988 = vadd.f32 %v2572, %v2900
        %v2989 = vadd.f32 %v2573, %v2905
        %v2990 = vadd.f32 %v2574, %v2908
        %v2991 = vadd.f32 %v2575, %v2913
        %v2992 = vadd.f32 %v2576, %v2916
        %v2993 = vadd.f32 %v2577, %v2921
        %v2994 = vadd.f32 %v2578, %v2924
        %v2995 = vadd.f32 %v2579, %v2929
        %v2996 = vadd.f32 %v2580, %v2932
        %v2997 = vadd.f32 %v2581, %v2937
        %v2998 = vadd.f32 %v2582, %v2940
        %v2999 = vadd.f32 %v2583, %v2945
        %v3000 = vadd.f32 %v2584, %v2948
        %v3001 = vadd.f32 %v2585, %v2953
        %v3002 = vadd.f32 %v2586, %v2956
        %v3003 = vadd.f32 %v2587, %v2961
        %v3004 = vadd.f32 %v2588, %v2964
        %v3005 = vadd.f32 %v2589, %v2969
        %v3006 = vadd.f32 %v2590, %v2972
        %3007 = vst [vmem:[#allocation3] sm:$0xff] %v2975
        %3008 = vst [vmem:[#allocation3 + $0x8] sm:$0xff] %v2976
        %3009 = vst [vmem:[#allocation3 + $0x10] sm:$0xff] %v2977
        %3010 = vst [vmem:[#allocation3 + $0x18] sm:$0xff] %v2978
        %3011 = vst [vmem:[#allocation3 + $0x20] sm:$0xff] %v2979
        %3012 = vst [vmem:[#allocation3 + $0x28] sm:$0xff] %v2980
        %3013 = vst [vmem:[#allocation3 + $0x30] sm:$0xff] %v2981
        %3014 = vst [vmem:[#allocation3 + $0x38] sm:$0xff] %v2982
        %3015 = vst [vmem:[#allocation3 + $0x40] sm:$0xff] %v2983
        %3016 = vst [vmem:[#allocation3 + $0x48] sm:$0xff] %v2984
        %3017 = vst [vmem:[#allocation3 + $0x50] sm:$0xff] %v2985
        %3018 = vst [vmem:[#allocation3 + $0x58] sm:$0xff] %v2986
        %3019 = vst [vmem:[#allocation3 + $0x60] sm:$0xff] %v2987
        %3020 = vst [vmem:[#allocation3 + $0x68] sm:$0xff] %v2988
        %3021 = vst [vmem:[#allocation3 + $0x70] sm:$0xff] %v2989
        %3022 = vst [vmem:[#allocation3 + $0x78] sm:$0xff] %v2990
        %3023 = vst [vmem:[#allocation3 + $0x80] sm:$0xff] %v2991
        %3024 = vst [vmem:[#allocation3 + $0x88] sm:$0xff] %v2992
        %3025 = vst [vmem:[#allocation3 + $0x90] sm:$0xff] %v2993
        %3026 = vst [vmem:[#allocation3 + $0x98] sm:$0xff] %v2994
        %3027 = vst [vmem:[#allocation3 + $0xa0] sm:$0xff] %v2995
        %3028 = vst [vmem:[#allocation3 + $0xa8] sm:$0xff] %v2996
        %3029 = vst [vmem:[#allocation3 + $0xb0] sm:$0xff] %v2997
        %3030 = vst [vmem:[#allocation3 + $0xb8] sm:$0xff] %v2998
        %3031 = vst [vmem:[#allocation3 + $0xc0] sm:$0xff] %v2999
        %3032 = vst [vmem:[#allocation3 + $0xc8] sm:$0xff] %v3000
        %3033 = vst [vmem:[#allocation3 + $0xd0] sm:$0xff] %v3001
        %3034 = vst [vmem:[#allocation3 + $0xd8] sm:$0xff] %v3002
        %3035 = vst [vmem:[#allocation3 + $0xe0] sm:$0xff] %v3003
        %3036 = vst [vmem:[#allocation3 + $0xe8] sm:$0xff] %v3004
        %3037 = vst [vmem:[#allocation3 + $0xf0] sm:$0xff] %v3005
        %3038 = vst [vmem:[#allocation3 + $0xf8] sm:$0xff] %v3006
        %v3039 = vld [vmem:[#allocation3] sm:$0xff]
        %v3040 = vld [vmem:[#allocation3 + $0x8] sm:$0xff]
        %v3041 = vld [vmem:[#allocation3 + $0x10] sm:$0xff]
        %v3042 = vld [vmem:[#allocation3 + $0x18] sm:$0xff]
        %v3043 = vld [vmem:[#allocation3 + $0x20] sm:$0xff]
        %v3044 = vld [vmem:[#allocation3 + $0x28] sm:$0xff]
        %v3045 = vld [vmem:[#allocation3 + $0x30] sm:$0xff]
        %v3046 = vld [vmem:[#allocation3 + $0x38] sm:$0xff]
        %v3047 = vld [vmem:[#allocation3 + $0x40] sm:$0xff]
        %v3048 = vld [vmem:[#allocation3 + $0x48] sm:$0xff]
        %v3049 = vld [vmem:[#allocation3 + $0x50] sm:$0xff]
        %v3050 = vld [vmem:[#allocation3 + $0x58] sm:$0xff]
        %v3051 = vld [vmem:[#allocation3 + $0x60] sm:$0xff]
        %v3052 = vld [vmem:[#allocation3 + $0x68] sm:$0xff]
        %v3053 = vld [vmem:[#allocation3 + $0x70] sm:$0xff]
        %v3054 = vld [vmem:[#allocation3 + $0x78] sm:$0xff]
        %v3055 = vld [vmem:[#allocation3 + $0x80] sm:$0xff]
        %v3056 = vld [vmem:[#allocation3 + $0x88] sm:$0xff]
        %v3057 = vld [vmem:[#allocation3 + $0x90] sm:$0xff]
        %v3058 = vld [vmem:[#allocation3 + $0x98] sm:$0xff]
        %v3059 = vld [vmem:[#allocation3 + $0xa0] sm:$0xff]
        %v3060 = vld [vmem:[#allocation3 + $0xa8] sm:$0xff]
        %v3061 = vld [vmem:[#allocation3 + $0xb0] sm:$0xff]
        %v3062 = vld [vmem:[#allocation3 + $0xb8] sm:$0xff]
        %v3063 = vld [vmem:[#allocation3 + $0xc0] sm:$0xff]
        %v3064 = vld [vmem:[#allocation3 + $0xc8] sm:$0xff]
        %v3065 = vld [vmem:[#allocation3 + $0xd0] sm:$0xff]
        %v3066 = vld [vmem:[#allocation3 + $0xd8] sm:$0xff]
        %v3067 = vld [vmem:[#allocation3 + $0xe0] sm:$0xff]
        %v3068 = vld [vmem:[#allocation3 + $0xe8] sm:$0xff]
        %v3069 = vld [vmem:[#allocation3 + $0xf0] sm:$0xff]
        %v3070 = vld [vmem:[#allocation3 + $0xf8] sm:$0xff]
        %v3071 = vld [vmem:[#allocation2 + $0x30] sm:$0x80]
        %v3072 = vld [vmem:[#allocation2 + $0x38] sm:$0xff]
        %v3073 = vld [vmem:[#allocation2 + $0x40] sm:$0xff]
        %v3074 = vld [vmem:[#allocation2 + $0x48] sm:$0xff]
        %v3075 = vld [vmem:[#allocation2 + $0x50] sm:$0xff]
        %v3076 = vld [vmem:[#allocation2 + $0x58] sm:$0xff]
        %v3077 = vld [vmem:[#allocation2 + $0x60] sm:$0xff]
        %v3078 = vld [vmem:[#allocation2 + $0x68] sm:$0xff]
        %v3079 = vld [vmem:[#allocation2 + $0x70] sm:$0xff]
        %v3080 = vld [vmem:[#allocation2 + $0x78] sm:$0xff]
        %v3081 = vld [vmem:[#allocation2 + $0x80] sm:$0xff]
        %v3082 = vld [vmem:[#allocation2 + $0x88] sm:$0xff]
        %v3083 = vld [vmem:[#allocation2 + $0x90] sm:$0xff]
        %v3084 = vld [vmem:[#allocation2 + $0x98] sm:$0xff]
        %v3085 = vld [vmem:[#allocation2 + $0xa0] sm:$0xff]
        %v3086 = vld [vmem:[#allocation2 + $0xa8] sm:$0xff]
        %v3087 = vld [vmem:[#allocation2 + $0xb0] sm:$0x7f]
        %s3088 = scalar_lea.vmem %s2, 12
        %v3089 = vld [vmem:[%s3088] sm:$0x3]
        %vm3107 = vcmask 1040384
        %v3108 = vrot.slane %v3071, 7
        %v3109 = vrot.slane %v3072, 7
        %v3110 = vsel %vm3107, %v3108, %v3109
        %v3111 = vrot.slane %v3073, 7
        %v3112 = vsel %vm3107, %v3109, %v3111
        %v3113 = vrot.slane %v3074, 7
        %v3114 = vsel %vm3107, %v3111, %v3113
        %v3115 = vrot.slane %v3075, 7
        %v3116 = vsel %vm3107, %v3113, %v3115
        %v3117 = vrot.slane %v3076, 7
        %v3118 = vsel %vm3107, %v3115, %v3117
        %v3119 = vrot.slane %v3077, 7
        %v3120 = vsel %vm3107, %v3117, %v3119
        %v3121 = vrot.slane %v3078, 7
        %v3122 = vsel %vm3107, %v3119, %v3121
        %v3123 = vrot.slane %v3079, 7
        %v3124 = vsel %vm3107, %v3121, %v3123
        %v3125 = vrot.slane %v3080, 7
        %v3126 = vsel %vm3107, %v3123, %v3125
        %v3127 = vrot.slane %v3081, 7
        %v3128 = vsel %vm3107, %v3125, %v3127
        %v3129 = vrot.slane %v3082, 7
        %v3130 = vsel %vm3107, %v3127, %v3129
        %v3131 = vrot.slane %v3083, 7
        %v3132 = vsel %vm3107, %v3129, %v3131
        %v3133 = vrot.slane %v3084, 7
        %v3134 = vsel %vm3107, %v3131, %v3133
        %v3135 = vrot.slane %v3085, 7
        %v3136 = vsel %vm3107, %v3133, %v3135
        %v3137 = vrot.slane %v3086, 7
        %v3138 = vsel %vm3107, %v3135, %v3137
        %v3139 = vrot.slane %v3087, 7
        %v3140 = vsel %vm3107, %v3137, %v3139
        %v3142 = vsel %vm440, %v3110, 0
        %v3145 = vsel %vm440, %v3112, 0
        %v3148 = vsel %vm440, %v3114, 0
        %v3151 = vsel %vm440, %v3116, 0
        %v3154 = vsel %vm440, %v3118, 0
        %v3157 = vsel %vm440, %v3120, 0
        %v3160 = vsel %vm440, %v3122, 0
        %v3163 = vsel %vm440, %v3124, 0
        %v3166 = vsel %vm440, %v3126, 0
        %v3169 = vsel %vm440, %v3128, 0
        %v3172 = vsel %vm440, %v3130, 0
        %v3175 = vsel %vm440, %v3132, 0
        %v3178 = vsel %vm440, %v3134, 0
        %v3181 = vsel %vm440, %v3136, 0
        %v3184 = vsel %vm440, %v3138, 0
        %v3187 = vsel %vm440, %v3140, 0
        %v3190 = vsel %vm666, %v3089, 0
        %3192 = vmatprep.subr.bf16.mxu0 0
        %3193 = vmatpush1.bf16.msra.mxu0 %v3190
        %3194 = vmatprep.subr.bf16.mxu0 0
        %3195 = vmatpush1.bf16.msra.mxu0 0
        %3196 = vmatprep.subr.bf16.mxu0 0
        %3197 = vmatpush1.bf16.msra.mxu0 0
        %3198 = vmatprep.subr.bf16.mxu0 0
        %3199 = vmatpush1.bf16.msra.mxu0 0
        %3200 = vmatprep.subr.bf16.mxu0 0
        %3201 = vmatpush1.bf16.msra.mxu0 0
        %3202 = vmatprep.subr.bf16.mxu0 0
        %3203 = vmatpush1.bf16.msra.mxu0 0
        %3204 = vmatprep.subr.bf16.mxu0 0
        %3205 = vmatpush1.bf16.msra.mxu0 0
        %3206 = vmatprep.subr.bf16.mxu0 0
        %3207 = vmatpush1.bf16.msra.mxu0 0
        %3208 = vmatprep.subr.bf16.mxu0 0
        %3209 = vmatpush1.bf16.msra.mxu0 0
        %3210 = vmatprep.subr.bf16.mxu0 0
        %3211 = vmatpush1.bf16.msra.mxu0 0
        %3212 = vmatprep.subr.bf16.mxu0 0
        %3213 = vmatpush1.bf16.msra.mxu0 0
        %3214 = vmatprep.subr.bf16.mxu0 0
        %3215 = vmatpush1.bf16.msra.mxu0 0
        %3216 = vmatprep.subr.bf16.mxu0 0
        %3217 = vmatpush1.bf16.msra.mxu0 0
        %3218 = vmatprep.subr.bf16.mxu0 0
        %3219 = vmatpush1.bf16.msra.mxu0 0
        %3220 = vmatprep.subr.bf16.mxu0 0
        %3221 = vmatpush1.bf16.msra.mxu0 0
        %3222 = vmatprep.subr.bf16.mxu0 0
        %3223 = vmatpush1.bf16.msra.mxu0 0
        %3224 = vmatprep.mubr.bf16.mxu0 0
        %3225 = vmatmul.mubr.bf16.gmra.mrb[0].mxu0 %v3142
        %v3226 = vpop.f32.mrb[0].mxu0
        %v3227 = vadd.f32 0.0, %v3226
        %v3228 = vpop.f32.mrb[0].mxu0
        %v3229 = vpop.f32.mrb[0].mxu0
        %v3230 = vadd.f32 0.0, %v3229
        %v3231 = vpop.f32.mrb[0].mxu0
        %3232 = vmatprep.mubr.bf16.mxu0 0
        %3233 = vmatmul.mubr.bf16.gmra.mrb[0].mxu0 %v3145
        %v3234 = vpop.f32.mrb[0].mxu0
        %v3235 = vadd.f32 0.0, %v3234
        %v3236 = vpop.f32.mrb[0].mxu0
        %v3237 = vpop.f32.mrb[0].mxu0
        %v3238 = vadd.f32 0.0, %v3237
        %v3239 = vpop.f32.mrb[0].mxu0
        %3240 = vmatprep.mubr.bf16.mxu0 0
        %3241 = vmatmul.mubr.bf16.gmra.mrb[0].mxu0 %v3148
        %v3242 = vpop.f32.mrb[0].mxu0
        %v3243 = vadd.f32 0.0, %v3242
        %v3244 = vpop.f32.mrb[0].mxu0
        %v3245 = vpop.f32.mrb[0].mxu0
        %v3246 = vadd.f32 0.0, %v3245
        %v3247 = vpop.f32.mrb[0].mxu0
        %3248 = vmatprep.mubr.bf16.mxu0 0
        %3249 = vmatmul.mubr.bf16.gmra.mrb[0].mxu0 %v3151
        %v3250 = vpop.f32.mrb[0].mxu0
        %v3251 = vadd.f32 0.0, %v3250
        %v3252 = vpop.f32.mrb[0].mxu0
        %v3253 = vpop.f32.mrb[0].mxu0
        %v3254 = vadd.f32 0.0, %v3253
        %v3255 = vpop.f32.mrb[0].mxu0
        %3256 = vmatprep.mubr.bf16.mxu0 0
        %3257 = vmatmul.mubr.bf16.gmra.mrb[0].mxu0 %v3154
        %v3258 = vpop.f32.mrb[0].mxu0
        %v3259 = vadd.f32 0.0, %v3258
        %v3260 = vpop.f32.mrb[0].mxu0
        %v3261 = vpop.f32.mrb[0].mxu0
        %v3262 = vadd.f32 0.0, %v3261
        %v3263 = vpop.f32.mrb[0].mxu0
        %3264 = vmatprep.mubr.bf16.mxu0 0
        %3265 = vmatmul.mubr.bf16.gmra.mrb[0].mxu0 %v3157
        %v3266 = vpop.f32.mrb[0].mxu0
        %v3267 = vadd.f32 0.0, %v3266
        %v3268 = vpop.f32.mrb[0].mxu0
        %v3269 = vpop.f32.mrb[0].mxu0
        %v3270 = vadd.f32 0.0, %v3269
        %v3271 = vpop.f32.mrb[0].mxu0
        %3272 = vmatprep.mubr.bf16.mxu0 0
        %3273 = vmatmul.mubr.bf16.gmra.mrb[0].mxu0 %v3160
        %v3274 = vpop.f32.mrb[0].mxu0
        %v3275 = vadd.f32 0.0, %v3274
        %v3276 = vpop.f32.mrb[0].mxu0
        %v3277 = vpop.f32.mrb[0].mxu0
        %v3278 = vadd.f32 0.0, %v3277
        %v3279 = vpop.f32.mrb[0].mxu0
        %3280 = vmatprep.mubr.bf16.mxu0 0
        %3281 = vmatmul.mubr.bf16.gmra.mrb[0].mxu0 %v3163
        %v3282 = vpop.f32.mrb[0].mxu0
        %v3283 = vadd.f32 0.0, %v3282
        %v3284 = vpop.f32.mrb[0].mxu0
        %v3285 = vpop.f32.mrb[0].mxu0
        %v3286 = vadd.f32 0.0, %v3285
        %v3287 = vpop.f32.mrb[0].mxu0
        %3288 = vmatprep.mubr.bf16.mxu0 0
        %3289 = vmatmul.mubr.bf16.gmra.mrb[0].mxu0 %v3166
        %v3290 = vpop.f32.mrb[0].mxu0
        %v3291 = vadd.f32 0.0, %v3290
        %v3292 = vpop.f32.mrb[0].mxu0
        %v3293 = vpop.f32.mrb[0].mxu0
        %v3294 = vadd.f32 0.0, %v3293
        %v3295 = vpop.f32.mrb[0].mxu0
        %3296 = vmatprep.mubr.bf16.mxu0 0
        %3297 = vmatmul.mubr.bf16.gmra.mrb[0].mxu0 %v3169
        %v3298 = vpop.f32.mrb[0].mxu0
        %v3299 = vadd.f32 0.0, %v3298
        %v3300 = vpop.f32.mrb[0].mxu0
        %v3301 = vpop.f32.mrb[0].mxu0
        %v3302 = vadd.f32 0.0, %v3301
        %v3303 = vpop.f32.mrb[0].mxu0
        %3304 = vmatprep.mubr.bf16.mxu0 0
        %3305 = vmatmul.mubr.bf16.gmra.mrb[0].mxu0 %v3172
        %v3306 = vpop.f32.mrb[0].mxu0
        %v3307 = vadd.f32 0.0, %v3306
        %v3308 = vpop.f32.mrb[0].mxu0
        %v3309 = vpop.f32.mrb[0].mxu0
        %v3310 = vadd.f32 0.0, %v3309
        %v3311 = vpop.f32.mrb[0].mxu0
        %3312 = vmatprep.mubr.bf16.mxu0 0
        %3313 = vmatmul.mubr.bf16.gmra.mrb[0].mxu0 %v3175
        %v3314 = vpop.f32.mrb[0].mxu0
        %v3315 = vadd.f32 0.0, %v3314
        %v3316 = vpop.f32.mrb[0].mxu0
        %v3317 = vpop.f32.mrb[0].mxu0
        %v3318 = vadd.f32 0.0, %v3317
        %v3319 = vpop.f32.mrb[0].mxu0
        %3320 = vmatprep.mubr.bf16.mxu0 0
        %3321 = vmatmul.mubr.bf16.gmra.mrb[0].mxu0 %v3178
        %v3322 = vpop.f32.mrb[0].mxu0
        %v3323 = vadd.f32 0.0, %v3322
        %v3324 = vpop.f32.mrb[0].mxu0
        %v3325 = vpop.f32.mrb[0].mxu0
        %v3326 = vadd.f32 0.0, %v3325
        %v3327 = vpop.f32.mrb[0].mxu0
        %3328 = vmatprep.mubr.bf16.mxu0 0
        %3329 = vmatmul.mubr.bf16.gmra.mrb[0].mxu0 %v3181
        %v3330 = vpop.f32.mrb[0].mxu0
        %v3331 = vadd.f32 0.0, %v3330
        %v3332 = vpop.f32.mrb[0].mxu0
        %v3333 = vpop.f32.mrb[0].mxu0
        %v3334 = vadd.f32 0.0, %v3333
        %v3335 = vpop.f32.mrb[0].mxu0
        %3336 = vmatprep.mubr.bf16.mxu0 0
        %3337 = vmatmul.mubr.bf16.gmra.mrb[0].mxu0 %v3184
        %v3338 = vpop.f32.mrb[0].mxu0
        %v3339 = vadd.f32 0.0, %v3338
        %v3340 = vpop.f32.mrb[0].mxu0
        %v3341 = vpop.f32.mrb[0].mxu0
        %v3342 = vadd.f32 0.0, %v3341
        %v3343 = vpop.f32.mrb[0].mxu0
        %3344 = vmatprep.mubr.bf16.mxu0 0
        %3345 = vmatmul.mubr.bf16.gmra.mrb[0].mxu0 %v3187
        %v3346 = vpop.f32.mrb[0].mxu0
        %v3347 = vadd.f32 0.0, %v3346
        %v3348 = vpop.f32.mrb[0].mxu0
        %v3349 = vpop.f32.mrb[0].mxu0
        %v3350 = vadd.f32 0.0, %v3349
        %v3351 = vpop.f32.mrb[0].mxu0
        %3352 = vdwg.mxu0
        %v3353 = vadd.f32 %v3039, %v3227
        %v3354 = vadd.f32 %v3040, %v3230
        %v3355 = vadd.f32 %v3041, %v3235
        %v3356 = vadd.f32 %v3042, %v3238
        %v3357 = vadd.f32 %v3043, %v3243
        %v3358 = vadd.f32 %v3044, %v3246
        %v3359 = vadd.f32 %v3045, %v3251
        %v3360 = vadd.f32 %v3046, %v3254
        %v3361 = vadd.f32 %v3047, %v3259
        %v3362 = vadd.f32 %v3048, %v3262
        %v3363 = vadd.f32 %v3049, %v3267
        %v3364 = vadd.f32 %v3050, %v3270
        %v3365 = vadd.f32 %v3051, %v3275
        %v3366 = vadd.f32 %v3052, %v3278
        %v3367 = vadd.f32 %v3053, %v3283
        %v3368 = vadd.f32 %v3054, %v3286
        %v3369 = vadd.f32 %v3055, %v3291
        %v3370 = vadd.f32 %v3056, %v3294
        %v3371 = vadd.f32 %v3057, %v3299
        %v3372 = vadd.f32 %v3058, %v3302
        %v3373 = vadd.f32 %v3059, %v3307
        %v3374 = vadd.f32 %v3060, %v3310
        %v3375 = vadd.f32 %v3061, %v3315
        %v3376 = vadd.f32 %v3062, %v3318
        %v3377 = vadd.f32 %v3063, %v3323
        %v3378 = vadd.f32 %v3064, %v3326
        %v3379 = vadd.f32 %v3065, %v3331
        %v3380 = vadd.f32 %v3066, %v3334
        %v3381 = vadd.f32 %v3067, %v3339
        %v3382 = vadd.f32 %v3068, %v3342
        %v3383 = vadd.f32 %v3069, %v3347
        %v3384 = vadd.f32 %v3070, %v3350
        %3385 = vst [vmem:[#allocation3] sm:$0xff] %v3353
        %3386 = vst [vmem:[#allocation3 + $0x8] sm:$0xff] %v3354
        %3387 = vst [vmem:[#allocation3 + $0x10] sm:$0xff] %v3355
        %3388 = vst [vmem:[#allocation3 + $0x18] sm:$0xff] %v3356
        %3389 = vst [vmem:[#allocation3 + $0x20] sm:$0xff] %v3357
        %3390 = vst [vmem:[#allocation3 + $0x28] sm:$0xff] %v3358
        %3391 = vst [vmem:[#allocation3 + $0x30] sm:$0xff] %v3359
        %3392 = vst [vmem:[#allocation3 + $0x38] sm:$0xff] %v3360
        %3393 = vst [vmem:[#allocation3 + $0x40] sm:$0xff] %v3361
        %3394 = vst [vmem:[#allocation3 + $0x48] sm:$0xff] %v3362
        %3395 = vst [vmem:[#allocation3 + $0x50] sm:$0xff] %v3363
        %3396 = vst [vmem:[#allocation3 + $0x58] sm:$0xff] %v3364
        %3397 = vst [vmem:[#allocation3 + $0x60] sm:$0xff] %v3365
        %3398 = vst [vmem:[#allocation3 + $0x68] sm:$0xff] %v3366
        %3399 = vst [vmem:[#allocation3 + $0x70] sm:$0xff] %v3367
        %3400 = vst [vmem:[#allocation3 + $0x78] sm:$0xff] %v3368
        %3401 = vst [vmem:[#allocation3 + $0x80] sm:$0xff] %v3369
        %3402 = vst [vmem:[#allocation3 + $0x88] sm:$0xff] %v3370
        %3403 = vst [vmem:[#allocation3 + $0x90] sm:$0xff] %v3371
        %3404 = vst [vmem:[#allocation3 + $0x98] sm:$0xff] %v3372
        %3405 = vst [vmem:[#allocation3 + $0xa0] sm:$0xff] %v3373
        %3406 = vst [vmem:[#allocation3 + $0xa8] sm:$0xff] %v3374
        %3407 = vst [vmem:[#allocation3 + $0xb0] sm:$0xff] %v3375
        %3408 = vst [vmem:[#allocation3 + $0xb8] sm:$0xff] %v3376
        %3409 = vst [vmem:[#allocation3 + $0xc0] sm:$0xff] %v3377
        %3410 = vst [vmem:[#allocation3 + $0xc8] sm:$0xff] %v3378
        %3411 = vst [vmem:[#allocation3 + $0xd0] sm:$0xff] %v3379
        %3412 = vst [vmem:[#allocation3 + $0xd8] sm:$0xff] %v3380
        %3413 = vst [vmem:[#allocation3 + $0xe0] sm:$0xff] %v3381
        %3414 = vst [vmem:[#allocation3 + $0xe8] sm:$0xff] %v3382
        %3415 = vst [vmem:[#allocation3 + $0xf0] sm:$0xff] %v3383
        %3416 = vst [vmem:[#allocation3 + $0xf8] sm:$0xff] %v3384
        %v3417 = vld [vmem:[#allocation3] sm:$0xff]
        %v3418 = vld [vmem:[#allocation3 + $0x8] sm:$0xff]
        %v3419 = vld [vmem:[#allocation3 + $0x10] sm:$0xff]
        %v3420 = vld [vmem:[#allocation3 + $0x18] sm:$0xff]
        %v3421 = vld [vmem:[#allocation3 + $0x20] sm:$0xff]
        %v3422 = vld [vmem:[#allocation3 + $0x28] sm:$0xff]
        %v3423 = vld [vmem:[#allocation3 + $0x30] sm:$0xff]
        %v3424 = vld [vmem:[#allocation3 + $0x38] sm:$0xff]
        %v3425 = vld [vmem:[#allocation3 + $0x40] sm:$0xff]
        %v3426 = vld [vmem:[#allocation3 + $0x48] sm:$0xff]
        %v3427 = vld [vmem:[#allocation3 + $0x50] sm:$0xff]
        %v3428 = vld [vmem:[#allocation3 + $0x58] sm:$0xff]
        %v3429 = vld [vmem:[#allocation3 + $0x60] sm:$0xff]
        %v3430 = vld [vmem:[#allocation3 + $0x68] sm:$0xff]
        %v3431 = vld [vmem:[#allocation3 + $0x70] sm:$0xff]
        %v3432 = vld [vmem:[#allocation3 + $0x78] sm:$0xff]
        %v3433 = vld [vmem:[#allocation3 + $0x80] sm:$0xff]
        %v3434 = vld [vmem:[#allocation3 + $0x88] sm:$0xff]
        %v3435 = vld [vmem:[#allocation3 + $0x90] sm:$0xff]
        %v3436 = vld [vmem:[#allocation3 + $0x98] sm:$0xff]
        %v3437 = vld [vmem:[#allocation3 + $0xa0] sm:$0xff]
        %v3438 = vld [vmem:[#allocation3 + $0xa8] sm:$0xff]
        %v3439 = vld [vmem:[#allocation3 + $0xb0] sm:$0xff]
        %v3440 = vld [vmem:[#allocation3 + $0xb8] sm:$0xff]
        %v3441 = vld [vmem:[#allocation3 + $0xc0] sm:$0xff]
        %v3442 = vld [vmem:[#allocation3 + $0xc8] sm:$0xff]
        %v3443 = vld [vmem:[#allocation3 + $0xd0] sm:$0xff]
        %v3444 = vld [vmem:[#allocation3 + $0xd8] sm:$0xff]
        %v3445 = vld [vmem:[#allocation3 + $0xe0] sm:$0xff]
        %v3446 = vld [vmem:[#allocation3 + $0xe8] sm:$0xff]
        %v3447 = vld [vmem:[#allocation3 + $0xf0] sm:$0xff]
        %v3448 = vld [vmem:[#allocation3 + $0xf8] sm:$0xff]
        %v3449 = vld [vmem:[#allocation2 + $0x30] sm:$0x80]
        %v3450 = vld [vmem:[#allocation2 + $0x38] sm:$0xff]
        %v3451 = vld [vmem:[#allocation2 + $0x40] sm:$0xff]
        %v3452 = vld [vmem:[#allocation2 + $0x48] sm:$0xff]
        %v3453 = vld [vmem:[#allocation2 + $0x50] sm:$0xff]
        %v3454 = vld [vmem:[#allocation2 + $0x58] sm:$0xff]
        %v3455 = vld [vmem:[#allocation2 + $0x60] sm:$0xff]
        %v3456 = vld [vmem:[#allocation2 + $0x68] sm:$0xff]
        %v3457 = vld [vmem:[#allocation2 + $0x70] sm:$0xff]
        %v3458 = vld [vmem:[#allocation2 + $0x78] sm:$0xff]
        %v3459 = vld [vmem:[#allocation2 + $0x80] sm:$0xff]
        %v3460 = vld [vmem:[#allocation2 + $0x88] sm:$0xff]
        %v3461 = vld [vmem:[#allocation2 + $0x90] sm:$0xff]
        %v3462 = vld [vmem:[#allocation2 + $0x98] sm:$0xff]
        %v3463 = vld [vmem:[#allocation2 + $0xa0] sm:$0xff]
        %v3464 = vld [vmem:[#allocation2 + $0xa8] sm:$0xff]
        %v3465 = vld [vmem:[#allocation2 + $0xb0] sm:$0xff]
        %s3466 = scalar_lea.vmem %s2, 14
        %v3467 = vld [vmem:[%s3466] sm:$0x3]
        %vm3468 = vsmask.f32 256
        %v3470 = vshrl.u32 %v3449, 16
        %v3472 = vrot.slane %v3470, 7
        %v3474 = vshrl.u32 %v3450, 16
        %v3476 = vrot.slane %v3474, 7
        %v3477 = vshll.u32 %v3450, 16
        %v3479 = vor.u32 %v3476, %v3477
        %v3480 = vsel %vm3468, %v3472, %v3479
        %v3482 = vshrl.u32 %v3451, 16
        %v3484 = vrot.slane %v3482, 7
        %v3485 = vshll.u32 %v3451, 16
        %v3487 = vor.u32 %v3484, %v3485
        %v3488 = vsel %vm3468, %v3476, %v3487
        %v3490 = vshrl.u32 %v3452, 16
        %v3492 = vrot.slane %v3490, 7
        %v3493 = vshll.u32 %v3452, 16
        %v3495 = vor.u32 %v3492, %v3493
        %v3496 = vsel %vm3468, %v3484, %v3495
        %v3498 = vshrl.u32 %v3453, 16
        %v3500 = vrot.slane %v3498, 7
        %v3501 = vshll.u32 %v3453, 16
        %v3503 = vor.u32 %v3500, %v3501
        %v3504 = vsel %vm3468, %v3492, %v3503
        %v3506 = vshrl.u32 %v3454, 16
        %v3508 = vrot.slane %v3506, 7
        %v3509 = vshll.u32 %v3454, 16
        %v3511 = vor.u32 %v3508, %v3509
        %v3512 = vsel %vm3468, %v3500, %v3511
        %v3514 = vshrl.u32 %v3455, 16
        %v3516 = vrot.slane %v3514, 7
        %v3517 = vshll.u32 %v3455, 16
        %v3519 = vor.u32 %v3516, %v3517
        %v3520 = vsel %vm3468, %v3508, %v3519
        %v3522 = vshrl.u32 %v3456, 16
        %v3524 = vrot.slane %v3522, 7
        %v3525 = vshll.u32 %v3456, 16
        %v3527 = vor.u32 %v3524, %v3525
        %v3528 = vsel %vm3468, %v3516, %v3527
        %v3530 = vshrl.u32 %v3457, 16
        %v3532 = vrot.slane %v3530, 7
        %v3533 = vshll.u32 %v3457, 16
        %v3535 = vor.u32 %v3532, %v3533
        %v3536 = vsel %vm3468, %v3524, %v3535
        %v3538 = vshrl.u32 %v3458, 16
        %v3540 = vrot.slane %v3538, 7
        %v3541 = vshll.u32 %v3458, 16
        %v3543 = vor.u32 %v3540, %v3541
        %v3544 = vsel %vm3468, %v3532, %v3543
        %v3546 = vshrl.u32 %v3459, 16
        %v3548 = vrot.slane %v3546, 7
        %v3549 = vshll.u32 %v3459, 16
        %v3551 = vor.u32 %v3548, %v3549
        %v3552 = vsel %vm3468, %v3540, %v3551
        %v3554 = vshrl.u32 %v3460, 16
        %v3556 = vrot.slane %v3554, 7
        %v3557 = vshll.u32 %v3460, 16
        %v3559 = vor.u32 %v3556, %v3557
        %v3560 = vsel %vm3468, %v3548, %v3559
        %v3562 = vshrl.u32 %v3461, 16
        %v3564 = vrot.slane %v3562, 7
        %v3565 = vshll.u32 %v3461, 16
        %v3567 = vor.u32 %v3564, %v3565
        %v3568 = vsel %vm3468, %v3556, %v3567
        %v3570 = vshrl.u32 %v3462, 16
        %v3572 = vrot.slane %v3570, 7
        %v3573 = vshll.u32 %v3462, 16
        %v3575 = vor.u32 %v3572, %v3573
        %v3576 = vsel %vm3468, %v3564, %v3575
        %v3578 = vshrl.u32 %v3463, 16
        %v3580 = vrot.slane %v3578, 7
        %v3581 = vshll.u32 %v3463, 16
        %v3583 = vor.u32 %v3580, %v3581
        %v3584 = vsel %vm3468, %v3572, %v3583
        %v3586 = vshrl.u32 %v3464, 16
        %v3588 = vrot.slane %v3586, 7
        %v3589 = vshll.u32 %v3464, 16
        %v3591 = vor.u32 %v3588, %v3589
        %v3592 = vsel %vm3468, %v3580, %v3591
        %v3594 = vshrl.u32 %v3465, 16
        %v3596 = vrot.slane %v3594, 7
        %v3597 = vshll.u32 %v3465, 16
        %v3599 = vor.u32 %v3596, %v3597
        %v3600 = vsel %vm3468, %v3588, %v3599
        %v3602 = vsel %vm440, %v3480, 0
        %v3605 = vsel %vm440, %v3488, 0
        %v3608 = vsel %vm440, %v3496, 0
        %v3611 = vsel %vm440, %v3504, 0
        %v3614 = vsel %vm440, %v3512, 0
        %v3617 = vsel %vm440, %v3520, 0
        %v3620 = vsel %vm440, %v3528, 0
        %v3623 = vsel %vm440, %v3536, 0
        %v3626 = vsel %vm440, %v3544, 0
        %v3629 = vsel %vm440, %v3552, 0
        %v3632 = vsel %vm440, %v3560, 0
        %v3635 = vsel %vm440, %v3568, 0
        %v3638 = vsel %vm440, %v3576, 0
        %v3641 = vsel %vm440, %v3584, 0
        %v3644 = vsel %vm440, %v3592, 0
        %v3647 = vsel %vm440, %v3600, 0
        %v3650 = vsel %vm666, %v3467, 0
        %3652 = vmatprep.subr.bf16.mxu0 0
        %3653 = vmatpush1.bf16.msra.mxu0 %v3650
        %3654 = vmatprep.subr.bf16.mxu0 0
        %3655 = vmatpush1.bf16.msra.mxu0 0
        %3656 = vmatprep.subr.bf16.mxu0 0
        %3657 = vmatpush1.bf16.msra.mxu0 0
        %3658 = vmatprep.subr.bf16.mxu0 0
        %3659 = vmatpush1.bf16.msra.mxu0 0
        %3660 = vmatprep.subr.bf16.mxu0 0
        %3661 = vmatpush1.bf16.msra.mxu0 0
        %3662 = vmatprep.subr.bf16.mxu0 0
        %3663 = vmatpush1.bf16.msra.mxu0 0
        %3664 = vmatprep.subr.bf16.mxu0 0
        %3665 = vmatpush1.bf16.msra.mxu0 0
        %3666 = vmatprep.subr.bf16.mxu0 0
        %3667 = vmatpush1.bf16.msra.mxu0 0
        %3668 = vmatprep.subr.bf16.mxu0 0
        %3669 = vmatpush1.bf16.msra.mxu0 0
        %3670 = vmatprep.subr.bf16.mxu0 0
        %3671 = vmatpush1.bf16.msra.mxu0 0
        %3672 = vmatprep.subr.bf16.mxu0 0
        %3673 = vmatpush1.bf16.msra.mxu0 0
        %3674 = vmatprep.subr.bf16.mxu0 0
        %3675 = vmatpush1.bf16.msra.mxu0 0
        %3676 = vmatprep.subr.bf16.mxu0 0
        %3677 = vmatpush1.bf16.msra.mxu0 0
        %3678 = vmatprep.subr.bf16.mxu0 0
        %3679 = vmatpush1.bf16.msra.mxu0 0
        %3680 = vmatprep.subr.bf16.mxu0 0
        %3681 = vmatpush1.bf16.msra.mxu0 0
        %3682 = vmatprep.subr.bf16.mxu0 0
        %3683 = vmatpush1.bf16.msra.mxu0 0
        %3684 = vmatprep.mubr.bf16.mxu0 0
        %3685 = vmatmul.mubr.bf16.gmra.mrb[0].mxu0 %v3602
        %v3686 = vpop.f32.mrb[0].mxu0
        %v3687 = vadd.f32 0.0, %v3686
        %v3688 = vpop.f32.mrb[0].mxu0
        %v3689 = vpop.f32.mrb[0].mxu0
        %v3690 = vadd.f32 0.0, %v3689
        %v3691 = vpop.f32.mrb[0].mxu0
        %3692 = vmatprep.mubr.bf16.mxu0 0
        %3693 = vmatmul.mubr.bf16.gmra.mrb[0].mxu0 %v3605
        %v3694 = vpop.f32.mrb[0].mxu0
        %v3695 = vadd.f32 0.0, %v3694
        %v3696 = vpop.f32.mrb[0].mxu0
        %v3697 = vpop.f32.mrb[0].mxu0
        %v3698 = vadd.f32 0.0, %v3697
        %v3699 = vpop.f32.mrb[0].mxu0
        %3700 = vmatprep.mubr.bf16.mxu0 0
        %3701 = vmatmul.mubr.bf16.gmra.mrb[0].mxu0 %v3608
        %v3702 = vpop.f32.mrb[0].mxu0
        %v3703 = vadd.f32 0.0, %v3702
        %v3704 = vpop.f32.mrb[0].mxu0
        %v3705 = vpop.f32.mrb[0].mxu0
        %v3706 = vadd.f32 0.0, %v3705
        %v3707 = vpop.f32.mrb[0].mxu0
        %3708 = vmatprep.mubr.bf16.mxu0 0
        %3709 = vmatmul.mubr.bf16.gmra.mrb[0].mxu0 %v3611
        %v3710 = vpop.f32.mrb[0].mxu0
        %v3711 = vadd.f32 0.0, %v3710
        %v3712 = vpop.f32.mrb[0].mxu0
        %v3713 = vpop.f32.mrb[0].mxu0
        %v3714 = vadd.f32 0.0, %v3713
        %v3715 = vpop.f32.mrb[0].mxu0
        %3716 = vmatprep.mubr.bf16.mxu0 0
        %3717 = vmatmul.mubr.bf16.gmra.mrb[0].mxu0 %v3614
        %v3718 = vpop.f32.mrb[0].mxu0
        %v3719 = vadd.f32 0.0, %v3718
        %v3720 = vpop.f32.mrb[0].mxu0
        %v3721 = vpop.f32.mrb[0].mxu0
        %v3722 = vadd.f32 0.0, %v3721
        %v3723 = vpop.f32.mrb[0].mxu0
        %3724 = vmatprep.mubr.bf16.mxu0 0
        %3725 = vmatmul.mubr.bf16.gmra.mrb[0].mxu0 %v3617
        %v3726 = vpop.f32.mrb[0].mxu0
        %v3727 = vadd.f32 0.0, %v3726
        %v3728 = vpop.f32.mrb[0].mxu0
        %v3729 = vpop.f32.mrb[0].mxu0
        %v3730 = vadd.f32 0.0, %v3729
        %v3731 = vpop.f32.mrb[0].mxu0
        %3732 = vmatprep.mubr.bf16.mxu0 0
        %3733 = vmatmul.mubr.bf16.gmra.mrb[0].mxu0 %v3620
        %v3734 = vpop.f32.mrb[0].mxu0
        %v3735 = vadd.f32 0.0, %v3734
        %v3736 = vpop.f32.mrb[0].mxu0
        %v3737 = vpop.f32.mrb[0].mxu0
        %v3738 = vadd.f32 0.0, %v3737
        %v3739 = vpop.f32.mrb[0].mxu0
        %3740 = vmatprep.mubr.bf16.mxu0 0
        %3741 = vmatmul.mubr.bf16.gmra.mrb[0].mxu0 %v3623
        %v3742 = vpop.f32.mrb[0].mxu0
        %v3743 = vadd.f32 0.0, %v3742
        %v3744 = vpop.f32.mrb[0].mxu0
        %v3745 = vpop.f32.mrb[0].mxu0
        %v3746 = vadd.f32 0.0, %v3745
        %v3747 = vpop.f32.mrb[0].mxu0
        %3748 = vmatprep.mubr.bf16.mxu0 0
        %3749 = vmatmul.mubr.bf16.gmra.mrb[0].mxu0 %v3626
        %v3750 = vpop.f32.mrb[0].mxu0
        %v3751 = vadd.f32 0.0, %v3750
        %v3752 = vpop.f32.mrb[0].mxu0
        %v3753 = vpop.f32.mrb[0].mxu0
        %v3754 = vadd.f32 0.0, %v3753
        %v3755 = vpop.f32.mrb[0].mxu0
        %3756 = vmatprep.mubr.bf16.mxu0 0
        %3757 = vmatmul.mubr.bf16.gmra.mrb[0].mxu0 %v3629
        %v3758 = vpop.f32.mrb[0].mxu0
        %v3759 = vadd.f32 0.0, %v3758
        %v3760 = vpop.f32.mrb[0].mxu0
        %v3761 = vpop.f32.mrb[0].mxu0
        %v3762 = vadd.f32 0.0, %v3761
        %v3763 = vpop.f32.mrb[0].mxu0
        %3764 = vmatprep.mubr.bf16.mxu0 0
        %3765 = vmatmul.mubr.bf16.gmra.mrb[0].mxu0 %v3632
        %v3766 = vpop.f32.mrb[0].mxu0
        %v3767 = vadd.f32 0.0, %v3766
        %v3768 = vpop.f32.mrb[0].mxu0
        %v3769 = vpop.f32.mrb[0].mxu0
        %v3770 = vadd.f32 0.0, %v3769
        %v3771 = vpop.f32.mrb[0].mxu0
        %3772 = vmatprep.mubr.bf16.mxu0 0
        %3773 = vmatmul.mubr.bf16.gmra.mrb[0].mxu0 %v3635
        %v3774 = vpop.f32.mrb[0].mxu0
        %v3775 = vadd.f32 0.0, %v3774
        %v3776 = vpop.f32.mrb[0].mxu0
        %v3777 = vpop.f32.mrb[0].mxu0
        %v3778 = vadd.f32 0.0, %v3777
        %v3779 = vpop.f32.mrb[0].mxu0
        %3780 = vmatprep.mubr.bf16.mxu0 0
        %3781 = vmatmul.mubr.bf16.gmra.mrb[0].mxu0 %v3638
        %v3782 = vpop.f32.mrb[0].mxu0
        %v3783 = vadd.f32 0.0, %v3782
        %v3784 = vpop.f32.mrb[0].mxu0
        %v3785 = vpop.f32.mrb[0].mxu0
        %v3786 = vadd.f32 0.0, %v3785
        %v3787 = vpop.f32.mrb[0].mxu0
        %3788 = vmatprep.mubr.bf16.mxu0 0
        %3789 = vmatmul.mubr.bf16.gmra.mrb[0].mxu0 %v3641
        %v3790 = vpop.f32.mrb[0].mxu0
        %v3791 = vadd.f32 0.0, %v3790
        %v3792 = vpop.f32.mrb[0].mxu0
        %v3793 = vpop.f32.mrb[0].mxu0
        %v3794 = vadd.f32 0.0, %v3793
        %v3795 = vpop.f32.mrb[0].mxu0
        %3796 = vmatprep.mubr.bf16.mxu0 0
        %3797 = vmatmul.mubr.bf16.gmra.mrb[0].mxu0 %v3644
        %v3798 = vpop.f32.mrb[0].mxu0
        %v3799 = vadd.f32 0.0, %v3798
        %v3800 = vpop.f32.mrb[0].mxu0
        %v3801 = vpop.f32.mrb[0].mxu0
        %v3802 = vadd.f32 0.0, %v3801
        %v3803 = vpop.f32.mrb[0].mxu0
        %3804 = vmatprep.mubr.bf16.mxu0 0
        %3805 = vmatmul.mubr.bf16.gmra.mrb[0].mxu0 %v3647
        %v3806 = vpop.f32.mrb[0].mxu0
        %v3807 = vadd.f32 0.0, %v3806
        %v3808 = vpop.f32.mrb[0].mxu0
        %v3809 = vpop.f32.mrb[0].mxu0
        %v3810 = vadd.f32 0.0, %v3809
        %v3811 = vpop.f32.mrb[0].mxu0
        %3812 = vdwg.mxu0
        %v3813 = vadd.f32 %v3417, %v3687
        %v3814 = vadd.f32 %v3418, %v3690
        %v3815 = vadd.f32 %v3419, %v3695
        %v3816 = vadd.f32 %v3420, %v3698
        %v3817 = vadd.f32 %v3421, %v3703
        %v3818 = vadd.f32 %v3422, %v3706
        %v3819 = vadd.f32 %v3423, %v3711
        %v3820 = vadd.f32 %v3424, %v3714
        %v3821 = vadd.f32 %v3425, %v3719
        %v3822 = vadd.f32 %v3426, %v3722
        %v3823 = vadd.f32 %v3427, %v3727
        %v3824 = vadd.f32 %v3428, %v3730
        %v3825 = vadd.f32 %v3429, %v3735
        %v3826 = vadd.f32 %v3430, %v3738
        %v3827 = vadd.f32 %v3431, %v3743
        %v3828 = vadd.f32 %v3432, %v3746
        %v3829 = vadd.f32 %v3433, %v3751
        %v3830 = vadd.f32 %v3434, %v3754
        %v3831 = vadd.f32 %v3435, %v3759
        %v3832 = vadd.f32 %v3436, %v3762
        %v3833 = vadd.f32 %v3437, %v3767
        %v3834 = vadd.f32 %v3438, %v3770
        %v3835 = vadd.f32 %v3439, %v3775
        %v3836 = vadd.f32 %v3440, %v3778
        %v3837 = vadd.f32 %v3441, %v3783
        %v3838 = vadd.f32 %v3442, %v3786
        %v3839 = vadd.f32 %v3443, %v3791
        %v3840 = vadd.f32 %v3444, %v3794
        %v3841 = vadd.f32 %v3445, %v3799
        %v3842 = vadd.f32 %v3446, %v3802
        %v3843 = vadd.f32 %v3447, %v3807
        %v3844 = vadd.f32 %v3448, %v3810
        %3845 = vst [vmem:[#allocation3] sm:$0xff] %v3813
        %3846 = vst [vmem:[#allocation3 + $0x8] sm:$0xff] %v3814
        %3847 = vst [vmem:[#allocation3 + $0x10] sm:$0xff] %v3815
        %3848 = vst [vmem:[#allocation3 + $0x18] sm:$0xff] %v3816
        %3849 = vst [vmem:[#allocation3 + $0x20] sm:$0xff] %v3817
        %3850 = vst [vmem:[#allocation3 + $0x28] sm:$0xff] %v3818
        %3851 = vst [vmem:[#allocation3 + $0x30] sm:$0xff] %v3819
        %3852 = vst [vmem:[#allocation3 + $0x38] sm:$0xff] %v3820
        %3853 = vst [vmem:[#allocation3 + $0x40] sm:$0xff] %v3821
        %3854 = vst [vmem:[#allocation3 + $0x48] sm:$0xff] %v3822
        %3855 = vst [vmem:[#allocation3 + $0x50] sm:$0xff] %v3823
        %3856 = vst [vmem:[#allocation3 + $0x58] sm:$0xff] %v3824
        %3857 = vst [vmem:[#allocation3 + $0x60] sm:$0xff] %v3825
        %3858 = vst [vmem:[#allocation3 + $0x68] sm:$0xff] %v3826
        %3859 = vst [vmem:[#allocation3 + $0x70] sm:$0xff] %v3827
        %3860 = vst [vmem:[#allocation3 + $0x78] sm:$0xff] %v3828
        %3861 = vst [vmem:[#allocation3 + $0x80] sm:$0xff] %v3829
        %3862 = vst [vmem:[#allocation3 + $0x88] sm:$0xff] %v3830
        %3863 = vst [vmem:[#allocation3 + $0x90] sm:$0xff] %v3831
        %3864 = vst [vmem:[#allocation3 + $0x98] sm:$0xff] %v3832
        %3865 = vst [vmem:[#allocation3 + $0xa0] sm:$0xff] %v3833
        %3866 = vst [vmem:[#allocation3 + $0xa8] sm:$0xff] %v3834
        %3867 = vst [vmem:[#allocation3 + $0xb0] sm:$0xff] %v3835
        %3868 = vst [vmem:[#allocation3 + $0xb8] sm:$0xff] %v3836
        %3869 = vst [vmem:[#allocation3 + $0xc0] sm:$0xff] %v3837
        %3870 = vst [vmem:[#allocation3 + $0xc8] sm:$0xff] %v3838
        %3871 = vst [vmem:[#allocation3 + $0xd0] sm:$0xff] %v3839
        %3872 = vst [vmem:[#allocation3 + $0xd8] sm:$0xff] %v3840
        %3873 = vst [vmem:[#allocation3 + $0xe0] sm:$0xff] %v3841
        %3874 = vst [vmem:[#allocation3 + $0xe8] sm:$0xff] %v3842
        %3875 = vst [vmem:[#allocation3 + $0xf0] sm:$0xff] %v3843
        %3876 = vst [vmem:[#allocation3 + $0xf8] sm:$0xff] %v3844
        %v3877 = vld [vmem:[#allocation3] sm:$0xff]
        %v3878 = vld [vmem:[#allocation3 + $0x8] sm:$0xff]
        %v3879 = vld [vmem:[#allocation3 + $0x10] sm:$0xff]
        %v3880 = vld [vmem:[#allocation3 + $0x18] sm:$0xff]
        %v3881 = vld [vmem:[#allocation3 + $0x20] sm:$0xff]
        %v3882 = vld [vmem:[#allocation3 + $0x28] sm:$0xff]
        %v3883 = vld [vmem:[#allocation3 + $0x30] sm:$0xff]
        %v3884 = vld [vmem:[#allocation3 + $0x38] sm:$0xff]
        %v3885 = vld [vmem:[#allocation3 + $0x40] sm:$0xff]
        %v3886 = vld [vmem:[#allocation3 + $0x48] sm:$0xff]
        %v3887 = vld [vmem:[#allocation3 + $0x50] sm:$0xff]
        %v3888 = vld [vmem:[#allocation3 + $0x58] sm:$0xff]
        %v3889 = vld [vmem:[#allocation3 + $0x60] sm:$0xff]
        %v3890 = vld [vmem:[#allocation3 + $0x68] sm:$0xff]
        %v3891 = vld [vmem:[#allocation3 + $0x70] sm:$0xff]
        %v3892 = vld [vmem:[#allocation3 + $0x78] sm:$0xff]
        %v3893 = vld [vmem:[#allocation3 + $0x80] sm:$0xff]
        %v3894 = vld [vmem:[#allocation3 + $0x88] sm:$0xff]
        %v3895 = vld [vmem:[#allocation3 + $0x90] sm:$0xff]
        %v3896 = vld [vmem:[#allocation3 + $0x98] sm:$0xff]
        %v3897 = vld [vmem:[#allocation3 + $0xa0] sm:$0xff]
        %v3898 = vld [vmem:[#allocation3 + $0xa8] sm:$0xff]
        %v3899 = vld [vmem:[#allocation3 + $0xb0] sm:$0xff]
        %v3900 = vld [vmem:[#allocation3 + $0xb8] sm:$0xff]
        %v3901 = vld [vmem:[#allocation3 + $0xc0] sm:$0xff]
        %v3902 = vld [vmem:[#allocation3 + $0xc8] sm:$0xff]
        %v3903 = vld [vmem:[#allocation3 + $0xd0] sm:$0xff]
        %v3904 = vld [vmem:[#allocation3 + $0xd8] sm:$0xff]
        %v3905 = vld [vmem:[#allocation3 + $0xe0] sm:$0xff]
        %v3906 = vld [vmem:[#allocation3 + $0xe8] sm:$0xff]
        %v3907 = vld [vmem:[#allocation3 + $0xf0] sm:$0xff]
        %v3908 = vld [vmem:[#allocation3 + $0xf8] sm:$0xff]
        %v3909 = vld [vmem:[#allocation2 + $0x60] sm:$0xf0]
        %v3910 = vld [vmem:[#allocation2 + $0x68] sm:$0xff]
        %v3911 = vld [vmem:[#allocation2 + $0x70] sm:$0xff]
        %v3912 = vld [vmem:[#allocation2 + $0x78] sm:$0xff]
        %v3913 = vld [vmem:[#allocation2 + $0x80] sm:$0xff]
        %v3914 = vld [vmem:[#allocation2 + $0x88] sm:$0xff]
        %v3915 = vld [vmem:[#allocation2 + $0x90] sm:$0xff]
        %v3916 = vld [vmem:[#allocation2 + $0x98] sm:$0xff]
        %v3917 = vld [vmem:[#allocation2 + $0xa0] sm:$0xff]
        %v3918 = vld [vmem:[#allocation2 + $0xa8] sm:$0xff]
        %v3919 = vld [vmem:[#allocation2 + $0xb0] sm:$0xff]
        %v3920 = vld [vmem:[#allocation2 + $0xb8] sm:$0xff]
        %v3921 = vld [vmem:[#allocation2 + $0xc0] sm:$0xff]
        %v3922 = vld [vmem:[#allocation2 + $0xc8] sm:$0xff]
        %v3923 = vld [vmem:[#allocation2 + $0xd0] sm:$0xff]
        %v3924 = vld [vmem:[#allocation2 + $0xd8] sm:$0xff]
        %v3925 = vld [vmem:[#allocation2 + $0xe0] sm:$0xf]
        %s3926 = scalar_lea.vmem %s2, 16
        %v3927 = vld [vmem:[%s3926] sm:$0x3]
        %vm3945 = vcmask 1043456
        %v3946 = vrot.slane %v3909, 4
        %v3947 = vrot.slane %v3910, 4
        %v3948 = vsel %vm3945, %v3946, %v3947
        %v3949 = vrot.slane %v3911, 4
        %v3950 = vsel %vm3945, %v3947, %v3949
        %v3951 = vrot.slane %v3912, 4
        %v3952 = vsel %vm3945, %v3949, %v3951
        %v3953 = vrot.slane %v3913, 4
        %v3954 = vsel %vm3945, %v3951, %v3953
        %v3955 = vrot.slane %v3914, 4
        %v3956 = vsel %vm3945, %v3953, %v3955
        %v3957 = vrot.slane %v3915, 4
        %v3958 = vsel %vm3945, %v3955, %v3957
        %v3959 = vrot.slane %v3916, 4
        %v3960 = vsel %vm3945, %v3957, %v3959
        %v3961 = vrot.slane %v3917, 4
        %v3962 = vsel %vm3945, %v3959, %v3961
        %v3963 = vrot.slane %v3918, 4
        %v3964 = vsel %vm3945, %v3961, %v3963
        %v3965 = vrot.slane %v3919, 4
        %v3966 = vsel %vm3945, %v3963, %v3965
        %v3967 = vrot.slane %v3920, 4
        %v3968 = vsel %vm3945, %v3965, %v3967
        %v3969 = vrot.slane %v3921, 4
        %v3970 = vsel %vm3945, %v3967, %v3969
        %v3971 = vrot.slane %v3922, 4
        %v3972 = vsel %vm3945, %v3969, %v3971
        %v3973 = vrot.slane %v3923, 4
        %v3974 = vsel %vm3945, %v3971, %v3973
        %v3975 = vrot.slane %v3924, 4
        %v3976 = vsel %vm3945, %v3973, %v3975
        %v3977 = vrot.slane %v3925, 4
        %v3978 = vsel %vm3945, %v3975, %v3977
        %v3980 = vsel %vm440, %v3948, 0
        %v3983 = vsel %vm440, %v3950, 0
        %v3986 = vsel %vm440, %v3952, 0
        %v3989 = vsel %vm440, %v3954, 0
        %v3992 = vsel %vm440, %v3956, 0
        %v3995 = vsel %vm440, %v3958, 0
        %v3998 = vsel %vm440, %v3960, 0
        %v4001 = vsel %vm440, %v3962, 0
        %v4004 = vsel %vm440, %v3964, 0
        %v4007 = vsel %vm440, %v3966, 0
        %v4010 = vsel %vm440, %v3968, 0
        %v4013 = vsel %vm440, %v3970, 0
        %v4016 = vsel %vm440, %v3972, 0
        %v4019 = vsel %vm440, %v3974, 0
        %v4022 = vsel %vm440, %v3976, 0
        %v4025 = vsel %vm440, %v3978, 0
        %v4028 = vsel %vm666, %v3927, 0
        %4030 = vmatprep.subr.bf16.mxu0 0
        %4031 = vmatpush1.bf16.msra.mxu0 %v4028
        %4032 = vmatprep.subr.bf16.mxu0 0
        %4033 = vmatpush1.bf16.msra.mxu0 0
        %4034 = vmatprep.subr.bf16.mxu0 0
        %4035 = vmatpush1.bf16.msra.mxu0 0
        %4036 = vmatprep.subr.bf16.mxu0 0
        %4037 = vmatpush1.bf16.msra.mxu0 0
        %4038 = vmatprep.subr.bf16.mxu0 0
        %4039 = vmatpush1.bf16.msra.mxu0 0
        %4040 = vmatprep.subr.bf16.mxu0 0
        %4041 = vmatpush1.bf16.msra.mxu0 0
        %4042 = vmatprep.subr.bf16.mxu0 0
        %4043 = vmatpush1.bf16.msra.mxu0 0
        %4044 = vmatprep.subr.bf16.mxu0 0
        %4045 = vmatpush1.bf16.msra.mxu0 0
        %4046 = vmatprep.subr.bf16.mxu0 0
        %4047 = vmatpush1.bf16.msra.mxu0 0
        %4048 = vmatprep.subr.bf16.mxu0 0
        %4049 = vmatpush1.bf16.msra.mxu0 0
        %4050 = vmatprep.subr.bf16.mxu0 0
        %4051 = vmatpush1.bf16.msra.mxu0 0
        %4052 = vmatprep.subr.bf16.mxu0 0
        %4053 = vmatpush1.bf16.msra.mxu0 0
        %4054 = vmatprep.subr.bf16.mxu0 0
        %4055 = vmatpush1.bf16.msra.mxu0 0
        %4056 = vmatprep.subr.bf16.mxu0 0
        %4057 = vmatpush1.bf16.msra.mxu0 0
        %4058 = vmatprep.subr.bf16.mxu0 0
        %4059 = vmatpush1.bf16.msra.mxu0 0
        %4060 = vmatprep.subr.bf16.mxu0 0
        %4061 = vmatpush1.bf16.msra.mxu0 0
        %4062 = vmatprep.mubr.bf16.mxu0 0
        %4063 = vmatmul.mubr.bf16.gmra.mrb[0].mxu0 %v3980
        %v4064 = vpop.f32.mrb[0].mxu0
        %v4065 = vadd.f32 0.0, %v4064
        %v4066 = vpop.f32.mrb[0].mxu0
        %v4067 = vpop.f32.mrb[0].mxu0
        %v4068 = vadd.f32 0.0, %v4067
        %v4069 = vpop.f32.mrb[0].mxu0
        %4070 = vmatprep.mubr.bf16.mxu0 0
        %4071 = vmatmul.mubr.bf16.gmra.mrb[0].mxu0 %v3983
        %v4072 = vpop.f32.mrb[0].mxu0
        %v4073 = vadd.f32 0.0, %v4072
        %v4074 = vpop.f32.mrb[0].mxu0
        %v4075 = vpop.f32.mrb[0].mxu0
        %v4076 = vadd.f32 0.0, %v4075
        %v4077 = vpop.f32.mrb[0].mxu0
        %4078 = vmatprep.mubr.bf16.mxu0 0
        %4079 = vmatmul.mubr.bf16.gmra.mrb[0].mxu0 %v3986
        %v4080 = vpop.f32.mrb[0].mxu0
        %v4081 = vadd.f32 0.0, %v4080
        %v4082 = vpop.f32.mrb[0].mxu0
        %v4083 = vpop.f32.mrb[0].mxu0
        %v4084 = vadd.f32 0.0, %v4083
        %v4085 = vpop.f32.mrb[0].mxu0
        %4086 = vmatprep.mubr.bf16.mxu0 0
        %4087 = vmatmul.mubr.bf16.gmra.mrb[0].mxu0 %v3989
        %v4088 = vpop.f32.mrb[0].mxu0
        %v4089 = vadd.f32 0.0, %v4088
        %v4090 = vpop.f32.mrb[0].mxu0
        %v4091 = vpop.f32.mrb[0].mxu0
        %v4092 = vadd.f32 0.0, %v4091
        %v4093 = vpop.f32.mrb[0].mxu0
        %4094 = vmatprep.mubr.bf16.mxu0 0
        %4095 = vmatmul.mubr.bf16.gmra.mrb[0].mxu0 %v3992
        %v4096 = vpop.f32.mrb[0].mxu0
        %v4097 = vadd.f32 0.0, %v4096
        %v4098 = vpop.f32.mrb[0].mxu0
        %v4099 = vpop.f32.mrb[0].mxu0
        %v4100 = vadd.f32 0.0, %v4099
        %v4101 = vpop.f32.mrb[0].mxu0
        %4102 = vmatprep.mubr.bf16.mxu0 0
        %4103 = vmatmul.mubr.bf16.gmra.mrb[0].mxu0 %v3995
        %v4104 = vpop.f32.mrb[0].mxu0
        %v4105 = vadd.f32 0.0, %v4104
        %v4106 = vpop.f32.mrb[0].mxu0
        %v4107 = vpop.f32.mrb[0].mxu0
        %v4108 = vadd.f32 0.0, %v4107
        %v4109 = vpop.f32.mrb[0].mxu0
        %4110 = vmatprep.mubr.bf16.mxu0 0
        %4111 = vmatmul.mubr.bf16.gmra.mrb[0].mxu0 %v3998
        %v4112 = vpop.f32.mrb[0].mxu0
        %v4113 = vadd.f32 0.0, %v4112
        %v4114 = vpop.f32.mrb[0].mxu0
        %v4115 = vpop.f32.mrb[0].mxu0
        %v4116 = vadd.f32 0.0, %v4115
        %v4117 = vpop.f32.mrb[0].mxu0
        %4118 = vmatprep.mubr.bf16.mxu0 0
        %4119 = vmatmul.mubr.bf16.gmra.mrb[0].mxu0 %v4001
        %v4120 = vpop.f32.mrb[0].mxu0
        %v4121 = vadd.f32 0.0, %v4120
        %v4122 = vpop.f32.mrb[0].mxu0
        %v4123 = vpop.f32.mrb[0].mxu0
        %v4124 = vadd.f32 0.0, %v4123
        %v4125 = vpop.f32.mrb[0].mxu0
        %4126 = vmatprep.mubr.bf16.mxu0 0
        %4127 = vmatmul.mubr.bf16.gmra.mrb[0].mxu0 %v4004
        %v4128 = vpop.f32.mrb[0].mxu0
        %v4129 = vadd.f32 0.0, %v4128
        %v4130 = vpop.f32.mrb[0].mxu0
        %v4131 = vpop.f32.mrb[0].mxu0
        %v4132 = vadd.f32 0.0, %v4131
        %v4133 = vpop.f32.mrb[0].mxu0
        %4134 = vmatprep.mubr.bf16.mxu0 0
        %4135 = vmatmul.mubr.bf16.gmra.mrb[0].mxu0 %v4007
        %v4136 = vpop.f32.mrb[0].mxu0
        %v4137 = vadd.f32 0.0, %v4136
        %v4138 = vpop.f32.mrb[0].mxu0
        %v4139 = vpop.f32.mrb[0].mxu0
        %v4140 = vadd.f32 0.0, %v4139
        %v4141 = vpop.f32.mrb[0].mxu0
        %4142 = vmatprep.mubr.bf16.mxu0 0
        %4143 = vmatmul.mubr.bf16.gmra.mrb[0].mxu0 %v4010
        %v4144 = vpop.f32.mrb[0].mxu0
        %v4145 = vadd.f32 0.0, %v4144
        %v4146 = vpop.f32.mrb[0].mxu0
        %v4147 = vpop.f32.mrb[0].mxu0
        %v4148 = vadd.f32 0.0, %v4147
        %v4149 = vpop.f32.mrb[0].mxu0
        %4150 = vmatprep.mubr.bf16.mxu0 0
        %4151 = vmatmul.mubr.bf16.gmra.mrb[0].mxu0 %v4013
        %v4152 = vpop.f32.mrb[0].mxu0
        %v4153 = vadd.f32 0.0, %v4152
        %v4154 = vpop.f32.mrb[0].mxu0
        %v4155 = vpop.f32.mrb[0].mxu0
        %v4156 = vadd.f32 0.0, %v4155
        %v4157 = vpop.f32.mrb[0].mxu0
        %4158 = vmatprep.mubr.bf16.mxu0 0
        %4159 = vmatmul.mubr.bf16.gmra.mrb[0].mxu0 %v4016
        %v4160 = vpop.f32.mrb[0].mxu0
        %v4161 = vadd.f32 0.0, %v4160
        %v4162 = vpop.f32.mrb[0].mxu0
        %v4163 = vpop.f32.mrb[0].mxu0
        %v4164 = vadd.f32 0.0, %v4163
        %v4165 = vpop.f32.mrb[0].mxu0
        %4166 = vmatprep.mubr.bf16.mxu0 0
        %4167 = vmatmul.mubr.bf16.gmra.mrb[0].mxu0 %v4019
        %v4168 = vpop.f32.mrb[0].mxu0
        %v4169 = vadd.f32 0.0, %v4168
        %v4170 = vpop.f32.mrb[0].mxu0
        %v4171 = vpop.f32.mrb[0].mxu0
        %v4172 = vadd.f32 0.0, %v4171
        %v4173 = vpop.f32.mrb[0].mxu0
        %4174 = vmatprep.mubr.bf16.mxu0 0
        %4175 = vmatmul.mubr.bf16.gmra.mrb[0].mxu0 %v4022
        %v4176 = vpop.f32.mrb[0].mxu0
        %v4177 = vadd.f32 0.0, %v4176
        %v4178 = vpop.f32.mrb[0].mxu0
        %v4179 = vpop.f32.mrb[0].mxu0
        %v4180 = vadd.f32 0.0, %v4179
        %v4181 = vpop.f32.mrb[0].mxu0
        %4182 = vmatprep.mubr.bf16.mxu0 0
        %4183 = vmatmul.mubr.bf16.gmra.mrb[0].mxu0 %v4025
        %v4184 = vpop.f32.mrb[0].mxu0
        %v4185 = vadd.f32 0.0, %v4184
        %v4186 = vpop.f32.mrb[0].mxu0
        %v4187 = vpop.f32.mrb[0].mxu0
        %v4188 = vadd.f32 0.0, %v4187
        %v4189 = vpop.f32.mrb[0].mxu0
        %4190 = vdwg.mxu0
        %v4191 = vadd.f32 %v3877, %v4065
        %v4192 = vadd.f32 %v3878, %v4068
        %v4193 = vadd.f32 %v3879, %v4073
        %v4194 = vadd.f32 %v3880, %v4076
        %v4195 = vadd.f32 %v3881, %v4081
        %v4196 = vadd.f32 %v3882, %v4084
        %v4197 = vadd.f32 %v3883, %v4089
        %v4198 = vadd.f32 %v3884, %v4092
        %v4199 = vadd.f32 %v3885, %v4097
        %v4200 = vadd.f32 %v3886, %v4100
        %v4201 = vadd.f32 %v3887, %v4105
        %v4202 = vadd.f32 %v3888, %v4108
        %v4203 = vadd.f32 %v3889, %v4113
        %v4204 = vadd.f32 %v3890, %v4116
        %v4205 = vadd.f32 %v3891, %v4121
        %v4206 = vadd.f32 %v3892, %v4124
        %v4207 = vadd.f32 %v3893, %v4129
        %v4208 = vadd.f32 %v3894, %v4132
        %v4209 = vadd.f32 %v3895, %v4137
        %v4210 = vadd.f32 %v3896, %v4140
        %v4211 = vadd.f32 %v3897, %v4145
        %v4212 = vadd.f32 %v3898, %v4148
        %v4213 = vadd.f32 %v3899, %v4153
        %v4214 = vadd.f32 %v3900, %v4156
        %v4215 = vadd.f32 %v3901, %v4161
        %v4216 = vadd.f32 %v3902, %v4164
        %v4217 = vadd.f32 %v3903, %v4169
        %v4218 = vadd.f32 %v3904, %v4172
        %v4219 = vadd.f32 %v3905, %v4177
        %v4220 = vadd.f32 %v3906, %v4180
        %v4221 = vadd.f32 %v3907, %v4185
        %v4222 = vadd.f32 %v3908, %v4188
        %4223 = vst [vmem:[#allocation3] sm:$0xff] %v4191
        %4224 = vst [vmem:[#allocation3 + $0x8] sm:$0xff] %v4192
        %4225 = vst [vmem:[#allocation3 + $0x10] sm:$0xff] %v4193
        %4226 = vst [vmem:[#allocation3 + $0x18] sm:$0xff] %v4194
        %4227 = vst [vmem:[#allocation3 + $0x20] sm:$0xff] %v4195
        %4228 = vst [vmem:[#allocation3 + $0x28] sm:$0xff] %v4196
        %4229 = vst [vmem:[#allocation3 + $0x30] sm:$0xff] %v4197
        %4230 = vst [vmem:[#allocation3 + $0x38] sm:$0xff] %v4198
        %4231 = vst [vmem:[#allocation3 + $0x40] sm:$0xff] %v4199
        %4232 = vst [vmem:[#allocation3 + $0x48] sm:$0xff] %v4200
        %4233 = vst [vmem:[#allocation3 + $0x50] sm:$0xff] %v4201
        %4234 = vst [vmem:[#allocation3 + $0x58] sm:$0xff] %v4202
        %4235 = vst [vmem:[#allocation3 + $0x60] sm:$0xff] %v4203
        %4236 = vst [vmem:[#allocation3 + $0x68] sm:$0xff] %v4204
        %4237 = vst [vmem:[#allocation3 + $0x70] sm:$0xff] %v4205
        %4238 = vst [vmem:[#allocation3 + $0x78] sm:$0xff] %v4206
        %4239 = vst [vmem:[#allocation3 + $0x80] sm:$0xff] %v4207
        %4240 = vst [vmem:[#allocation3 + $0x88] sm:$0xff] %v4208
        %4241 = vst [vmem:[#allocation3 + $0x90] sm:$0xff] %v4209
        %4242 = vst [vmem:[#allocation3 + $0x98] sm:$0xff] %v4210
        %4243 = vst [vmem:[#allocation3 + $0xa0] sm:$0xff] %v4211
        %4244 = vst [vmem:[#allocation3 + $0xa8] sm:$0xff] %v4212
        %4245 = vst [vmem:[#allocation3 + $0xb0] sm:$0xff] %v4213
        %4246 = vst [vmem:[#allocation3 + $0xb8] sm:$0xff] %v4214
        %4247 = vst [vmem:[#allocation3 + $0xc0] sm:$0xff] %v4215
        %4248 = vst [vmem:[#allocation3 + $0xc8] sm:$0xff] %v4216
        %4249 = vst [vmem:[#allocation3 + $0xd0] sm:$0xff] %v4217
        %4250 = vst [vmem:[#allocation3 + $0xd8] sm:$0xff] %v4218
        %4251 = vst [vmem:[#allocation3 + $0xe0] sm:$0xff] %v4219
        %4252 = vst [vmem:[#allocation3 + $0xe8] sm:$0xff] %v4220
        %4253 = vst [vmem:[#allocation3 + $0xf0] sm:$0xff] %v4221
        %4254 = vst [vmem:[#allocation3 + $0xf8] sm:$0xff] %v4222
        %v4255 = vld [vmem:[#allocation3] sm:$0xff]
        %v4256 = vld [vmem:[#allocation3 + $0x8] sm:$0xff]
        %v4257 = vld [vmem:[#allocation3 + $0x10] sm:$0xff]
        %v4258 = vld [vmem:[#allocation3 + $0x18] sm:$0xff]
        %v4259 = vld [vmem:[#allocation3 + $0x20] sm:$0xff]
        %v4260 = vld [vmem:[#allocation3 + $0x28] sm:$0xff]
        %v4261 = vld [vmem:[#allocation3 + $0x30] sm:$0xff]
        %v4262 = vld [vmem:[#allocation3 + $0x38] sm:$0xff]
        %v4263 = vld [vmem:[#allocation3 + $0x40] sm:$0xff]
        %v4264 = vld [vmem:[#allocation3 + $0x48] sm:$0xff]
        %v4265 = vld [vmem:[#allocation3 + $0x50] sm:$0xff]
        %v4266 = vld [vmem:[#allocation3 + $0x58] sm:$0xff]
        %v4267 = vld [vmem:[#allocation3 + $0x60] sm:$0xff]
        %v4268 = vld [vmem:[#allocation3 + $0x68] sm:$0xff]
        %v4269 = vld [vmem:[#allocation3 + $0x70] sm:$0xff]
        %v4270 = vld [vmem:[#allocation3 + $0x78] sm:$0xff]
        %v4271 = vld [vmem:[#allocation3 + $0x80] sm:$0xff]
        %v4272 = vld [vmem:[#allocation3 + $0x88] sm:$0xff]
        %v4273 = vld [vmem:[#allocation3 + $0x90] sm:$0xff]
        %v4274 = vld [vmem:[#allocation3 + $0x98] sm:$0xff]
        %v4275 = vld [vmem:[#allocation3 + $0xa0] sm:$0xff]
        %v4276 = vld [vmem:[#allocation3 + $0xa8] sm:$0xff]
        %v4277 = vld [vmem:[#allocation3 + $0xb0] sm:$0xff]
        %v4278 = vld [vmem:[#allocation3 + $0xb8] sm:$0xff]
        %v4279 = vld [vmem:[#allocation3 + $0xc0] sm:$0xff]
        %v4280 = vld [vmem:[#allocation3 + $0xc8] sm:$0xff]
        %v4281 = vld [vmem:[#allocation3 + $0xd0] sm:$0xff]
        %v4282 = vld [vmem:[#allocation3 + $0xd8] sm:$0xff]
        %v4283 = vld [vmem:[#allocation3 + $0xe0] sm:$0xff]
        %v4284 = vld [vmem:[#allocation3 + $0xe8] sm:$0xff]
        %v4285 = vld [vmem:[#allocation3 + $0xf0] sm:$0xff]
        %v4286 = vld [vmem:[#allocation3 + $0xf8] sm:$0xff]
        %v4287 = vld [vmem:[#allocation2 + $0x60] sm:$0xf0]
        %v4288 = vld [vmem:[#allocation2 + $0x68] sm:$0xff]
        %v4289 = vld [vmem:[#allocation2 + $0x70] sm:$0xff]
        %v4290 = vld [vmem:[#allocation2 + $0x78] sm:$0xff]
        %v4291 = vld [vmem:[#allocation2 + $0x80] sm:$0xff]
        %v4292 = vld [vmem:[#allocation2 + $0x88] sm:$0xff]
        %v4293 = vld [vmem:[#allocation2 + $0x90] sm:$0xff]
        %v4294 = vld [vmem:[#allocation2 + $0x98] sm:$0xff]
        %v4295 = vld [vmem:[#allocation2 + $0xa0] sm:$0xff]
        %v4296 = vld [vmem:[#allocation2 + $0xa8] sm:$0xff]
        %v4297 = vld [vmem:[#allocation2 + $0xb0] sm:$0xff]
        %v4298 = vld [vmem:[#allocation2 + $0xb8] sm:$0xff]
        %v4299 = vld [vmem:[#allocation2 + $0xc0] sm:$0xff]
        %v4300 = vld [vmem:[#allocation2 + $0xc8] sm:$0xff]
        %v4301 = vld [vmem:[#allocation2 + $0xd0] sm:$0xff]
        %v4302 = vld [vmem:[#allocation2 + $0xd8] sm:$0xff]
        %v4303 = vld [vmem:[#allocation2 + $0xe0] sm:$0x1f]
        %s4304 = scalar_lea.vmem %s2, 18
        %v4305 = vld [vmem:[%s4304] sm:$0x3]
        %vm4306 = vsmask.f32 3328
        %v4308 = vshrl.u32 %v4287, 16
        %v4310 = vrot.slane %v4308, 4
        %v4311 = vshll.u32 %v4287, 16
        %v4313 = vrot.slane %v4311, 5
        %v4314 = vor.u32 %v4310, %v4313
        %v4316 = vshrl.u32 %v4288, 16
        %v4318 = vrot.slane %v4316, 4
        %v4319 = vshll.u32 %v4288, 16
        %v4321 = vrot.slane %v4319, 5
        %v4322 = vor.u32 %v4318, %v4321
        %v4323 = vsel %vm4306, %v4314, %v4322
        %v4325 = vshrl.u32 %v4289, 16
        %v4327 = vrot.slane %v4325, 4
        %v4328 = vshll.u32 %v4289, 16
        %v4330 = vrot.slane %v4328, 5
        %v4331 = vor.u32 %v4327, %v4330
        %v4332 = vsel %vm4306, %v4322, %v4331
        %v4334 = vshrl.u32 %v4290, 16
        %v4336 = vrot.slane %v4334, 4
        %v4337 = vshll.u32 %v4290, 16
        %v4339 = vrot.slane %v4337, 5
        %v4340 = vor.u32 %v4336, %v4339
        %v4341 = vsel %vm4306, %v4331, %v4340
        %v4343 = vshrl.u32 %v4291, 16
        %v4345 = vrot.slane %v4343, 4
        %v4346 = vshll.u32 %v4291, 16
        %v4348 = vrot.slane %v4346, 5
        %v4349 = vor.u32 %v4345, %v4348
        %v4350 = vsel %vm4306, %v4340, %v4349
        %v4352 = vshrl.u32 %v4292, 16
        %v4354 = vrot.slane %v4352, 4
        %v4355 = vshll.u32 %v4292, 16
        %v4357 = vrot.slane %v4355, 5
        %v4358 = vor.u32 %v4354, %v4357
        %v4359 = vsel %vm4306, %v4349, %v4358
        %v4361 = vshrl.u32 %v4293, 16
        %v4363 = vrot.slane %v4361, 4
        %v4364 = vshll.u32 %v4293, 16
        %v4366 = vrot.slane %v4364, 5
        %v4367 = vor.u32 %v4363, %v4366
        %v4368 = vsel %vm4306, %v4358, %v4367
        %v4370 = vshrl.u32 %v4294, 16
        %v4372 = vrot.slane %v4370, 4
        %v4373 = vshll.u32 %v4294, 16
        %v4375 = vrot.slane %v4373, 5
        %v4376 = vor.u32 %v4372, %v4375
        %v4377 = vsel %vm4306, %v4367, %v4376
        %v4379 = vshrl.u32 %v4295, 16
        %v4381 = vrot.slane %v4379, 4
        %v4382 = vshll.u32 %v4295, 16
        %v4384 = vrot.slane %v4382, 5
        %v4385 = vor.u32 %v4381, %v4384
        %v4386 = vsel %vm4306, %v4376, %v4385
        %v4388 = vshrl.u32 %v4296, 16
        %v4390 = vrot.slane %v4388, 4
        %v4391 = vshll.u32 %v4296, 16
        %v4393 = vrot.slane %v4391, 5
        %v4394 = vor.u32 %v4390, %v4393
        %v4395 = vsel %vm4306, %v4385, %v4394
        %v4397 = vshrl.u32 %v4297, 16
        %v4399 = vrot.slane %v4397, 4
        %v4400 = vshll.u32 %v4297, 16
        %v4402 = vrot.slane %v4400, 5
        %v4403 = vor.u32 %v4399, %v4402
        %v4404 = vsel %vm4306, %v4394, %v4403
        %v4406 = vshrl.u32 %v4298, 16
        %v4408 = vrot.slane %v4406, 4
        %v4409 = vshll.u32 %v4298, 16
        %v4411 = vrot.slane %v4409, 5
        %v4412 = vor.u32 %v4408, %v4411
        %v4413 = vsel %vm4306, %v4403, %v4412
        %v4415 = vshrl.u32 %v4299, 16
        %v4417 = vrot.slane %v4415, 4
        %v4418 = vshll.u32 %v4299, 16
        %v4420 = vrot.slane %v4418, 5
        %v4421 = vor.u32 %v4417, %v4420
        %v4422 = vsel %vm4306, %v4412, %v4421
        %v4424 = vshrl.u32 %v4300, 16
        %v4426 = vrot.slane %v4424, 4
        %v4427 = vshll.u32 %v4300, 16
        %v4429 = vrot.slane %v4427, 5
        %v4430 = vor.u32 %v4426, %v4429
        %v4431 = vsel %vm4306, %v4421, %v4430
        %v4433 = vshrl.u32 %v4301, 16
        %v4435 = vrot.slane %v4433, 4
        %v4436 = vshll.u32 %v4301, 16
        %v4438 = vrot.slane %v4436, 5
        %v4439 = vor.u32 %v4435, %v4438
        %v4440 = vsel %vm4306, %v4430, %v4439
        %v4442 = vshrl.u32 %v4302, 16
        %v4444 = vrot.slane %v4442, 4
        %v4445 = vshll.u32 %v4302, 16
        %v4447 = vrot.slane %v4445, 5
        %v4448 = vor.u32 %v4444, %v4447
        %v4449 = vsel %vm4306, %v4439, %v4448
        %v4451 = vshrl.u32 %v4303, 16
        %v4453 = vrot.slane %v4451, 4
        %v4454 = vshll.u32 %v4303, 16
        %v4456 = vrot.slane %v4454, 5
        %v4457 = vor.u32 %v4453, %v4456
        %v4458 = vsel %vm4306, %v4448, %v4457
        %v4460 = vsel %vm440, %v4323, 0
        %v4463 = vsel %vm440, %v4332, 0
        %v4466 = vsel %vm440, %v4341, 0
        %v4469 = vsel %vm440, %v4350, 0
        %v4472 = vsel %vm440, %v4359, 0
        %v4475 = vsel %vm440, %v4368, 0
        %v4478 = vsel %vm440, %v4377, 0
        %v4481 = vsel %vm440, %v4386, 0
        %v4484 = vsel %vm440, %v4395, 0
        %v4487 = vsel %vm440, %v4404, 0
        %v4490 = vsel %vm440, %v4413, 0
        %v4493 = vsel %vm440, %v4422, 0
        %v4496 = vsel %vm440, %v4431, 0
        %v4499 = vsel %vm440, %v4440, 0
        %v4502 = vsel %vm440, %v4449, 0
        %v4505 = vsel %vm440, %v4458, 0
        %v4508 = vsel %vm666, %v4305, 0
        %4510 = vmatprep.subr.bf16.mxu0 0
        %4511 = vmatpush1.bf16.msra.mxu0 %v4508
        %4512 = vmatprep.subr.bf16.mxu0 0
        %4513 = vmatpush1.bf16.msra.mxu0 0
        %4514 = vmatprep.subr.bf16.mxu0 0
        %4515 = vmatpush1.bf16.msra.mxu0 0
        %4516 = vmatprep.subr.bf16.mxu0 0
        %4517 = vmatpush1.bf16.msra.mxu0 0
        %4518 = vmatprep.subr.bf16.mxu0 0
        %4519 = vmatpush1.bf16.msra.mxu0 0
        %4520 = vmatprep.subr.bf16.mxu0 0
        %4521 = vmatpush1.bf16.msra.mxu0 0
        %4522 = vmatprep.subr.bf16.mxu0 0
        %4523 = vmatpush1.bf16.msra.mxu0 0
        %4524 = vmatprep.subr.bf16.mxu0 0
        %4525 = vmatpush1.bf16.msra.mxu0 0
        %4526 = vmatprep.subr.bf16.mxu0 0
        %4527 = vmatpush1.bf16.msra.mxu0 0
        %4528 = vmatprep.subr.bf16.mxu0 0
        %4529 = vmatpush1.bf16.msra.mxu0 0
        %4530 = vmatprep.subr.bf16.mxu0 0
        %4531 = vmatpush1.bf16.msra.mxu0 0
        %4532 = vmatprep.subr.bf16.mxu0 0
        %4533 = vmatpush1.bf16.msra.mxu0 0
        %4534 = vmatprep.subr.bf16.mxu0 0
        %4535 = vmatpush1.bf16.msra.mxu0 0
        %4536 = vmatprep.subr.bf16.mxu0 0
        %4537 = vmatpush1.bf16.msra.mxu0 0
        %4538 = vmatprep.subr.bf16.mxu0 0
        %4539 = vmatpush1.bf16.msra.mxu0 0
        %4540 = vmatprep.subr.bf16.mxu0 0
        %4541 = vmatpush1.bf16.msra.mxu0 0
        %4542 = vmatprep.mubr.bf16.mxu0 0
        %4543 = vmatmul.mubr.bf16.gmra.mrb[0].mxu0 %v4460
        %v4544 = vpop.f32.mrb[0].mxu0
        %v4545 = vadd.f32 0.0, %v4544
        %v4546 = vpop.f32.mrb[0].mxu0
        %v4547 = vpop.f32.mrb[0].mxu0
        %v4548 = vadd.f32 0.0, %v4547
        %v4549 = vpop.f32.mrb[0].mxu0
        %4550 = vmatprep.mubr.bf16.mxu0 0
        %4551 = vmatmul.mubr.bf16.gmra.mrb[0].mxu0 %v4463
        %v4552 = vpop.f32.mrb[0].mxu0
        %v4553 = vadd.f32 0.0, %v4552
        %v4554 = vpop.f32.mrb[0].mxu0
        %v4555 = vpop.f32.mrb[0].mxu0
        %v4556 = vadd.f32 0.0, %v4555
        %v4557 = vpop.f32.mrb[0].mxu0
        %4558 = vmatprep.mubr.bf16.mxu0 0
        %4559 = vmatmul.mubr.bf16.gmra.mrb[0].mxu0 %v4466
        %v4560 = vpop.f32.mrb[0].mxu0
        %v4561 = vadd.f32 0.0, %v4560
        %v4562 = vpop.f32.mrb[0].mxu0
        %v4563 = vpop.f32.mrb[0].mxu0
        %v4564 = vadd.f32 0.0, %v4563
        %v4565 = vpop.f32.mrb[0].mxu0
        %4566 = vmatprep.mubr.bf16.mxu0 0
        %4567 = vmatmul.mubr.bf16.gmra.mrb[0].mxu0 %v4469
        %v4568 = vpop.f32.mrb[0].mxu0
        %v4569 = vadd.f32 0.0, %v4568
        %v4570 = vpop.f32.mrb[0].mxu0
        %v4571 = vpop.f32.mrb[0].mxu0
        %v4572 = vadd.f32 0.0, %v4571
        %v4573 = vpop.f32.mrb[0].mxu0
        %4574 = vmatprep.mubr.bf16.mxu0 0
        %4575 = vmatmul.mubr.bf16.gmra.mrb[0].mxu0 %v4472
        %v4576 = vpop.f32.mrb[0].mxu0
        %v4577 = vadd.f32 0.0, %v4576
        %v4578 = vpop.f32.mrb[0].mxu0
        %v4579 = vpop.f32.mrb[0].mxu0
        %v4580 = vadd.f32 0.0, %v4579
        %v4581 = vpop.f32.mrb[0].mxu0
        %4582 = vmatprep.mubr.bf16.mxu0 0
        %4583 = vmatmul.mubr.bf16.gmra.mrb[0].mxu0 %v4475
        %v4584 = vpop.f32.mrb[0].mxu0
        %v4585 = vadd.f32 0.0, %v4584
        %v4586 = vpop.f32.mrb[0].mxu0
        %v4587 = vpop.f32.mrb[0].mxu0
        %v4588 = vadd.f32 0.0, %v4587
        %v4589 = vpop.f32.mrb[0].mxu0
        %4590 = vmatprep.mubr.bf16.mxu0 0
        %4591 = vmatmul.mubr.bf16.gmra.mrb[0].mxu0 %v4478
        %v4592 = vpop.f32.mrb[0].mxu0
        %v4593 = vadd.f32 0.0, %v4592
        %v4594 = vpop.f32.mrb[0].mxu0
        %v4595 = vpop.f32.mrb[0].mxu0
        %v4596 = vadd.f32 0.0, %v4595
        %v4597 = vpop.f32.mrb[0].mxu0
        %4598 = vmatprep.mubr.bf16.mxu0 0
        %4599 = vmatmul.mubr.bf16.gmra.mrb[0].mxu0 %v4481
        %v4600 = vpop.f32.mrb[0].mxu0
        %v4601 = vadd.f32 0.0, %v4600
        %v4602 = vpop.f32.mrb[0].mxu0
        %v4603 = vpop.f32.mrb[0].mxu0
        %v4604 = vadd.f32 0.0, %v4603
        %v4605 = vpop.f32.mrb[0].mxu0
        %4606 = vmatprep.mubr.bf16.mxu0 0
        %4607 = vmatmul.mubr.bf16.gmra.mrb[0].mxu0 %v4484
        %v4608 = vpop.f32.mrb[0].mxu0
        %v4609 = vadd.f32 0.0, %v4608
        %v4610 = vpop.f32.mrb[0].mxu0
        %v4611 = vpop.f32.mrb[0].mxu0
        %v4612 = vadd.f32 0.0, %v4611
        %v4613 = vpop.f32.mrb[0].mxu0
        %4614 = vmatprep.mubr.bf16.mxu0 0
        %4615 = vmatmul.mubr.bf16.gmra.mrb[0].mxu0 %v4487
        %v4616 = vpop.f32.mrb[0].mxu0
        %v4617 = vadd.f32 0.0, %v4616
        %v4618 = vpop.f32.mrb[0].mxu0
        %v4619 = vpop.f32.mrb[0].mxu0
        %v4620 = vadd.f32 0.0, %v4619
        %v4621 = vpop.f32.mrb[0].mxu0
        %4622 = vmatprep.mubr.bf16.mxu0 0
        %4623 = vmatmul.mubr.bf16.gmra.mrb[0].mxu0 %v4490
        %v4624 = vpop.f32.mrb[0].mxu0
        %v4625 = vadd.f32 0.0, %v4624
        %v4626 = vpop.f32.mrb[0].mxu0
        %v4627 = vpop.f32.mrb[0].mxu0
        %v4628 = vadd.f32 0.0, %v4627
        %v4629 = vpop.f32.mrb[0].mxu0
        %4630 = vmatprep.mubr.bf16.mxu0 0
        %4631 = vmatmul.mubr.bf16.gmra.mrb[0].mxu0 %v4493
        %v4632 = vpop.f32.mrb[0].mxu0
        %v4633 = vadd.f32 0.0, %v4632
        %v4634 = vpop.f32.mrb[0].mxu0
        %v4635 = vpop.f32.mrb[0].mxu0
        %v4636 = vadd.f32 0.0, %v4635
        %v4637 = vpop.f32.mrb[0].mxu0
        %4638 = vmatprep.mubr.bf16.mxu0 0
        %4639 = vmatmul.mubr.bf16.gmra.mrb[0].mxu0 %v4496
        %v4640 = vpop.f32.mrb[0].mxu0
        %v4641 = vadd.f32 0.0, %v4640
        %v4642 = vpop.f32.mrb[0].mxu0
        %v4643 = vpop.f32.mrb[0].mxu0
        %v4644 = vadd.f32 0.0, %v4643
        %v4645 = vpop.f32.mrb[0].mxu0
        %4646 = vmatprep.mubr.bf16.mxu0 0
        %4647 = vmatmul.mubr.bf16.gmra.mrb[0].mxu0 %v4499
        %v4648 = vpop.f32.mrb[0].mxu0
        %v4649 = vadd.f32 0.0, %v4648
        %v4650 = vpop.f32.mrb[0].mxu0
        %v4651 = vpop.f32.mrb[0].mxu0
        %v4652 = vadd.f32 0.0, %v4651
        %v4653 = vpop.f32.mrb[0].mxu0
        %4654 = vmatprep.mubr.bf16.mxu0 0
        %4655 = vmatmul.mubr.bf16.gmra.mrb[0].mxu0 %v4502
        %v4656 = vpop.f32.mrb[0].mxu0
        %v4657 = vadd.f32 0.0, %v4656
        %v4658 = vpop.f32.mrb[0].mxu0
        %v4659 = vpop.f32.mrb[0].mxu0
        %v4660 = vadd.f32 0.0, %v4659
        %v4661 = vpop.f32.mrb[0].mxu0
        %4662 = vmatprep.mubr.bf16.mxu0 0
        %4663 = vmatmul.mubr.bf16.gmra.mrb[0].mxu0 %v4505
        %v4664 = vpop.f32.mrb[0].mxu0
        %v4665 = vadd.f32 0.0, %v4664
        %v4666 = vpop.f32.mrb[0].mxu0
        %v4667 = vpop.f32.mrb[0].mxu0
        %v4668 = vadd.f32 0.0, %v4667
        %v4669 = vpop.f32.mrb[0].mxu0
        %4670 = vdwg.mxu0
        %v4671 = vadd.f32 %v4255, %v4545
        %v4672 = vadd.f32 %v4256, %v4548
        %v4673 = vadd.f32 %v4257, %v4553
        %v4674 = vadd.f32 %v4258, %v4556
        %v4675 = vadd.f32 %v4259, %v4561
        %v4676 = vadd.f32 %v4260, %v4564
        %v4677 = vadd.f32 %v4261, %v4569
        %v4678 = vadd.f32 %v4262, %v4572
        %v4679 = vadd.f32 %v4263, %v4577
        %v4680 = vadd.f32 %v4264, %v4580
        %v4681 = vadd.f32 %v4265, %v4585
        %v4682 = vadd.f32 %v4266, %v4588
        %v4683 = vadd.f32 %v4267, %v4593
        %v4684 = vadd.f32 %v4268, %v4596
        %v4685 = vadd.f32 %v4269, %v4601
        %v4686 = vadd.f32 %v4270, %v4604
        %v4687 = vadd.f32 %v4271, %v4609
        %v4688 = vadd.f32 %v4272, %v4612
        %v4689 = vadd.f32 %v4273, %v4617
        %v4690 = vadd.f32 %v4274, %v4620
        %v4691 = vadd.f32 %v4275, %v4625
        %v4692 = vadd.f32 %v4276, %v4628
        %v4693 = vadd.f32 %v4277, %v4633
        %v4694 = vadd.f32 %v4278, %v4636
        %v4695 = vadd.f32 %v4279, %v4641
        %v4696 = vadd.f32 %v4280, %v4644
        %v4697 = vadd.f32 %v4281, %v4649
        %v4698 = vadd.f32 %v4282, %v4652
        %v4699 = vadd.f32 %v4283, %v4657
        %v4700 = vadd.f32 %v4284, %v4660
        %v4701 = vadd.f32 %v4285, %v4665
        %v4702 = vadd.f32 %v4286, %v4668
        %4703 = vst [vmem:[#allocation3] sm:$0xff] %v4671
        %4704 = vst [vmem:[#allocation3 + $0x8] sm:$0xff] %v4672
        %4705 = vst [vmem:[#allocation3 + $0x10] sm:$0xff] %v4673
        %4706 = vst [vmem:[#allocation3 + $0x18] sm:$0xff] %v4674
        %4707 = vst [vmem:[#allocation3 + $0x20] sm:$0xff] %v4675
        %4708 = vst [vmem:[#allocation3 + $0x28] sm:$0xff] %v4676
        %4709 = vst [vmem:[#allocation3 + $0x30] sm:$0xff] %v4677
        %4710 = vst [vmem:[#allocation3 + $0x38] sm:$0xff] %v4678
        %4711 = vst [vmem:[#allocation3 + $0x40] sm:$0xff] %v4679
        %4712 = vst [vmem:[#allocation3 + $0x48] sm:$0xff] %v4680
        %4713 = vst [vmem:[#allocation3 + $0x50] sm:$0xff] %v4681
        %4714 = vst [vmem:[#allocation3 + $0x58] sm:$0xff] %v4682
        %4715 = vst [vmem:[#allocation3 + $0x60] sm:$0xff] %v4683
        %4716 = vst [vmem:[#allocation3 + $0x68] sm:$0xff] %v4684
        %4717 = vst [vmem:[#allocation3 + $0x70] sm:$0xff] %v4685
        %4718 = vst [vmem:[#allocation3 + $0x78] sm:$0xff] %v4686
        %4719 = vst [vmem:[#allocation3 + $0x80] sm:$0xff] %v4687
        %4720 = vst [vmem:[#allocation3 + $0x88] sm:$0xff] %v4688
        %4721 = vst [vmem:[#allocation3 + $0x90] sm:$0xff] %v4689
        %4722 = vst [vmem:[#allocation3 + $0x98] sm:$0xff] %v4690
        %4723 = vst [vmem:[#allocation3 + $0xa0] sm:$0xff] %v4691
        %4724 = vst [vmem:[#allocation3 + $0xa8] sm:$0xff] %v4692
        %4725 = vst [vmem:[#allocation3 + $0xb0] sm:$0xff] %v4693
        %4726 = vst [vmem:[#allocation3 + $0xb8] sm:$0xff] %v4694
        %4727 = vst [vmem:[#allocation3 + $0xc0] sm:$0xff] %v4695
        %4728 = vst [vmem:[#allocation3 + $0xc8] sm:$0xff] %v4696
        %4729 = vst [vmem:[#allocation3 + $0xd0] sm:$0xff] %v4697
        %4730 = vst [vmem:[#allocation3 + $0xd8] sm:$0xff] %v4698
        %4731 = vst [vmem:[#allocation3 + $0xe0] sm:$0xff] %v4699
        %4732 = vst [vmem:[#allocation3 + $0xe8] sm:$0xff] %v4700
        %4733 = vst [vmem:[#allocation3 + $0xf0] sm:$0xff] %v4701
        %4734 = vst [vmem:[#allocation3 + $0xf8] sm:$0xff] %v4702
        %v4735 = vld [vmem:[#allocation3] sm:$0xff]
        %v4736 = vld [vmem:[#allocation3 + $0x8] sm:$0xff]
        %v4737 = vld [vmem:[#allocation3 + $0x10] sm:$0xff]
        %v4738 = vld [vmem:[#allocation3 + $0x18] sm:$0xff]
        %v4739 = vld [vmem:[#allocation3 + $0x20] sm:$0xff]
        %v4740 = vld [vmem:[#allocation3 + $0x28] sm:$0xff]
        %v4741 = vld [vmem:[#allocation3 + $0x30] sm:$0xff]
        %v4742 = vld [vmem:[#allocation3 + $0x38] sm:$0xff]
        %v4743 = vld [vmem:[#allocation3 + $0x40] sm:$0xff]
        %v4744 = vld [vmem:[#allocation3 + $0x48] sm:$0xff]
        %v4745 = vld [vmem:[#allocation3 + $0x50] sm:$0xff]
        %v4746 = vld [vmem:[#allocation3 + $0x58] sm:$0xff]
        %v4747 = vld [vmem:[#allocation3 + $0x60] sm:$0xff]
        %v4748 = vld [vmem:[#allocation3 + $0x68] sm:$0xff]
        %v4749 = vld [vmem:[#allocation3 + $0x70] sm:$0xff]
        %v4750 = vld [vmem:[#allocation3 + $0x78] sm:$0xff]
        %v4751 = vld [vmem:[#allocation3 + $0x80] sm:$0xff]
        %v4752 = vld [vmem:[#allocation3 + $0x88] sm:$0xff]
        %v4753 = vld [vmem:[#allocation3 + $0x90] sm:$0xff]
        %v4754 = vld [vmem:[#allocation3 + $0x98] sm:$0xff]
        %v4755 = vld [vmem:[#allocation3 + $0xa0] sm:$0xff]
        %v4756 = vld [vmem:[#allocation3 + $0xa8] sm:$0xff]
        %v4757 = vld [vmem:[#allocation3 + $0xb0] sm:$0xff]
        %v4758 = vld [vmem:[#allocation3 + $0xb8] sm:$0xff]
        %v4759 = vld [vmem:[#allocation3 + $0xc0] sm:$0xff]
        %v4760 = vld [vmem:[#allocation3 + $0xc8] sm:$0xff]
        %v4761 = vld [vmem:[#allocation3 + $0xd0] sm:$0xff]
        %v4762 = vld [vmem:[#allocation3 + $0xd8] sm:$0xff]
        %v4763 = vld [vmem:[#allocation3 + $0xe0] sm:$0xff]
        %v4764 = vld [vmem:[#allocation3 + $0xe8] sm:$0xff]
        %v4765 = vld [vmem:[#allocation3 + $0xf0] sm:$0xff]
        %v4766 = vld [vmem:[#allocation3 + $0xf8] sm:$0xff]
        %v4767 = vld [vmem:[#allocation2 + $0x68] sm:$0xfe]
        %v4768 = vld [vmem:[#allocation2 + $0x70] sm:$0xff]
        %v4769 = vld [vmem:[#allocation2 + $0x78] sm:$0xff]
        %v4770 = vld [vmem:[#allocation2 + $0x80] sm:$0xff]
        %v4771 = vld [vmem:[#allocation2 + $0x88] sm:$0xff]
        %v4772 = vld [vmem:[#allocation2 + $0x90] sm:$0xff]
        %v4773 = vld [vmem:[#allocation2 + $0x98] sm:$0xff]
        %v4774 = vld [vmem:[#allocation2 + $0xa0] sm:$0xff]
        %v4775 = vld [vmem:[#allocation2 + $0xa8] sm:$0xff]
        %v4776 = vld [vmem:[#allocation2 + $0xb0] sm:$0xff]
        %v4777 = vld [vmem:[#allocation2 + $0xb8] sm:$0xff]
        %v4778 = vld [vmem:[#allocation2 + $0xc0] sm:$0xff]
        %v4779 = vld [vmem:[#allocation2 + $0xc8] sm:$0xff]
        %v4780 = vld [vmem:[#allocation2 + $0xd0] sm:$0xff]
        %v4781 = vld [vmem:[#allocation2 + $0xd8] sm:$0xff]
        %v4782 = vld [vmem:[#allocation2 + $0xe0] sm:$0xff]
        %v4783 = vld [vmem:[#allocation2 + $0xe8] sm:$0x1]
        %s4784 = scalar_lea.vmem %s2, 20
        %v4785 = vld [vmem:[%s4784] sm:$0x3]
        %vm4803 = vcmask 1046528
        %v4804 = vrot.slane %v4767, 1
        %v4805 = vrot.slane %v4768, 1
        %v4806 = vsel %vm4803, %v4804, %v4805
        %v4807 = vrot.slane %v4769, 1
        %v4808 = vsel %vm4803, %v4805, %v4807
        %v4809 = vrot.slane %v4770, 1
        %v4810 = vsel %vm4803, %v4807, %v4809
        %v4811 = vrot.slane %v4771, 1
        %v4812 = vsel %vm4803, %v4809, %v4811
        %v4813 = vrot.slane %v4772, 1
        %v4814 = vsel %vm4803, %v4811, %v4813
        %v4815 = vrot.slane %v4773, 1
        %v4816 = vsel %vm4803, %v4813, %v4815
        %v4817 = vrot.slane %v4774, 1
        %v4818 = vsel %vm4803, %v4815, %v4817
        %v4819 = vrot.slane %v4775, 1
        %v4820 = vsel %vm4803, %v4817, %v4819
        %v4821 = vrot.slane %v4776, 1
        %v4822 = vsel %vm4803, %v4819, %v4821
        %v4823 = vrot.slane %v4777, 1
        %v4824 = vsel %vm4803, %v4821, %v4823
        %v4825 = vrot.slane %v4778, 1
        %v4826 = vsel %vm4803, %v4823, %v4825
        %v4827 = vrot.slane %v4779, 1
        %v4828 = vsel %vm4803, %v4825, %v4827
        %v4829 = vrot.slane %v4780, 1
        %v4830 = vsel %vm4803, %v4827, %v4829
        %v4831 = vrot.slane %v4781, 1
        %v4832 = vsel %vm4803, %v4829, %v4831
        %v4833 = vrot.slane %v4782, 1
        %v4834 = vsel %vm4803, %v4831, %v4833
        %v4835 = vrot.slane %v4783, 1
        %v4836 = vsel %vm4803, %v4833, %v4835
        %v4838 = vsel %vm440, %v4806, 0
        %v4841 = vsel %vm440, %v4808, 0
        %v4844 = vsel %vm440, %v4810, 0
        %v4847 = vsel %vm440, %v4812, 0
        %v4850 = vsel %vm440, %v4814, 0
        %v4853 = vsel %vm440, %v4816, 0
        %v4856 = vsel %vm440, %v4818, 0
        %v4859 = vsel %vm440, %v4820, 0
        %v4862 = vsel %vm440, %v4822, 0
        %v4865 = vsel %vm440, %v4824, 0
        %v4868 = vsel %vm440, %v4826, 0
        %v4871 = vsel %vm440, %v4828, 0
        %v4874 = vsel %vm440, %v4830, 0
        %v4877 = vsel %vm440, %v4832, 0
        %v4880 = vsel %vm440, %v4834, 0
        %v4883 = vsel %vm440, %v4836, 0
        %v4886 = vsel %vm666, %v4785, 0
        %4888 = vmatprep.subr.bf16.mxu0 0
        %4889 = vmatpush1.bf16.msra.mxu0 %v4886
        %4890 = vmatprep.subr.bf16.mxu0 0
        %4891 = vmatpush1.bf16.msra.mxu0 0
        %4892 = vmatprep.subr.bf16.mxu0 0
        %4893 = vmatpush1.bf16.msra.mxu0 0
        %4894 = vmatprep.subr.bf16.mxu0 0
        %4895 = vmatpush1.bf16.msra.mxu0 0
        %4896 = vmatprep.subr.bf16.mxu0 0
        %4897 = vmatpush1.bf16.msra.mxu0 0
        %4898 = vmatprep.subr.bf16.mxu0 0
        %4899 = vmatpush1.bf16.msra.mxu0 0
        %4900 = vmatprep.subr.bf16.mxu0 0
        %4901 = vmatpush1.bf16.msra.mxu0 0
        %4902 = vmatprep.subr.bf16.mxu0 0
        %4903 = vmatpush1.bf16.msra.mxu0 0
        %4904 = vmatprep.subr.bf16.mxu0 0
        %4905 = vmatpush1.bf16.msra.mxu0 0
        %4906 = vmatprep.subr.bf16.mxu0 0
        %4907 = vmatpush1.bf16.msra.mxu0 0
        %4908 = vmatprep.subr.bf16.mxu0 0
        %4909 = vmatpush1.bf16.msra.mxu0 0
        %4910 = vmatprep.subr.bf16.mxu0 0
        %4911 = vmatpush1.bf16.msra.mxu0 0
        %4912 = vmatprep.subr.bf16.mxu0 0
        %4913 = vmatpush1.bf16.msra.mxu0 0
        %4914 = vmatprep.subr.bf16.mxu0 0
        %4915 = vmatpush1.bf16.msra.mxu0 0
        %4916 = vmatprep.subr.bf16.mxu0 0
        %4917 = vmatpush1.bf16.msra.mxu0 0
        %4918 = vmatprep.subr.bf16.mxu0 0
        %4919 = vmatpush1.bf16.msra.mxu0 0
        %4920 = vmatprep.mubr.bf16.mxu0 0
        %4921 = vmatmul.mubr.bf16.gmra.mrb[0].mxu0 %v4838
        %v4922 = vpop.f32.mrb[0].mxu0
        %v4923 = vadd.f32 0.0, %v4922
        %v4924 = vpop.f32.mrb[0].mxu0
        %v4925 = vpop.f32.mrb[0].mxu0
        %v4926 = vadd.f32 0.0, %v4925
        %v4927 = vpop.f32.mrb[0].mxu0
        %4928 = vmatprep.mubr.bf16.mxu0 0
        %4929 = vmatmul.mubr.bf16.gmra.mrb[0].mxu0 %v4841
        %v4930 = vpop.f32.mrb[0].mxu0
        %v4931 = vadd.f32 0.0, %v4930
        %v4932 = vpop.f32.mrb[0].mxu0
        %v4933 = vpop.f32.mrb[0].mxu0
        %v4934 = vadd.f32 0.0, %v4933
        %v4935 = vpop.f32.mrb[0].mxu0
        %4936 = vmatprep.mubr.bf16.mxu0 0
        %4937 = vmatmul.mubr.bf16.gmra.mrb[0].mxu0 %v4844
        %v4938 = vpop.f32.mrb[0].mxu0
        %v4939 = vadd.f32 0.0, %v4938
        %v4940 = vpop.f32.mrb[0].mxu0
        %v4941 = vpop.f32.mrb[0].mxu0
        %v4942 = vadd.f32 0.0, %v4941
        %v4943 = vpop.f32.mrb[0].mxu0
        %4944 = vmatprep.mubr.bf16.mxu0 0
        %4945 = vmatmul.mubr.bf16.gmra.mrb[0].mxu0 %v4847
        %v4946 = vpop.f32.mrb[0].mxu0
        %v4947 = vadd.f32 0.0, %v4946
        %v4948 = vpop.f32.mrb[0].mxu0
        %v4949 = vpop.f32.mrb[0].mxu0
        %v4950 = vadd.f32 0.0, %v4949
        %v4951 = vpop.f32.mrb[0].mxu0
        %4952 = vmatprep.mubr.bf16.mxu0 0
        %4953 = vmatmul.mubr.bf16.gmra.mrb[0].mxu0 %v4850
        %v4954 = vpop.f32.mrb[0].mxu0
        %v4955 = vadd.f32 0.0, %v4954
        %v4956 = vpop.f32.mrb[0].mxu0
        %v4957 = vpop.f32.mrb[0].mxu0
        %v4958 = vadd.f32 0.0, %v4957
        %v4959 = vpop.f32.mrb[0].mxu0
        %4960 = vmatprep.mubr.bf16.mxu0 0
        %4961 = vmatmul.mubr.bf16.gmra.mrb[0].mxu0 %v4853
        %v4962 = vpop.f32.mrb[0].mxu0
        %v4963 = vadd.f32 0.0, %v4962
        %v4964 = vpop.f32.mrb[0].mxu0
        %v4965 = vpop.f32.mrb[0].mxu0
        %v4966 = vadd.f32 0.0, %v4965
        %v4967 = vpop.f32.mrb[0].mxu0
        %4968 = vmatprep.mubr.bf16.mxu0 0
        %4969 = vmatmul.mubr.bf16.gmra.mrb[0].mxu0 %v4856
        %v4970 = vpop.f32.mrb[0].mxu0
        %v4971 = vadd.f32 0.0, %v4970
        %v4972 = vpop.f32.mrb[0].mxu0
        %v4973 = vpop.f32.mrb[0].mxu0
        %v4974 = vadd.f32 0.0, %v4973
        %v4975 = vpop.f32.mrb[0].mxu0
        %4976 = vmatprep.mubr.bf16.mxu0 0
        %4977 = vmatmul.mubr.bf16.gmra.mrb[0].mxu0 %v4859
        %v4978 = vpop.f32.mrb[0].mxu0
        %v4979 = vadd.f32 0.0, %v4978
        %v4980 = vpop.f32.mrb[0].mxu0
        %v4981 = vpop.f32.mrb[0].mxu0
        %v4982 = vadd.f32 0.0, %v4981
        %v4983 = vpop.f32.mrb[0].mxu0
        %4984 = vmatprep.mubr.bf16.mxu0 0
        %4985 = vmatmul.mubr.bf16.gmra.mrb[0].mxu0 %v4862
        %v4986 = vpop.f32.mrb[0].mxu0
        %v4987 = vadd.f32 0.0, %v4986
        %v4988 = vpop.f32.mrb[0].mxu0
        %v4989 = vpop.f32.mrb[0].mxu0
        %v4990 = vadd.f32 0.0, %v4989
        %v4991 = vpop.f32.mrb[0].mxu0
        %4992 = vmatprep.mubr.bf16.mxu0 0
        %4993 = vmatmul.mubr.bf16.gmra.mrb[0].mxu0 %v4865
        %v4994 = vpop.f32.mrb[0].mxu0
        %v4995 = vadd.f32 0.0, %v4994
        %v4996 = vpop.f32.mrb[0].mxu0
        %v4997 = vpop.f32.mrb[0].mxu0
        %v4998 = vadd.f32 0.0, %v4997
        %v4999 = vpop.f32.mrb[0].mxu0
        %5000 = vmatprep.mubr.bf16.mxu0 0
        %5001 = vmatmul.mubr.bf16.gmra.mrb[0].mxu0 %v4868
        %v5002 = vpop.f32.mrb[0].mxu0
        %v5003 = vadd.f32 0.0, %v5002
        %v5004 = vpop.f32.mrb[0].mxu0
        %v5005 = vpop.f32.mrb[0].mxu0
        %v5006 = vadd.f32 0.0, %v5005
        %v5007 = vpop.f32.mrb[0].mxu0
        %5008 = vmatprep.mubr.bf16.mxu0 0
        %5009 = vmatmul.mubr.bf16.gmra.mrb[0].mxu0 %v4871
        %v5010 = vpop.f32.mrb[0].mxu0
        %v5011 = vadd.f32 0.0, %v5010
        %v5012 = vpop.f32.mrb[0].mxu0
        %v5013 = vpop.f32.mrb[0].mxu0
        %v5014 = vadd.f32 0.0, %v5013
        %v5015 = vpop.f32.mrb[0].mxu0
        %5016 = vmatprep.mubr.bf16.mxu0 0
        %5017 = vmatmul.mubr.bf16.gmra.mrb[0].mxu0 %v4874
        %v5018 = vpop.f32.mrb[0].mxu0
        %v5019 = vadd.f32 0.0, %v5018
        %v5020 = vpop.f32.mrb[0].mxu0
        %v5021 = vpop.f32.mrb[0].mxu0
        %v5022 = vadd.f32 0.0, %v5021
        %v5023 = vpop.f32.mrb[0].mxu0
        %5024 = vmatprep.mubr.bf16.mxu0 0
        %5025 = vmatmul.mubr.bf16.gmra.mrb[0].mxu0 %v4877
        %v5026 = vpop.f32.mrb[0].mxu0
        %v5027 = vadd.f32 0.0, %v5026
        %v5028 = vpop.f32.mrb[0].mxu0
        %v5029 = vpop.f32.mrb[0].mxu0
        %v5030 = vadd.f32 0.0, %v5029
        %v5031 = vpop.f32.mrb[0].mxu0
        %5032 = vmatprep.mubr.bf16.mxu0 0
        %5033 = vmatmul.mubr.bf16.gmra.mrb[0].mxu0 %v4880
        %v5034 = vpop.f32.mrb[0].mxu0
        %v5035 = vadd.f32 0.0, %v5034
        %v5036 = vpop.f32.mrb[0].mxu0
        %v5037 = vpop.f32.mrb[0].mxu0
        %v5038 = vadd.f32 0.0, %v5037
        %v5039 = vpop.f32.mrb[0].mxu0
        %5040 = vmatprep.mubr.bf16.mxu0 0
        %5041 = vmatmul.mubr.bf16.gmra.mrb[0].mxu0 %v4883
        %v5042 = vpop.f32.mrb[0].mxu0
        %v5043 = vadd.f32 0.0, %v5042
        %v5044 = vpop.f32.mrb[0].mxu0
        %v5045 = vpop.f32.mrb[0].mxu0
        %v5046 = vadd.f32 0.0, %v5045
        %v5047 = vpop.f32.mrb[0].mxu0
        %5048 = vdwg.mxu0
        %v5049 = vadd.f32 %v4735, %v4923
        %v5050 = vadd.f32 %v4736, %v4926
        %v5051 = vadd.f32 %v4737, %v4931
        %v5052 = vadd.f32 %v4738, %v4934
        %v5053 = vadd.f32 %v4739, %v4939
        %v5054 = vadd.f32 %v4740, %v4942
        %v5055 = vadd.f32 %v4741, %v4947
        %v5056 = vadd.f32 %v4742, %v4950
        %v5057 = vadd.f32 %v4743, %v4955
        %v5058 = vadd.f32 %v4744, %v4958
        %v5059 = vadd.f32 %v4745, %v4963
        %v5060 = vadd.f32 %v4746, %v4966
        %v5061 = vadd.f32 %v4747, %v4971
        %v5062 = vadd.f32 %v4748, %v4974
        %v5063 = vadd.f32 %v4749, %v4979
        %v5064 = vadd.f32 %v4750, %v4982
        %v5065 = vadd.f32 %v4751, %v4987
        %v5066 = vadd.f32 %v4752, %v4990
        %v5067 = vadd.f32 %v4753, %v4995
        %v5068 = vadd.f32 %v4754, %v4998
        %v5069 = vadd.f32 %v4755, %v5003
        %v5070 = vadd.f32 %v4756, %v5006
        %v5071 = vadd.f32 %v4757, %v5011
        %v5072 = vadd.f32 %v4758, %v5014
        %v5073 = vadd.f32 %v4759, %v5019
        %v5074 = vadd.f32 %v4760, %v5022
        %v5075 = vadd.f32 %v4761, %v5027
        %v5076 = vadd.f32 %v4762, %v5030
        %v5077 = vadd.f32 %v4763, %v5035
        %v5078 = vadd.f32 %v4764, %v5038
        %v5079 = vadd.f32 %v4765, %v5043
        %v5080 = vadd.f32 %v4766, %v5046
        %5081 = vst [vmem:[#allocation3] sm:$0xff] %v5049
        %5082 = vst [vmem:[#allocation3 + $0x8] sm:$0xff] %v5050
        %5083 = vst [vmem:[#allocation3 + $0x10] sm:$0xff] %v5051
        %5084 = vst [vmem:[#allocation3 + $0x18] sm:$0xff] %v5052
        %5085 = vst [vmem:[#allocation3 + $0x20] sm:$0xff] %v5053
        %5086 = vst [vmem:[#allocation3 + $0x28] sm:$0xff] %v5054
        %5087 = vst [vmem:[#allocation3 + $0x30] sm:$0xff] %v5055
        %5088 = vst [vmem:[#allocation3 + $0x38] sm:$0xff] %v5056
        %5089 = vst [vmem:[#allocation3 + $0x40] sm:$0xff] %v5057
        %5090 = vst [vmem:[#allocation3 + $0x48] sm:$0xff] %v5058
        %5091 = vst [vmem:[#allocation3 + $0x50] sm:$0xff] %v5059
        %5092 = vst [vmem:[#allocation3 + $0x58] sm:$0xff] %v5060
        %5093 = vst [vmem:[#allocation3 + $0x60] sm:$0xff] %v5061
        %5094 = vst [vmem:[#allocation3 + $0x68] sm:$0xff] %v5062
        %5095 = vst [vmem:[#allocation3 + $0x70] sm:$0xff] %v5063
        %5096 = vst [vmem:[#allocation3 + $0x78] sm:$0xff] %v5064
        %5097 = vst [vmem:[#allocation3 + $0x80] sm:$0xff] %v5065
        %5098 = vst [vmem:[#allocation3 + $0x88] sm:$0xff] %v5066
        %5099 = vst [vmem:[#allocation3 + $0x90] sm:$0xff] %v5067
        %5100 = vst [vmem:[#allocation3 + $0x98] sm:$0xff] %v5068
        %5101 = vst [vmem:[#allocation3 + $0xa0] sm:$0xff] %v5069
        %5102 = vst [vmem:[#allocation3 + $0xa8] sm:$0xff] %v5070
        %5103 = vst [vmem:[#allocation3 + $0xb0] sm:$0xff] %v5071
        %5104 = vst [vmem:[#allocation3 + $0xb8] sm:$0xff] %v5072
        %5105 = vst [vmem:[#allocation3 + $0xc0] sm:$0xff] %v5073
        %5106 = vst [vmem:[#allocation3 + $0xc8] sm:$0xff] %v5074
        %5107 = vst [vmem:[#allocation3 + $0xd0] sm:$0xff] %v5075
        %5108 = vst [vmem:[#allocation3 + $0xd8] sm:$0xff] %v5076
        %5109 = vst [vmem:[#allocation3 + $0xe0] sm:$0xff] %v5077
        %5110 = vst [vmem:[#allocation3 + $0xe8] sm:$0xff] %v5078
        %5111 = vst [vmem:[#allocation3 + $0xf0] sm:$0xff] %v5079
        %5112 = vst [vmem:[#allocation3 + $0xf8] sm:$0xff] %v5080
        %v5113 = vld [vmem:[#allocation3] sm:$0xff]
        %v5114 = vld [vmem:[#allocation3 + $0x8] sm:$0xff]
        %v5115 = vld [vmem:[#allocation3 + $0x10] sm:$0xff]
        %v5116 = vld [vmem:[#allocation3 + $0x18] sm:$0xff]
        %v5117 = vld [vmem:[#allocation3 + $0x20] sm:$0xff]
        %v5118 = vld [vmem:[#allocation3 + $0x28] sm:$0xff]
        %v5119 = vld [vmem:[#allocation3 + $0x30] sm:$0xff]
        %v5120 = vld [vmem:[#allocation3 + $0x38] sm:$0xff]
        %v5121 = vld [vmem:[#allocation3 + $0x40] sm:$0xff]
        %v5122 = vld [vmem:[#allocation3 + $0x48] sm:$0xff]
        %v5123 = vld [vmem:[#allocation3 + $0x50] sm:$0xff]
        %v5124 = vld [vmem:[#allocation3 + $0x58] sm:$0xff]
        %v5125 = vld [vmem:[#allocation3 + $0x60] sm:$0xff]
        %v5126 = vld [vmem:[#allocation3 + $0x68] sm:$0xff]
        %v5127 = vld [vmem:[#allocation3 + $0x70] sm:$0xff]
        %v5128 = vld [vmem:[#allocation3 + $0x78] sm:$0xff]
        %v5129 = vld [vmem:[#allocation3 + $0x80] sm:$0xff]
        %v5130 = vld [vmem:[#allocation3 + $0x88] sm:$0xff]
        %v5131 = vld [vmem:[#allocation3 + $0x90] sm:$0xff]
        %v5132 = vld [vmem:[#allocation3 + $0x98] sm:$0xff]
        %v5133 = vld [vmem:[#allocation3 + $0xa0] sm:$0xff]
        %v5134 = vld [vmem:[#allocation3 + $0xa8] sm:$0xff]
        %v5135 = vld [vmem:[#allocation3 + $0xb0] sm:$0xff]
        %v5136 = vld [vmem:[#allocation3 + $0xb8] sm:$0xff]
        %v5137 = vld [vmem:[#allocation3 + $0xc0] sm:$0xff]
        %v5138 = vld [vmem:[#allocation3 + $0xc8] sm:$0xff]
        %v5139 = vld [vmem:[#allocation3 + $0xd0] sm:$0xff]
        %v5140 = vld [vmem:[#allocation3 + $0xd8] sm:$0xff]
        %v5141 = vld [vmem:[#allocation3 + $0xe0] sm:$0xff]
        %v5142 = vld [vmem:[#allocation3 + $0xe8] sm:$0xff]
        %v5143 = vld [vmem:[#allocation3 + $0xf0] sm:$0xff]
        %v5144 = vld [vmem:[#allocation3 + $0xf8] sm:$0xff]
        %v5145 = vld [vmem:[#allocation2 + $0x68] sm:$0xfe]
        %v5146 = vld [vmem:[#allocation2 + $0x70] sm:$0xff]
        %v5147 = vld [vmem:[#allocation2 + $0x78] sm:$0xff]
        %v5148 = vld [vmem:[#allocation2 + $0x80] sm:$0xff]
        %v5149 = vld [vmem:[#allocation2 + $0x88] sm:$0xff]
        %v5150 = vld [vmem:[#allocation2 + $0x90] sm:$0xff]
        %v5151 = vld [vmem:[#allocation2 + $0x98] sm:$0xff]
        %v5152 = vld [vmem:[#allocation2 + $0xa0] sm:$0xff]
        %v5153 = vld [vmem:[#allocation2 + $0xa8] sm:$0xff]
        %v5154 = vld [vmem:[#allocation2 + $0xb0] sm:$0xff]
        %v5155 = vld [vmem:[#allocation2 + $0xb8] sm:$0xff]
        %v5156 = vld [vmem:[#allocation2 + $0xc0] sm:$0xff]
        %v5157 = vld [vmem:[#allocation2 + $0xc8] sm:$0xff]
        %v5158 = vld [vmem:[#allocation2 + $0xd0] sm:$0xff]
        %v5159 = vld [vmem:[#allocation2 + $0xd8] sm:$0xff]
        %v5160 = vld [vmem:[#allocation2 + $0xe0] sm:$0xff]
        %v5161 = vld [vmem:[#allocation2 + $0xe8] sm:$0x3]
        %s5162 = scalar_lea.vmem %s2, 22
        %v5163 = vld [vmem:[%s5162] sm:$0x3]
        %vm5164 = vsmask.f32 6400
        %v5166 = vshrl.u32 %v5145, 16
        %v5168 = vrot.slane %v5166, 1
        %v5169 = vshll.u32 %v5145, 16
        %v5171 = vrot.slane %v5169, 2
        %v5172 = vor.u32 %v5168, %v5171
        %v5174 = vshrl.u32 %v5146, 16
        %v5176 = vrot.slane %v5174, 1
        %v5177 = vshll.u32 %v5146, 16
        %v5179 = vrot.slane %v5177, 2
        %v5180 = vor.u32 %v5176, %v5179
        %v5181 = vsel %vm5164, %v5172, %v5180
        %v5183 = vshrl.u32 %v5147, 16
        %v5185 = vrot.slane %v5183, 1
        %v5186 = vshll.u32 %v5147, 16
        %v5188 = vrot.slane %v5186, 2
        %v5189 = vor.u32 %v5185, %v5188
        %v5190 = vsel %vm5164, %v5180, %v5189
        %v5192 = vshrl.u32 %v5148, 16
        %v5194 = vrot.slane %v5192, 1
        %v5195 = vshll.u32 %v5148, 16
        %v5197 = vrot.slane %v5195, 2
        %v5198 = vor.u32 %v5194, %v5197
        %v5199 = vsel %vm5164, %v5189, %v5198
        %v5201 = vshrl.u32 %v5149, 16
        %v5203 = vrot.slane %v5201, 1
        %v5204 = vshll.u32 %v5149, 16
        %v5206 = vrot.slane %v5204, 2
        %v5207 = vor.u32 %v5203, %v5206
        %v5208 = vsel %vm5164, %v5198, %v5207
        %v5210 = vshrl.u32 %v5150, 16
        %v5212 = vrot.slane %v5210, 1
        %v5213 = vshll.u32 %v5150, 16
        %v5215 = vrot.slane %v5213, 2
        %v5216 = vor.u32 %v5212, %v5215
        %v5217 = vsel %vm5164, %v5207, %v5216
        %v5219 = vshrl.u32 %v5151, 16
        %v5221 = vrot.slane %v5219, 1
        %v5222 = vshll.u32 %v5151, 16
        %v5224 = vrot.slane %v5222, 2
        %v5225 = vor.u32 %v5221, %v5224
        %v5226 = vsel %vm5164, %v5216, %v5225
        %v5228 = vshrl.u32 %v5152, 16
        %v5230 = vrot.slane %v5228, 1
        %v5231 = vshll.u32 %v5152, 16
        %v5233 = vrot.slane %v5231, 2
        %v5234 = vor.u32 %v5230, %v5233
        %v5235 = vsel %vm5164, %v5225, %v5234
        %v5237 = vshrl.u32 %v5153, 16
        %v5239 = vrot.slane %v5237, 1
        %v5240 = vshll.u32 %v5153, 16
        %v5242 = vrot.slane %v5240, 2
        %v5243 = vor.u32 %v5239, %v5242
        %v5244 = vsel %vm5164, %v5234, %v5243
        %v5246 = vshrl.u32 %v5154, 16
        %v5248 = vrot.slane %v5246, 1
        %v5249 = vshll.u32 %v5154, 16
        %v5251 = vrot.slane %v5249, 2
        %v5252 = vor.u32 %v5248, %v5251
        %v5253 = vsel %vm5164, %v5243, %v5252
        %v5255 = vshrl.u32 %v5155, 16
        %v5257 = vrot.slane %v5255, 1
        %v5258 = vshll.u32 %v5155, 16
        %v5260 = vrot.slane %v5258, 2
        %v5261 = vor.u32 %v5257, %v5260
        %v5262 = vsel %vm5164, %v5252, %v5261
        %v5264 = vshrl.u32 %v5156, 16
        %v5266 = vrot.slane %v5264, 1
        %v5267 = vshll.u32 %v5156, 16
        %v5269 = vrot.slane %v5267, 2
        %v5270 = vor.u32 %v5266, %v5269
        %v5271 = vsel %vm5164, %v5261, %v5270
        %v5273 = vshrl.u32 %v5157, 16
        %v5275 = vrot.slane %v5273, 1
        %v5276 = vshll.u32 %v5157, 16
        %v5278 = vrot.slane %v5276, 2
        %v5279 = vor.u32 %v5275, %v5278
        %v5280 = vsel %vm5164, %v5270, %v5279
        %v5282 = vshrl.u32 %v5158, 16
        %v5284 = vrot.slane %v5282, 1
        %v5285 = vshll.u32 %v5158, 16
        %v5287 = vrot.slane %v5285, 2
        %v5288 = vor.u32 %v5284, %v5287
        %v5289 = vsel %vm5164, %v5279, %v5288
        %v5291 = vshrl.u32 %v5159, 16
        %v5293 = vrot.slane %v5291, 1
        %v5294 = vshll.u32 %v5159, 16
        %v5296 = vrot.slane %v5294, 2
        %v5297 = vor.u32 %v5293, %v5296
        %v5298 = vsel %vm5164, %v5288, %v5297
        %v5300 = vshrl.u32 %v5160, 16
        %v5302 = vrot.slane %v5300, 1
        %v5303 = vshll.u32 %v5160, 16
        %v5305 = vrot.slane %v5303, 2
        %v5306 = vor.u32 %v5302, %v5305
        %v5307 = vsel %vm5164, %v5297, %v5306
        %v5309 = vshrl.u32 %v5161, 16
        %v5311 = vrot.slane %v5309, 1
        %v5312 = vshll.u32 %v5161, 16
        %v5314 = vrot.slane %v5312, 2
        %v5315 = vor.u32 %v5311, %v5314
        %v5316 = vsel %vm5164, %v5306, %v5315
        %v5318 = vsel %vm440, %v5181, 0
        %v5321 = vsel %vm440, %v5190, 0
        %v5324 = vsel %vm440, %v5199, 0
        %v5327 = vsel %vm440, %v5208, 0
        %v5330 = vsel %vm440, %v5217, 0
        %v5333 = vsel %vm440, %v5226, 0
        %v5336 = vsel %vm440, %v5235, 0
        %v5339 = vsel %vm440, %v5244, 0
        %v5342 = vsel %vm440, %v5253, 0
        %v5345 = vsel %vm440, %v5262, 0
        %v5348 = vsel %vm440, %v5271, 0
        %v5351 = vsel %vm440, %v5280, 0
        %v5354 = vsel %vm440, %v5289, 0
        %v5357 = vsel %vm440, %v5298, 0
        %v5360 = vsel %vm440, %v5307, 0
        %v5363 = vsel %vm440, %v5316, 0
        %v5366 = vsel %vm666, %v5163, 0
        %5368 = vmatprep.subr.bf16.mxu0 0
        %5369 = vmatpush1.bf16.msra.mxu0 %v5366
        %5370 = vmatprep.subr.bf16.mxu0 0
        %5371 = vmatpush1.bf16.msra.mxu0 0
        %5372 = vmatprep.subr.bf16.mxu0 0
        %5373 = vmatpush1.bf16.msra.mxu0 0
        %5374 = vmatprep.subr.bf16.mxu0 0
        %5375 = vmatpush1.bf16.msra.mxu0 0
        %5376 = vmatprep.subr.bf16.mxu0 0
        %5377 = vmatpush1.bf16.msra.mxu0 0
        %5378 = vmatprep.subr.bf16.mxu0 0
        %5379 = vmatpush1.bf16.msra.mxu0 0
        %5380 = vmatprep.subr.bf16.mxu0 0
        %5381 = vmatpush1.bf16.msra.mxu0 0
        %5382 = vmatprep.subr.bf16.mxu0 0
        %5383 = vmatpush1.bf16.msra.mxu0 0
        %5384 = vmatprep.subr.bf16.mxu0 0
        %5385 = vmatpush1.bf16.msra.mxu0 0
        %5386 = vmatprep.subr.bf16.mxu0 0
        %5387 = vmatpush1.bf16.msra.mxu0 0
        %5388 = vmatprep.subr.bf16.mxu0 0
        %5389 = vmatpush1.bf16.msra.mxu0 0
        %5390 = vmatprep.subr.bf16.mxu0 0
        %5391 = vmatpush1.bf16.msra.mxu0 0
        %5392 = vmatprep.subr.bf16.mxu0 0
        %5393 = vmatpush1.bf16.msra.mxu0 0
        %5394 = vmatprep.subr.bf16.mxu0 0
        %5395 = vmatpush1.bf16.msra.mxu0 0
        %5396 = vmatprep.subr.bf16.mxu0 0
        %5397 = vmatpush1.bf16.msra.mxu0 0
        %5398 = vmatprep.subr.bf16.mxu0 0
        %5399 = vmatpush1.bf16.msra.mxu0 0
        %5400 = vmatprep.mubr.bf16.mxu0 0
        %5401 = vmatmul.mubr.bf16.gmra.mrb[0].mxu0 %v5318
        %v5402 = vpop.f32.mrb[0].mxu0
        %v5403 = vadd.f32 0.0, %v5402
        %v5404 = vpop.f32.mrb[0].mxu0
        %v5405 = vpop.f32.mrb[0].mxu0
        %v5406 = vadd.f32 0.0, %v5405
        %v5407 = vpop.f32.mrb[0].mxu0
        %5408 = vmatprep.mubr.bf16.mxu0 0
        %5409 = vmatmul.mubr.bf16.gmra.mrb[0].mxu0 %v5321
        %v5410 = vpop.f32.mrb[0].mxu0
        %v5411 = vadd.f32 0.0, %v5410
        %v5412 = vpop.f32.mrb[0].mxu0
        %v5413 = vpop.f32.mrb[0].mxu0
        %v5414 = vadd.f32 0.0, %v5413
        %v5415 = vpop.f32.mrb[0].mxu0
        %5416 = vmatprep.mubr.bf16.mxu0 0
        %5417 = vmatmul.mubr.bf16.gmra.mrb[0].mxu0 %v5324
        %v5418 = vpop.f32.mrb[0].mxu0
        %v5419 = vadd.f32 0.0, %v5418
        %v5420 = vpop.f32.mrb[0].mxu0
        %v5421 = vpop.f32.mrb[0].mxu0
        %v5422 = vadd.f32 0.0, %v5421
        %v5423 = vpop.f32.mrb[0].mxu0
        %5424 = vmatprep.mubr.bf16.mxu0 0
        %5425 = vmatmul.mubr.bf16.gmra.mrb[0].mxu0 %v5327
        %v5426 = vpop.f32.mrb[0].mxu0
        %v5427 = vadd.f32 0.0, %v5426
        %v5428 = vpop.f32.mrb[0].mxu0
        %v5429 = vpop.f32.mrb[0].mxu0
        %v5430 = vadd.f32 0.0, %v5429
        %v5431 = vpop.f32.mrb[0].mxu0
        %5432 = vmatprep.mubr.bf16.mxu0 0
        %5433 = vmatmul.mubr.bf16.gmra.mrb[0].mxu0 %v5330
        %v5434 = vpop.f32.mrb[0].mxu0
        %v5435 = vadd.f32 0.0, %v5434
        %v5436 = vpop.f32.mrb[0].mxu0
        %v5437 = vpop.f32.mrb[0].mxu0
        %v5438 = vadd.f32 0.0, %v5437
        %v5439 = vpop.f32.mrb[0].mxu0
        %5440 = vmatprep.mubr.bf16.mxu0 0
        %5441 = vmatmul.mubr.bf16.gmra.mrb[0].mxu0 %v5333
        %v5442 = vpop.f32.mrb[0].mxu0
        %v5443 = vadd.f32 0.0, %v5442
        %v5444 = vpop.f32.mrb[0].mxu0
        %v5445 = vpop.f32.mrb[0].mxu0
        %v5446 = vadd.f32 0.0, %v5445
        %v5447 = vpop.f32.mrb[0].mxu0
        %5448 = vmatprep.mubr.bf16.mxu0 0
        %5449 = vmatmul.mubr.bf16.gmra.mrb[0].mxu0 %v5336
        %v5450 = vpop.f32.mrb[0].mxu0
        %v5451 = vadd.f32 0.0, %v5450
        %v5452 = vpop.f32.mrb[0].mxu0
        %v5453 = vpop.f32.mrb[0].mxu0
        %v5454 = vadd.f32 0.0, %v5453
        %v5455 = vpop.f32.mrb[0].mxu0
        %5456 = vmatprep.mubr.bf16.mxu0 0
        %5457 = vmatmul.mubr.bf16.gmra.mrb[0].mxu0 %v5339
        %v5458 = vpop.f32.mrb[0].mxu0
        %v5459 = vadd.f32 0.0, %v5458
        %v5460 = vpop.f32.mrb[0].mxu0
        %v5461 = vpop.f32.mrb[0].mxu0
        %v5462 = vadd.f32 0.0, %v5461
        %v5463 = vpop.f32.mrb[0].mxu0
        %5464 = vmatprep.mubr.bf16.mxu0 0
        %5465 = vmatmul.mubr.bf16.gmra.mrb[0].mxu0 %v5342
        %v5466 = vpop.f32.mrb[0].mxu0
        %v5467 = vadd.f32 0.0, %v5466
        %v5468 = vpop.f32.mrb[0].mxu0
        %v5469 = vpop.f32.mrb[0].mxu0
        %v5470 = vadd.f32 0.0, %v5469
        %v5471 = vpop.f32.mrb[0].mxu0
        %5472 = vmatprep.mubr.bf16.mxu0 0
        %5473 = vmatmul.mubr.bf16.gmra.mrb[0].mxu0 %v5345
        %v5474 = vpop.f32.mrb[0].mxu0
        %v5475 = vadd.f32 0.0, %v5474
        %v5476 = vpop.f32.mrb[0].mxu0
        %v5477 = vpop.f32.mrb[0].mxu0
        %v5478 = vadd.f32 0.0, %v5477
        %v5479 = vpop.f32.mrb[0].mxu0
        %5480 = vmatprep.mubr.bf16.mxu0 0
        %5481 = vmatmul.mubr.bf16.gmra.mrb[0].mxu0 %v5348
        %v5482 = vpop.f32.mrb[0].mxu0
        %v5483 = vadd.f32 0.0, %v5482
        %v5484 = vpop.f32.mrb[0].mxu0
        %v5485 = vpop.f32.mrb[0].mxu0
        %v5486 = vadd.f32 0.0, %v5485
        %v5487 = vpop.f32.mrb[0].mxu0
        %5488 = vmatprep.mubr.bf16.mxu0 0
        %5489 = vmatmul.mubr.bf16.gmra.mrb[0].mxu0 %v5351
        %v5490 = vpop.f32.mrb[0].mxu0
        %v5491 = vadd.f32 0.0, %v5490
        %v5492 = vpop.f32.mrb[0].mxu0
        %v5493 = vpop.f32.mrb[0].mxu0
        %v5494 = vadd.f32 0.0, %v5493
        %v5495 = vpop.f32.mrb[0].mxu0
        %5496 = vmatprep.mubr.bf16.mxu0 0
        %5497 = vmatmul.mubr.bf16.gmra.mrb[0].mxu0 %v5354
        %v5498 = vpop.f32.mrb[0].mxu0
        %v5499 = vadd.f32 0.0, %v5498
        %v5500 = vpop.f32.mrb[0].mxu0
        %v5501 = vpop.f32.mrb[0].mxu0
        %v5502 = vadd.f32 0.0, %v5501
        %v5503 = vpop.f32.mrb[0].mxu0
        %5504 = vmatprep.mubr.bf16.mxu0 0
        %5505 = vmatmul.mubr.bf16.gmra.mrb[0].mxu0 %v5357
        %v5506 = vpop.f32.mrb[0].mxu0
        %v5507 = vadd.f32 0.0, %v5506
        %v5508 = vpop.f32.mrb[0].mxu0
        %v5509 = vpop.f32.mrb[0].mxu0
        %v5510 = vadd.f32 0.0, %v5509
        %v5511 = vpop.f32.mrb[0].mxu0
        %5512 = vmatprep.mubr.bf16.mxu0 0
        %5513 = vmatmul.mubr.bf16.gmra.mrb[0].mxu0 %v5360
        %v5514 = vpop.f32.mrb[0].mxu0
        %v5515 = vadd.f32 0.0, %v5514
        %v5516 = vpop.f32.mrb[0].mxu0
        %v5517 = vpop.f32.mrb[0].mxu0
        %v5518 = vadd.f32 0.0, %v5517
        %v5519 = vpop.f32.mrb[0].mxu0
        %5520 = vmatprep.mubr.bf16.mxu0 0
        %5521 = vmatmul.mubr.bf16.gmra.mrb[0].mxu0 %v5363
        %v5522 = vpop.f32.mrb[0].mxu0
        %v5523 = vadd.f32 0.0, %v5522
        %v5524 = vpop.f32.mrb[0].mxu0
        %v5525 = vpop.f32.mrb[0].mxu0
        %v5526 = vadd.f32 0.0, %v5525
        %v5527 = vpop.f32.mrb[0].mxu0
        %5528 = vdwg.mxu0
        %v5529 = vadd.f32 %v5113, %v5403
        %v5530 = vadd.f32 %v5114, %v5406
        %v5531 = vadd.f32 %v5115, %v5411
        %v5532 = vadd.f32 %v5116, %v5414
        %v5533 = vadd.f32 %v5117, %v5419
        %v5534 = vadd.f32 %v5118, %v5422
        %v5535 = vadd.f32 %v5119, %v5427
        %v5536 = vadd.f32 %v5120, %v5430
        %v5537 = vadd.f32 %v5121, %v5435
        %v5538 = vadd.f32 %v5122, %v5438
        %v5539 = vadd.f32 %v5123, %v5443
        %v5540 = vadd.f32 %v5124, %v5446
        %v5541 = vadd.f32 %v5125, %v5451
        %v5542 = vadd.f32 %v5126, %v5454
        %v5543 = vadd.f32 %v5127, %v5459
        %v5544 = vadd.f32 %v5128, %v5462
        %v5545 = vadd.f32 %v5129, %v5467
        %v5546 = vadd.f32 %v5130, %v5470
        %v5547 = vadd.f32 %v5131, %v5475
        %v5548 = vadd.f32 %v5132, %v5478
        %v5549 = vadd.f32 %v5133, %v5483
        %v5550 = vadd.f32 %v5134, %v5486
        %v5551 = vadd.f32 %v5135, %v5491
        %v5552 = vadd.f32 %v5136, %v5494
        %v5553 = vadd.f32 %v5137, %v5499
        %v5554 = vadd.f32 %v5138, %v5502
        %v5555 = vadd.f32 %v5139, %v5507
        %v5556 = vadd.f32 %v5140, %v5510
        %v5557 = vadd.f32 %v5141, %v5515
        %v5558 = vadd.f32 %v5142, %v5518
        %v5559 = vadd.f32 %v5143, %v5523
        %v5560 = vadd.f32 %v5144, %v5526
        %5561 = vst [vmem:[#allocation3] sm:$0xff] %v5529
        %5562 = vst [vmem:[#allocation3 + $0x8] sm:$0xff] %v5530
        %5563 = vst [vmem:[#allocation3 + $0x10] sm:$0xff] %v5531
        %5564 = vst [vmem:[#allocation3 + $0x18] sm:$0xff] %v5532
        %5565 = vst [vmem:[#allocation3 + $0x20] sm:$0xff] %v5533
        %5566 = vst [vmem:[#allocation3 + $0x28] sm:$0xff] %v5534
        %5567 = vst [vmem:[#allocation3 + $0x30] sm:$0xff] %v5535
        %5568 = vst [vmem:[#allocation3 + $0x38] sm:$0xff] %v5536
        %5569 = vst [vmem:[#allocation3 + $0x40] sm:$0xff] %v5537
        %5570 = vst [vmem:[#allocation3 + $0x48] sm:$0xff] %v5538
        %5571 = vst [vmem:[#allocation3 + $0x50] sm:$0xff] %v5539
        %5572 = vst [vmem:[#allocation3 + $0x58] sm:$0xff] %v5540
        %5573 = vst [vmem:[#allocation3 + $0x60] sm:$0xff] %v5541
        %5574 = vst [vmem:[#allocation3 + $0x68] sm:$0xff] %v5542
        %5575 = vst [vmem:[#allocation3 + $0x70] sm:$0xff] %v5543
        %5576 = vst [vmem:[#allocation3 + $0x78] sm:$0xff] %v5544
        %5577 = vst [vmem:[#allocation3 + $0x80] sm:$0xff] %v5545
        %5578 = vst [vmem:[#allocation3 + $0x88] sm:$0xff] %v5546
        %5579 = vst [vmem:[#allocation3 + $0x90] sm:$0xff] %v5547
        %5580 = vst [vmem:[#allocation3 + $0x98] sm:$0xff] %v5548
        %5581 = vst [vmem:[#allocation3 + $0xa0] sm:$0xff] %v5549
        %5582 = vst [vmem:[#allocation3 + $0xa8] sm:$0xff] %v5550
        %5583 = vst [vmem:[#allocation3 + $0xb0] sm:$0xff] %v5551
        %5584 = vst [vmem:[#allocation3 + $0xb8] sm:$0xff] %v5552
        %5585 = vst [vmem:[#allocation3 + $0xc0] sm:$0xff] %v5553
        %5586 = vst [vmem:[#allocation3 + $0xc8] sm:$0xff] %v5554
        %5587 = vst [vmem:[#allocation3 + $0xd0] sm:$0xff] %v5555
        %5588 = vst [vmem:[#allocation3 + $0xd8] sm:$0xff] %v5556
        %5589 = vst [vmem:[#allocation3 + $0xe0] sm:$0xff] %v5557
        %5590 = vst [vmem:[#allocation3 + $0xe8] sm:$0xff] %v5558
        %5591 = vst [vmem:[#allocation3 + $0xf0] sm:$0xff] %v5559
        %5592 = vst [vmem:[#allocation3 + $0xf8] sm:$0xff] %v5560
        %v5593 = vld [vmem:[#allocation3] sm:$0xff]
        %v5594 = vld [vmem:[#allocation3 + $0x8] sm:$0xff]
        %v5595 = vld [vmem:[#allocation3 + $0x10] sm:$0xff]
        %v5596 = vld [vmem:[#allocation3 + $0x18] sm:$0xff]
        %v5597 = vld [vmem:[#allocation3 + $0x20] sm:$0xff]
        %v5598 = vld [vmem:[#allocation3 + $0x28] sm:$0xff]
        %v5599 = vld [vmem:[#allocation3 + $0x30] sm:$0xff]
        %v5600 = vld [vmem:[#allocation3 + $0x38] sm:$0xff]
        %v5601 = vld [vmem:[#allocation3 + $0x40] sm:$0xff]
        %v5602 = vld [vmem:[#allocation3 + $0x48] sm:$0xff]
        %v5603 = vld [vmem:[#allocation3 + $0x50] sm:$0xff]
        %v5604 = vld [vmem:[#allocation3 + $0x58] sm:$0xff]
        %v5605 = vld [vmem:[#allocation3 + $0x60] sm:$0xff]
        %v5606 = vld [vmem:[#allocation3 + $0x68] sm:$0xff]
        %v5607 = vld [vmem:[#allocation3 + $0x70] sm:$0xff]
        %v5608 = vld [vmem:[#allocation3 + $0x78] sm:$0xff]
        %v5609 = vld [vmem:[#allocation3 + $0x80] sm:$0xff]
        %v5610 = vld [vmem:[#allocation3 + $0x88] sm:$0xff]
        %v5611 = vld [vmem:[#allocation3 + $0x90] sm:$0xff]
        %v5612 = vld [vmem:[#allocation3 + $0x98] sm:$0xff]
        %v5613 = vld [vmem:[#allocation3 + $0xa0] sm:$0xff]
        %v5614 = vld [vmem:[#allocation3 + $0xa8] sm:$0xff]
        %v5615 = vld [vmem:[#allocation3 + $0xb0] sm:$0xff]
        %v5616 = vld [vmem:[#allocation3 + $0xb8] sm:$0xff]
        %v5617 = vld [vmem:[#allocation3 + $0xc0] sm:$0xff]
        %v5618 = vld [vmem:[#allocation3 + $0xc8] sm:$0xff]
        %v5619 = vld [vmem:[#allocation3 + $0xd0] sm:$0xff]
        %v5620 = vld [vmem:[#allocation3 + $0xd8] sm:$0xff]
        %v5621 = vld [vmem:[#allocation3 + $0xe0] sm:$0xff]
        %v5622 = vld [vmem:[#allocation3 + $0xe8] sm:$0xff]
        %v5623 = vld [vmem:[#allocation3 + $0xf0] sm:$0xff]
        %v5624 = vld [vmem:[#allocation3 + $0xf8] sm:$0xff]
        %v5625 = vld [vmem:[%s3] sm:$0x1]
        %v5627 = vlaneseq
        %v5628 = vshrl.u32 %v5627, 7
        %v5629 = vsub.s32 0, %v5628
        %v5630 = vrot.slane %v5625, %v5629
        %v5632 = vadd.f32 %v5593, %v5630
        %v5633 = vadd.f32 %v5594, %v5630
        %v5634 = vadd.f32 %v5595, %v5630
        %v5635 = vadd.f32 %v5596, %v5630
        %v5636 = vadd.f32 %v5597, %v5630
        %v5637 = vadd.f32 %v5598, %v5630
        %v5638 = vadd.f32 %v5599, %v5630
        %v5639 = vadd.f32 %v5600, %v5630
        %v5640 = vadd.f32 %v5601, %v5630
        %v5641 = vadd.f32 %v5602, %v5630
        %v5642 = vadd.f32 %v5603, %v5630
        %v5643 = vadd.f32 %v5604, %v5630
        %v5644 = vadd.f32 %v5605, %v5630
        %v5645 = vadd.f32 %v5606, %v5630
        %v5646 = vadd.f32 %v5607, %v5630
        %v5647 = vadd.f32 %v5608, %v5630
        %v5648 = vadd.f32 %v5609, %v5630
        %v5649 = vadd.f32 %v5610, %v5630
        %v5650 = vadd.f32 %v5611, %v5630
        %v5651 = vadd.f32 %v5612, %v5630
        %v5652 = vadd.f32 %v5613, %v5630
        %v5653 = vadd.f32 %v5614, %v5630
        %v5654 = vadd.f32 %v5615, %v5630
        %v5655 = vadd.f32 %v5616, %v5630
        %v5656 = vadd.f32 %v5617, %v5630
        %v5657 = vadd.f32 %v5618, %v5630
        %v5658 = vadd.f32 %v5619, %v5630
        %v5659 = vadd.f32 %v5620, %v5630
        %v5660 = vadd.f32 %v5621, %v5630
        %v5661 = vadd.f32 %v5622, %v5630
        %v5662 = vadd.f32 %v5623, %v5630
        %v5663 = vadd.f32 %v5624, %v5630
        %v5664 = vld [vmem:[%s309] sm:$0x1]
        %v5666 = vlaneseq
        %v5667 = vshrl.u32 %v5666, 7
        %v5668 = vsub.s32 0, %v5667
        %v5669 = vrot.slane %v5664, %v5668
        %v5671 = vmul.f32 %v5632, %v5669
        %v5672 = vmul.f32 %v5633, %v5669
        %v5673 = vmul.f32 %v5634, %v5669
        %v5674 = vmul.f32 %v5635, %v5669
        %v5675 = vmul.f32 %v5636, %v5669
        %v5676 = vmul.f32 %v5637, %v5669
        %v5677 = vmul.f32 %v5638, %v5669
        %v5678 = vmul.f32 %v5639, %v5669
        %v5679 = vmul.f32 %v5640, %v5669
        %v5680 = vmul.f32 %v5641, %v5669
        %v5681 = vmul.f32 %v5642, %v5669
        %v5682 = vmul.f32 %v5643, %v5669
        %v5683 = vmul.f32 %v5644, %v5669
        %v5684 = vmul.f32 %v5645, %v5669
        %v5685 = vmul.f32 %v5646, %v5669
        %v5686 = vmul.f32 %v5647, %v5669
        %v5687 = vmul.f32 %v5648, %v5669
        %v5688 = vmul.f32 %v5649, %v5669
        %v5689 = vmul.f32 %v5650, %v5669
        %v5690 = vmul.f32 %v5651, %v5669
        %v5691 = vmul.f32 %v5652, %v5669
        %v5692 = vmul.f32 %v5653, %v5669
        %v5693 = vmul.f32 %v5654, %v5669
        %v5694 = vmul.f32 %v5655, %v5669
        %v5695 = vmul.f32 %v5656, %v5669
        %v5696 = vmul.f32 %v5657, %v5669
        %v5697 = vmul.f32 %v5658, %v5669
        %v5698 = vmul.f32 %v5659, %v5669
        %v5699 = vmul.f32 %v5660, %v5669
        %v5700 = vmul.f32 %v5661, %v5669
        %v5701 = vmul.f32 %v5662, %v5669
        %v5702 = vmul.f32 %v5663, %v5669
        %5703 = vst [vmem:[%s284] sm:$0xff] %v5671
        %5704 = vst [vmem:[%s284 + $0x8] sm:$0xff] %v5672
        %5705 = vst [vmem:[%s284 + $0x10] sm:$0xff] %v5673
        %5706 = vst [vmem:[%s284 + $0x18] sm:$0xff] %v5674
        %5707 = vst [vmem:[%s284 + $0x20] sm:$0xff] %v5675
        %5708 = vst [vmem:[%s284 + $0x28] sm:$0xff] %v5676
        %5709 = vst [vmem:[%s284 + $0x30] sm:$0xff] %v5677
        %5710 = vst [vmem:[%s284 + $0x38] sm:$0xff] %v5678
        %5711 = vst [vmem:[%s284 + $0x40] sm:$0xff] %v5679
        %5712 = vst [vmem:[%s284 + $0x48] sm:$0xff] %v5680
        %5713 = vst [vmem:[%s284 + $0x50] sm:$0xff] %v5681
        %5714 = vst [vmem:[%s284 + $0x58] sm:$0xff] %v5682
        %5715 = vst [vmem:[%s284 + $0x60] sm:$0xff] %v5683
        %5716 = vst [vmem:[%s284 + $0x68] sm:$0xff] %v5684
        %5717 = vst [vmem:[%s284 + $0x70] sm:$0xff] %v5685
        %5718 = vst [vmem:[%s284 + $0x78] sm:$0xff] %v5686
        %5719 = vst [vmem:[%s284 + $0x80] sm:$0xff] %v5687
        %5720 = vst [vmem:[%s284 + $0x88] sm:$0xff] %v5688
        %5721 = vst [vmem:[%s284 + $0x90] sm:$0xff] %v5689
        %5722 = vst [vmem:[%s284 + $0x98] sm:$0xff] %v5690
        %5723 = vst [vmem:[%s284 + $0xa0] sm:$0xff] %v5691
        %5724 = vst [vmem:[%s284 + $0xa8] sm:$0xff] %v5692
        %5725 = vst [vmem:[%s284 + $0xb0] sm:$0xff] %v5693
        %5726 = vst [vmem:[%s284 + $0xb8] sm:$0xff] %v5694
        %5727 = vst [vmem:[%s284 + $0xc0] sm:$0xff] %v5695
        %5728 = vst [vmem:[%s284 + $0xc8] sm:$0xff] %v5696
        %5729 = vst [vmem:[%s284 + $0xd0] sm:$0xff] %v5697
        %5730 = vst [vmem:[%s284 + $0xd8] sm:$0xff] %v5698
        %5731 = vst [vmem:[%s284 + $0xe0] sm:$0xff] %v5699
        %5732 = vst [vmem:[%s284 + $0xe8] sm:$0xff] %v5700
        %5733 = vst [vmem:[%s284 + $0xf0] sm:$0xff] %v5701
        %5734 = vst [vmem:[%s284 + $0xf8] sm:$0xff] %v5702
        %s5735 = sand.u32 %s167, 1
        %s5736 = scalar_lea.sflag [#allocation5], %s5735
        %s5737 = sand.u32 %s167, 1
        %s5738 = smul.addr %s5737, 256
        %s5739 = scalar_lea.vmem [#allocation4], %s5738
        // Predicated region
        $region41: #{tpu_custom_call.1} parent=39 // pred_check
          %p5740 = pneg %p177
        $region42: #{tpu_custom_call.1} parent=39 // pred_check_branch
          %5742 = sbr.rel (%p5740) target = $region44
        $region43: #{tpu_custom_call.1} parent=39 // pred_region
          %s5743 = smul.u32 32, %s24
          %s5745 = ssub.s32 4096, 4096
          %5746 = vsyncadd %s5736, %s5745
          %s5747 = smul.addr %s23, 64
          %s5748 = sadd.s32 %s5743, %s5747
          %s5749 = smul.addr %s5748, 128
          %s5750 = scalar_lea.hbm %s5, %s5749
          %s5751 = sshll.u32 %s5739, 4
          %s5752 = int_to_ptr.vmem [resolvable:$true] %s5751
          %5757 = dma.vmem_to_hbm [thread:$0]  %s5752, 4096, %s5750, %s5736, 128, 128, 8
        $region44: #{tpu_custom_call.1} parent=39 // pred_fallthru
          _
      $region40: #{tpu_custom_call.1} parent=5 // pred_fallthru
        _
      %p5758 = scmp.le.s32.totalorder 2, %s14
      // Predicated region
      $region45: #{tpu_custom_call.1} parent=5 // pred_check
        %p5759 = pneg %p5758
      $region46: #{tpu_custom_call.1} parent=5 // pred_check_branch
        %5761 = sbr.rel (%p5759) target = $region48
      $region47: #{tpu_custom_call.1} parent=5 // pred_region
        %s5762 = ssub.s32 %s14, 2
        // Predicated region
        $region49: #{tpu_custom_call.1} parent=47 // pred_check
          %p5763 = pneg %p183
        $region50: #{tpu_custom_call.1} parent=47 // pred_check_branch
          %5765 = sbr.rel (%p5763) target = $region52
        $region51: #{tpu_custom_call.1} parent=47 // pred_region
          %s5766 = sand.u32 %s168, 1
          %s5767 = scalar_lea.sflag [#allocation5], %s5766
          %s5768 = sand.u32 %s168, 1
          %s5769 = smul.addr %s5768, 256
          %s5770 = scalar_lea.vmem [#allocation4], %s5769
          %5771 = dma.done %s5767, 4096
        $region52: #{tpu_custom_call.1} parent=47 // pred_fallthru
          _
      $region48: #{tpu_custom_call.1} parent=5 // pred_fallthru
        _
    $region6: #{tpu_custom_call.1} parent=1 // loop_footer
      %s18 = sadd.s32 1, %s14
    $region7: #{tpu_custom_call.1} parent=1 // loop_footer_branch
      %13 = sbr.rel target = $region3
    $region8: #{tpu_custom_call.1} parent=1 // loop_exit
      _
    %5772 = vsyncpa [#allocation5], 1
    %s5773 = scalar_lea.sflag [#allocation5], 1
    %5774 = vsyncpa %s5773, 1

</llo_original>
